<compile_context>
chip_gen: v6e
topology: v6e:2x2x1
jax: 0.10.0
libtpu: 0.0.40
codegen_flags: <defaults>
</compile_context>

<pallas_src>
import functools
import math

import jax
import jax.numpy as jnp
from jax.experimental import pallas as pl
from jax.experimental.pallas import tpu as pltpu


# ----------------------------------------------------------------------------
# In-kernel helpers (operate on VMEM values)
# ----------------------------------------------------------------------------
def _ln(x, g, b, eps):
    mu = jnp.mean(x, axis=-1, keepdims=True)
    xc = x - mu
    var = jnp.mean(xc * xc, axis=-1, keepdims=True)
    return xc * jax.lax.rsqrt(var + eps) * g + b


def _mm(x, w_ref, b):
    # bf16 MXU inputs, f32 accumulation.
    y = jnp.dot(x.astype(jnp.bfloat16), w_ref[...],
                preferred_element_type=jnp.float32)
    return y + b


def _mha(q, k, v, num_heads):
    # q is pre-scaled (1/sqrt(dh) folded into the Q projection weights at init).
    # Heads stay packed along the lane dim; per-head static slices, no HBM
    # round-trips / transposes between kernels.
    dh = q.shape[-1] // num_heads
    outs = []
    for h in range(num_heads):
        sl = slice(h * dh, (h + 1) * dh)
        qh = q[:, sl].astype(jnp.bfloat16)
        kh = k[:, sl].astype(jnp.bfloat16)
        vh = v[:, sl].astype(jnp.bfloat16)
        # q @ k^T without an explicit transpose.
        s = jax.lax.dot_general(qh, kh, (((1,), (1,)), ((), ())),
                                preferred_element_type=jnp.float32)
        s = s - jnp.max(s, axis=-1, keepdims=True)
        p = jnp.exp(s)
        p = p * pl.reciprocal(jnp.sum(p, axis=-1, keepdims=True), approx=True)
        outs.append(jnp.dot(p.astype(jnp.bfloat16), vh,
                            preferred_element_type=jnp.float32))
    return jnp.concatenate(outs, axis=-1)


def _gelu(x):
    # TODO(synk): PyTorch BERT/EVA-ViT use exact erf GELU; tanh approximation
    # used here for a Mosaic-safe lowering.
    return jax.nn.gelu(x, approximate=True)


# ----------------------------------------------------------------------------
# Kernel 1: preprocess + patch embed + ViT block + ln_vision  (one batch elem)
# ----------------------------------------------------------------------------
def _vit_feat_kernel(patches_ref, prep_a_ref, prep_c_ref,
                     pw_ref, pb_ref, pos_ref,
                     ln1g_ref, ln1b_ref,
                     qkvw_ref, qkvb_ref, wo_ref, bo_ref,
                     ln2g_ref, ln2b_ref,
                     w1_ref, b1_ref, w2_ref, b2_ref,
                     lnvg_ref, lnvb_ref,
                     feat_ref, *, num_heads):
    # Fused preprocessing: ((x+1)/2 - mean)/std folded into a per-column affine.
    x = patches_ref[...].astype(jnp.float32)                      # (S, C*P*P)
    x = x * prep_a_ref[...] + prep_c_ref[...]

    # Patch embedding + positional embedding.
    x = _mm(x, pw_ref, pb_ref[...])                               # (S, D)
    x = x + pos_ref[...]
    D = x.shape[-1]

    # Pre-LN self-attention (fused QKV projection).
    h = _ln(x, ln1g_ref[...], ln1b_ref[...], 1e-6)
    qkv = _mm(h, qkvw_ref, qkvb_ref[...])                         # (S, 3D)
    o = _mha(qkv[:, :D], qkv[:, D:2 * D], qkv[:, 2 * D:], num_heads)
    x = x + _mm(o, wo_ref, bo_ref[...])

    # Pre-LN MLP (fused w1 + gelu + w2).
    h = _ln(x, ln2g_ref[...], ln2b_ref[...], 1e-6)
    h = _gelu(_mm(h, w1_ref, b1_ref[...]))
    h = _mm(h, w2_ref, b2_ref[...])
    x = x + h

    # ln_vision fused here.
    feat_ref[...] = _ln(x, lnvg_ref[...], lnvb_ref[...], 1e-6).astype(feat_ref.dtype)


def vit_features(patches, p):
    B2, S, CPP = patches.shape
    D = p["patch_w"].shape[1]
    args = [patches, p["prep_a"], p["prep_c"], p["patch_w"], p["patch_b"],
            p["pos_embed"], p["ln1_g"], p["ln1_b"], p["qkv_w"], p["qkv_b"],
            p["wo"], p["bo"], p["ln2_g"], p["ln2_b"], p["mlp_w1"], p["mlp_b1"],
            p["mlp_w2"], p["mlp_b2"], p["lnv_g"], p["lnv_b"]]
    in_specs = ([pl.BlockSpec((None, S, CPP), lambda b: (b, 0, 0))] +
                [pl.BlockSpec(a.shape, lambda b: (0, 0)) for a in args[1:]])
    return pl.pallas_call(
        functools.partial(_vit_feat_kernel, num_heads=p["num_heads"]),
        grid=(B2,),
        out_shape=jax.ShapeDtypeStruct((B2, S, D), jnp.float32),
        in_specs=in_specs,
        out_specs=pl.BlockSpec((None, S, D), lambda b: (b, 0, 0)),
        compiler_params=pltpu.CompilerParams(dimension_semantics=("parallel",)),
    )(*args)


# ----------------------------------------------------------------------------
# Kernel 2: Q-Former layer + vision_proj + L2 normalize  (one batch elem)
# ----------------------------------------------------------------------------
def _qformer_embed_kernel(qt_ref, feat_ref,
                          sqkvw_ref, sqkvb_ref, swo_ref, sbo_ref,
                          lnsag_ref, lnsab_ref,
                          cqw_ref, cqb_ref, ckvw_ref, ckvb_ref, cwo_ref, cbo_ref,
                          lncag_ref, lncab_ref,
                          f1w_ref, f1b_ref, f2w_ref, f2b_ref,
                          lnfg_ref, lnfb_ref,
                          pw_ref, pb_ref,
                          emb_ref, *, num_heads):
    D = qt_ref.shape[-1]
    x = qt_ref[...].astype(jnp.float32)                           # (Q, D)
    enc = feat_ref[...].astype(jnp.float32)                       # (S, D)

    # Self-attention (post-LN, fused QKV).
    qkv = _mm(x, sqkvw_ref, sqkvb_ref[...])
    a = _mha(qkv[:, :D], qkv[:, D:2 * D], qkv[:, 2 * D:], num_heads)
    a = _mm(a, swo_ref, sbo_ref[...])
    x = _ln(x + a, lnsag_ref[...], lnsab_ref[...], 1e-12)

    # Cross-attention to the encoder features (all-ones mask in the original
    # module -> no masking needed). K/V projections fused into one matmul.
    q = _mm(x, cqw_ref, cqb_ref[...])
    kv = _mm(enc, ckvw_ref, ckvb_ref[...])                        # (S, 2D)
    a = _mha(q, kv[:, :D], kv[:, D:], num_heads)
    a = _mm(a, cwo_ref, cbo_ref[...])
    x = _ln(x + a, lncag_ref[...], lncab_ref[...], 1e-12)

    # FFN (fused w1 + gelu + w2).
    h = _gelu(_mm(x, f1w_ref, f1b_ref[...]))
    h = _mm(h, f2w_ref, f2b_ref[...])
    x = _ln(x + h, lnfg_ref[...], lnfb_ref[...], 1e-12)

    # vision_proj + F.normalize(dim=-1).
    e = _mm(x, pw_ref, pb_ref[...])                               # (Q, E)
    n = jnp.sqrt(jnp.sum(e * e, axis=-1, keepdims=True))
    e = e / jnp.maximum(n, 1e-12)
    emb_ref[...] = e.astype(emb_ref.dtype)


def qformer_embed(feat, p):
    B2, S, D = feat.shape
    Q = p["query_tokens"].shape[0]
    E = p["proj_w"].shape[1]
    args = [p["query_tokens"], feat,
            p["sa_qkv_w"], p["sa_qkv_b"], p["sa_wo"], p["sa_bo"],
            p["ln_sa_g"], p["ln_sa_b"],
            p["ca_q_w"], p["ca_q_b"], p["ca_kv_w"], p["ca_kv_b"],
            p["ca_wo"], p["ca_bo"],
            p["ln_ca_g"], p["ln_ca_b"],
            p["ffn_w1"], p["ffn_b1"], p["ffn_w2"], p["ffn_b2"],
            p["ln_ffn_g"], p["ln_ffn_b"],
            p["proj_w"], p["proj_b"]]
    in_specs = ([pl.BlockSpec(p["query_tokens"].shape, lambda b: (0, 0)),
                 pl.BlockSpec((None, S, D), lambda b: (b, 0, 0))] +
                [pl.BlockSpec(a.shape, lambda b: (0, 0)) for a in args[2:]])
    return pl.pallas_call(
        functools.partial(_qformer_embed_kernel, num_heads=p["num_heads"]),
        grid=(B2,),
        out_shape=jax.ShapeDtypeStruct((B2, Q, E), jnp.float32),
        in_specs=in_specs,
        out_specs=pl.BlockSpec((None, Q, E), lambda b: (b, 0, 0)),
        compiler_params=pltpu.CompilerParams(dimension_semantics=("parallel",)),
    )(*args)


# ----------------------------------------------------------------------------
# Kernel 3: MSE reduction
# ----------------------------------------------------------------------------
def _mse_kernel(a_ref, b_ref, o_ref):
    d = a_ref[...].astype(jnp.float32) - b_ref[...].astype(jnp.float32)
    ss = jnp.sum(d * d, axis=1, keepdims=True)    # (M, 1)
    ss = jnp.sum(ss, axis=0, keepdims=True)       # (1, 1)
    o_ref[...] = ss / float(d.shape[0] * d.shape[1])


def pallas_mse(a, b):
    out = pl.pallas_call(
        _mse_kernel,
        out_shape=jax.ShapeDtypeStruct((1, 1), jnp.float32),
        in_specs=[pl.BlockSpec(memory_space=pltpu.MemorySpace.VMEM)] * 2,
        out_specs=pl.BlockSpec(memory_space=pltpu.MemorySpace.VMEM),
    )(a, b)
    return out[0, 0]


# ----------------------------------------------------------------------------
# Forward pass (pred and target batched through shared kernels)
# ----------------------------------------------------------------------------
def blip2_feature_loss(pred, target, params):
    B = pred.shape[0]
    imgs = jnp.concatenate([pred, target], axis=0)        # (2B, C, H, W)
    B2, C, H, W = imgs.shape
    P = params["patch"]
    gh, gw = H // P, W // P
    S = gh * gw
    # Patchify in the XLA glue (layout plumbing only; all math is in Pallas).
    patches = (imgs.reshape(B2, C, gh, P, gw, P)
                   .transpose(0, 2, 4, 1, 3, 5)
                   .reshape(B2, S, C * P * P))

    feat = vit_features(patches, params["vit"])           # ln_vision(visual_encoder(x))
    emb = qformer_embed(feat, params["qf"])               # normalize(vision_proj(Qformer(...)))

    Qn, E = emb.shape[1], emb.shape[2]
    pred_emb = emb[:B].reshape(B * Qn, E)
    targ_emb = emb[B:].reshape(B * Qn, E)
    # .squeeze(0) in the original is a no-op for the mean-reduced MSE.
    return pallas_mse(pred_emb, targ_emb)


# ----------------------------------------------------------------------------
# Deterministic parameter init (synthetic stand-in for pretrained BLIP-2)
# ----------------------------------------------------------------------------
def init_params(key, *, C=3, P=8, H=16, W=16, D=128, Q=8, E=128, num_heads=2):
    S = (H // P) * (W // P)
    CPP = C * P * P
    dh = D // num_heads
    scale = 1.0 / math.sqrt(dh)

    keys = iter(jax.random.split(key, 24))

    def n(shape):
        return jax.random.normal(next(keys), shape, jnp.float32) * 0.02

    bf = lambda a: a.astype(jnp.bfloat16)          # bf16 MXU weights
    zeros = lambda m: jnp.zeros((1, m), jnp.float32)
    ones = lambda m: jnp.ones((1, m), jnp.float32)

    mean = jnp.array([0.48145466, 0.4578275, 0.40821073], jnp.float32)
    std = jnp.array([0.26862954, 0.26130258, 0.27577711], jnp.float32)
    # ((x+1)/2 - mean)/std  ==  x * (0.5/std) + (0.5-mean)/std, per channel,
    # broadcast over the P*P pixels of each channel inside a patch column.
    prep_a = jnp.repeat(0.5 / std, P * P).reshape(1, CPP)
    prep_c = jnp.repeat((0.5 - mean) / std, P * P).reshape(1, CPP)

    def fused_qkv():
        wq, wk, wv = n((D, D)), n((D, D)), n((D, D))
        # Fold the 1/sqrt(dh) attention scale into the Q projection.
        return bf(jnp.concatenate([wq * scale, wk, wv], axis=1)), zeros(3 * D)

    vit_qkv_w, vit_qkv_b = fused_qkv()
    sa_qkv_w, sa_qkv_b = fused_qkv()
    ca_q_w = bf(n((D, D)) * scale)
    ca_kv_w = bf(jnp.concatenate([n((D, D)), n((D, D))], axis=1))

    return {
        "patch": P,
        "vit": {
            "num_heads": num_heads,
            "prep_a": prep_a, "prep_c": prep_c,
            "patch_w": bf(n((CPP, D))), "patch_b": zeros(D),
            "pos_embed": n((S, D)),
            "ln1_g": ones(D), "ln1_b": zeros(D),
            "qkv_w": vit_qkv_w, "qkv_b": vit_qkv_b,
            "wo": bf(n((D, D))), "bo": zeros(D),
            "ln2_g": ones(D), "ln2_b": zeros(D),
            "mlp_w1": bf(n((D, 4 * D))), "mlp_b1": zeros(4 * D),
            "mlp_w2": bf(n((4 * D, D))), "mlp_b2": zeros(D),
            "lnv_g": ones(D), "lnv_b": zeros(D),
        },
        "qf": {
            "num_heads": num_heads,
            "query_tokens": n((Q, D)),
            "sa_qkv_w": sa_qkv_w, "sa_qkv_b": sa_qkv_b,
            "sa_wo": bf(n((D, D))), "sa_bo": zeros(D),
            "ln_sa_g": ones(D), "ln_sa_b": zeros(D),
            "ca_q_w": ca_q_w, "ca_q_b": zeros(D),
            "ca_kv_w": ca_kv_w, "ca_kv_b": zeros(2 * D),
            "ca_wo": bf(n((D, D))), "ca_bo": zeros(D),
            "ln_ca_g": ones(D), "ln_ca_b": zeros(D),
            "ffn_w1": bf(n((D, 4 * D))), "ffn_b1": zeros(4 * D),
            "ffn_w2": bf(n((4 * D, D))), "ffn_b2": zeros(D),
            "ln_ffn_g": ones(D), "ln_ffn_b": zeros(D),
            "proj_w": bf(n((D, E))), "proj_b": zeros(E),
        },
    }


if __name__ == "__main__":
    key = jax.random.PRNGKey(0)
    k_pred, k_tgt, k_par = jax.random.split(key, 3)
    B, C, H, W = 2, 3, 16, 16
    pred = jax.random.uniform(k_pred, (B, C, H, W), jnp.float32, -1.0, 1.0)
    target = jax.random.uniform(k_tgt, (B, C, H, W), jnp.float32, -1.0, 1.0)
    params = init_params(k_par)

    loss_fn = jax.jit(lambda a, b: blip2_feature_loss(a, b, params))
    loss = loss_fn(pred, target)
    jax.block_until_ready(loss)
    assert loss.shape == () and jnp.isfinite(loss)
    print("KERNEL_OK")
</pallas_src>

<mosaic_0001>
module attributes {stable_mosaic.version = 11 : i64} {
  func.func @_vit_feat_kernel(%arg0: i32, %arg1: memref<1x4x192xf32, #tpu.memory_space<vmem>>, %arg2: memref<1x192xf32, #tpu.memory_space<vmem>>, %arg3: memref<1x192xf32, #tpu.memory_space<vmem>>, %arg4: memref<192x128xbf16, #tpu.memory_space<vmem>>, %arg5: memref<1x128xf32, #tpu.memory_space<vmem>>, %arg6: memref<4x128xf32, #tpu.memory_space<vmem>>, %arg7: memref<1x128xf32, #tpu.memory_space<vmem>>, %arg8: memref<1x128xf32, #tpu.memory_space<vmem>>, %arg9: memref<128x384xbf16, #tpu.memory_space<vmem>>, %arg10: memref<1x384xf32, #tpu.memory_space<vmem>>, %arg11: memref<128x128xbf16, #tpu.memory_space<vmem>>, %arg12: memref<1x128xf32, #tpu.memory_space<vmem>>, %arg13: memref<1x128xf32, #tpu.memory_space<vmem>>, %arg14: memref<1x128xf32, #tpu.memory_space<vmem>>, %arg15: memref<128x512xbf16, #tpu.memory_space<vmem>>, %arg16: memref<1x512xf32, #tpu.memory_space<vmem>>, %arg17: memref<512x128xbf16, #tpu.memory_space<vmem>>, %arg18: memref<1x128xf32, #tpu.memory_space<vmem>>, %arg19: memref<1x128xf32, #tpu.memory_space<vmem>>, %arg20: memref<1x128xf32, #tpu.memory_space<vmem>>, %arg21: memref<1x4x128xf32, #tpu.memory_space<vmem>>) attributes {dimension_semantics = [#tpu.dimension_semantics<parallel>], iteration_bounds = array<i64: 4>, scalar_prefetch = 0 : i64, scratch_operands = 0 : i64, tpu.core_type = #tpu.core_type<tc>, window_params = [{transform_indices = @transform_0, window_bounds = array<i64: 1, 4, 192>}, {pipeline_mode = #tpu.pipeline_mode<synchronous>, transform_indices = @transform_1, window_bounds = array<i64: 1, 192>}, {pipeline_mode = #tpu.pipeline_mode<synchronous>, transform_indices = @transform_2, window_bounds = array<i64: 1, 192>}, {pipeline_mode = #tpu.pipeline_mode<synchronous>, transform_indices = @transform_3, window_bounds = array<i64: 192, 128>}, {pipeline_mode = #tpu.pipeline_mode<synchronous>, transform_indices = @transform_4, window_bounds = array<i64: 1, 128>}, {pipeline_mode = #tpu.pipeline_mode<synchronous>, transform_indices = @transform_5, window_bounds = array<i64: 4, 128>}, {pipeline_mode = #tpu.pipeline_mode<synchronous>, transform_indices = @transform_6, window_bounds = array<i64: 1, 128>}, {pipeline_mode = #tpu.pipeline_mode<synchronous>, transform_indices = @transform_7, window_bounds = array<i64: 1, 128>}, {pipeline_mode = #tpu.pipeline_mode<synchronous>, transform_indices = @transform_8, window_bounds = array<i64: 128, 384>}, {pipeline_mode = #tpu.pipeline_mode<synchronous>, transform_indices = @transform_9, window_bounds = array<i64: 1, 384>}, {pipeline_mode = #tpu.pipeline_mode<synchronous>, transform_indices = @transform_10, window_bounds = array<i64: 128, 128>}, {pipeline_mode = #tpu.pipeline_mode<synchronous>, transform_indices = @transform_11, window_bounds = array<i64: 1, 128>}, {pipeline_mode = #tpu.pipeline_mode<synchronous>, transform_indices = @transform_12, window_bounds = array<i64: 1, 128>}, {pipeline_mode = #tpu.pipeline_mode<synchronous>, transform_indices = @transform_13, window_bounds = array<i64: 1, 128>}, {pipeline_mode = #tpu.pipeline_mode<synchronous>, transform_indices = @transform_14, window_bounds = array<i64: 128, 512>}, {pipeline_mode = #tpu.pipeline_mode<synchronous>, transform_indices = @transform_15, window_bounds = array<i64: 1, 512>}, {pipeline_mode = #tpu.pipeline_mode<synchronous>, transform_indices = @transform_16, window_bounds = array<i64: 512, 128>}, {pipeline_mode = #tpu.pipeline_mode<synchronous>, transform_indices = @transform_17, window_bounds = array<i64: 1, 128>}, {pipeline_mode = #tpu.pipeline_mode<synchronous>, transform_indices = @transform_18, window_bounds = array<i64: 1, 128>}, {pipeline_mode = #tpu.pipeline_mode<synchronous>, transform_indices = @transform_19, window_bounds = array<i64: 1, 128>}, {transform_indices = @transform_20, window_bounds = array<i64: 1, 4, 128>}]} {
    %c0 = arith.constant 0 : index
    %c0_0 = arith.constant 0 : index
    %c0_1 = arith.constant 0 : index
    %0 = vector.load %arg1[%c0, %c0_0, %c0_1] : memref<1x4x192xf32, #tpu.memory_space<vmem>>, vector<1x4x192xf32>
    %1 = vector.shape_cast %0 : vector<1x4x192xf32> to vector<4x192xf32>
    %c0_2 = arith.constant 0 : index
    %c0_3 = arith.constant 0 : index
    %2 = vector.load %arg2[%c0_2, %c0_3] : memref<1x192xf32, #tpu.memory_space<vmem>>, vector<1x192xf32>
    %3 = vector.broadcast %2 : vector<1x192xf32> to vector<4x192xf32>
    %4 = arith.mulf %1, %3 : vector<4x192xf32>
    %c0_4 = arith.constant 0 : index
    %c0_5 = arith.constant 0 : index
    %5 = vector.load %arg3[%c0_4, %c0_5] : memref<1x192xf32, #tpu.memory_space<vmem>>, vector<1x192xf32>
    %6 = vector.broadcast %5 : vector<1x192xf32> to vector<4x192xf32>
    %7 = arith.addf %4, %6 : vector<4x192xf32>
    %c0_6 = arith.constant 0 : index
    %c0_7 = arith.constant 0 : index
    %8 = vector.load %arg5[%c0_6, %c0_7] : memref<1x128xf32, #tpu.memory_space<vmem>>, vector<1x128xf32>
    %9 = arith.truncf %7 : vector<4x192xf32> to vector<4x192xbf16>
    %c0_8 = arith.constant 0 : index
    %c0_9 = arith.constant 0 : index
    %10 = vector.load %arg4[%c0_8, %c0_9] : memref<192x128xbf16, #tpu.memory_space<vmem>>, vector<192x128xbf16>
    %cst = arith.constant dense<0.000000e+00> : vector<4x128xf32>
    %11 = tpu.matmul %9, %10, %cst {dimension_numbers = #tpu.dot_dimension_numbers<[1], [0], [0], [1], [0, 0, 1, 1], [], []>} : vector<4x192xbf16>, vector<192x128xbf16>, vector<4x128xf32> -> vector<4x128xf32>
    %12 = vector.broadcast %8 : vector<1x128xf32> to vector<4x128xf32>
    %13 = arith.addf %11, %12 : vector<4x128xf32>
    %c0_10 = arith.constant 0 : index
    %c0_11 = arith.constant 0 : index
    %14 = vector.load %arg6[%c0_10, %c0_11] : memref<4x128xf32, #tpu.memory_space<vmem>>, vector<4x128xf32>
    %15 = arith.addf %13, %14 : vector<4x128xf32>
    %c0_12 = arith.constant 0 : index
    %c0_13 = arith.constant 0 : index
    %16 = vector.load %arg7[%c0_12, %c0_13] : memref<1x128xf32, #tpu.memory_space<vmem>>, vector<1x128xf32>
    %c0_14 = arith.constant 0 : index
    %c0_15 = arith.constant 0 : index
    %17 = vector.load %arg8[%c0_14, %c0_15] : memref<1x128xf32, #tpu.memory_space<vmem>>, vector<1x128xf32>
    %cst_16 = arith.constant dense<0.000000e+00> : vector<4xf32>
    %18 = vector.multi_reduction <add>, %15, %cst_16 [1] : vector<4x128xf32> to vector<4xf32>
    %19 = vector.shape_cast %18 : vector<4xf32> to vector<4x1xf32>
    %cst_17 = arith.constant 1.280000e+02 : f32
    %20 = vector.broadcast %cst_17 : f32 to vector<4x1xf32>
    %21 = arith.divf %19, %20 : vector<4x1xf32>
    %22 = vector.broadcast %21 : vector<4x1xf32> to vector<4x128xf32>
    %23 = arith.subf %15, %22 : vector<4x128xf32>
    %24 = arith.mulf %23, %23 : vector<4x128xf32>
    %cst_18 = arith.constant dense<0.000000e+00> : vector<4xf32>
    %25 = vector.multi_reduction <add>, %24, %cst_18 [1] : vector<4x128xf32> to vector<4xf32>
    %26 = vector.shape_cast %25 : vector<4xf32> to vector<4x1xf32>
    %cst_19 = arith.constant 1.280000e+02 : f32
    %27 = vector.broadcast %cst_19 : f32 to vector<4x1xf32>
    %28 = arith.divf %26, %27 : vector<4x1xf32>
    %cst_20 = arith.constant 9.99999997E-7 : f32
    %29 = vector.broadcast %cst_20 : f32 to vector<4x1xf32>
    %30 = arith.addf %28, %29 : vector<4x1xf32>
    %31 = math.rsqrt %30 : vector<4x1xf32>
    %32 = vector.broadcast %31 : vector<4x1xf32> to vector<4x128xf32>
    %33 = arith.mulf %23, %32 : vector<4x128xf32>
    %34 = vector.broadcast %16 : vector<1x128xf32> to vector<4x128xf32>
    %35 = arith.mulf %33, %34 : vector<4x128xf32>
    %36 = vector.broadcast %17 : vector<1x128xf32> to vector<4x128xf32>
    %37 = arith.addf %35, %36 : vector<4x128xf32>
    %c0_21 = arith.constant 0 : index
    %c0_22 = arith.constant 0 : index
    %38 = vector.load %arg10[%c0_21, %c0_22] : memref<1x384xf32, #tpu.memory_space<vmem>>, vector<1x384xf32>
    %39 = arith.truncf %37 : vector<4x128xf32> to vector<4x128xbf16>
    %c0_23 = arith.constant 0 : index
    %c0_24 = arith.constant 0 : index
    %40 = vector.load %arg9[%c0_23, %c0_24] : memref<128x384xbf16, #tpu.memory_space<vmem>>, vector<128x384xbf16>
    %cst_25 = arith.constant dense<0.000000e+00> : vector<4x384xf32>
    %41 = tpu.matmul %39, %40, %cst_25 {dimension_numbers = #tpu.dot_dimension_numbers<[1], [0], [0], [1], [0, 0, 1, 1], [], []>} : vector<4x128xbf16>, vector<128x384xbf16>, vector<4x384xf32> -> vector<4x384xf32>
    %42 = vector.broadcast %38 : vector<1x384xf32> to vector<4x384xf32>
    %43 = arith.addf %41, %42 : vector<4x384xf32>
    %44 = vector.extract_strided_slice %43 {offsets = [0, 0], sizes = [4, 128], strides = [1, 1]} : vector<4x384xf32> to vector<4x128xf32>
    %45 = vector.extract_strided_slice %43 {offsets = [0, 128], sizes = [4, 128], strides = [1, 1]} : vector<4x384xf32> to vector<4x128xf32>
    %46 = vector.extract_strided_slice %43 {offsets = [0, 256], sizes = [4, 128], strides = [1, 1]} : vector<4x384xf32> to vector<4x128xf32>
    %47 = vector.extract_strided_slice %44 {offsets = [0, 0], sizes = [4, 64], strides = [1, 1]} : vector<4x128xf32> to vector<4x64xf32>
    %48 = arith.truncf %47 : vector<4x64xf32> to vector<4x64xbf16>
    %49 = vector.extract_strided_slice %45 {offsets = [0, 0], sizes = [4, 64], strides = [1, 1]} : vector<4x128xf32> to vector<4x64xf32>
    %50 = arith.truncf %49 : vector<4x64xf32> to vector<4x64xbf16>
    %51 = vector.extract_strided_slice %46 {offsets = [0, 0], sizes = [4, 64], strides = [1, 1]} : vector<4x128xf32> to vector<4x64xf32>
    %52 = arith.truncf %51 : vector<4x64xf32> to vector<4x64xbf16>
    %cst_26 = arith.constant dense<0.000000e+00> : vector<4x4xf32>
    %53 = tpu.matmul %48, %50, %cst_26 {dimension_numbers = #tpu.dot_dimension_numbers<[1], [1], [0], [0], [0, 0, 1, 0], [], []>} : vector<4x64xbf16>, vector<4x64xbf16>, vector<4x4xf32> -> vector<4x4xf32>
    %cst_27 = arith.constant dense<0xFF800000> : vector<4xf32>
    %54 = vector.multi_reduction <maximumf>, %53, %cst_27 [1] : vector<4x4xf32> to vector<4xf32>
    %55 = vector.shape_cast %54 : vector<4xf32> to vector<4x1xf32>
    %56 = vector.broadcast %55 : vector<4x1xf32> to vector<4x4xf32>
    %57 = arith.subf %53, %56 : vector<4x4xf32>
    %58 = math.exp %57 : vector<4x4xf32>
    %cst_28 = arith.constant dense<0.000000e+00> : vector<4xf32>
    %59 = vector.multi_reduction <add>, %58, %cst_28 [1] : vector<4x4xf32> to vector<4xf32>
    %60 = vector.shape_cast %59 : vector<4xf32> to vector<4x1xf32>
    %61 = tpu.reciprocal %60 {approx = true} : vector<4x1xf32> -> vector<4x1xf32>
    %62 = vector.broadcast %61 : vector<4x1xf32> to vector<4x4xf32>
    %63 = arith.mulf %58, %62 : vector<4x4xf32>
    %64 = arith.truncf %63 : vector<4x4xf32> to vector<4x4xbf16>
    %cst_29 = arith.constant dense<0.000000e+00> : vector<4x64xf32>
    %65 = tpu.matmul %64, %52, %cst_29 {dimension_numbers = #tpu.dot_dimension_numbers<[1], [0], [0], [1], [0, 0, 1, 1], [], []>} : vector<4x4xbf16>, vector<4x64xbf16>, vector<4x64xf32> -> vector<4x64xf32>
    %66 = vector.extract_strided_slice %44 {offsets = [0, 64], sizes = [4, 64], strides = [1, 1]} : vector<4x128xf32> to vector<4x64xf32>
    %67 = arith.truncf %66 : vector<4x64xf32> to vector<4x64xbf16>
    %68 = vector.extract_strided_slice %45 {offsets = [0, 64], sizes = [4, 64], strides = [1, 1]} : vector<4x128xf32> to vector<4x64xf32>
    %69 = arith.truncf %68 : vector<4x64xf32> to vector<4x64xbf16>
    %70 = vector.extract_strided_slice %46 {offsets = [0, 64], sizes = [4, 64], strides = [1, 1]} : vector<4x128xf32> to vector<4x64xf32>
    %71 = arith.truncf %70 : vector<4x64xf32> to vector<4x64xbf16>
    %cst_30 = arith.constant dense<0.000000e+00> : vector<4x4xf32>
    %72 = tpu.matmul %67, %69, %cst_30 {dimension_numbers = #tpu.dot_dimension_numbers<[1], [1], [0], [0], [0, 0, 1, 0], [], []>} : vector<4x64xbf16>, vector<4x64xbf16>, vector<4x4xf32> -> vector<4x4xf32>
    %cst_31 = arith.constant dense<0xFF800000> : vector<4xf32>
    %73 = vector.multi_reduction <maximumf>, %72, %cst_31 [1] : vector<4x4xf32> to vector<4xf32>
    %74 = vector.shape_cast %73 : vector<4xf32> to vector<4x1xf32>
    %75 = vector.broadcast %74 : vector<4x1xf32> to vector<4x4xf32>
    %76 = arith.subf %72, %75 : vector<4x4xf32>
    %77 = math.exp %76 : vector<4x4xf32>
    %cst_32 = arith.constant dense<0.000000e+00> : vector<4xf32>
    %78 = vector.multi_reduction <add>, %77, %cst_32 [1] : vector<4x4xf32> to vector<4xf32>
    %79 = vector.shape_cast %78 : vector<4xf32> to vector<4x1xf32>
    %80 = tpu.reciprocal %79 {approx = true} : vector<4x1xf32> -> vector<4x1xf32>
    %81 = vector.broadcast %80 : vector<4x1xf32> to vector<4x4xf32>
    %82 = arith.mulf %77, %81 : vector<4x4xf32>
    %83 = arith.truncf %82 : vector<4x4xf32> to vector<4x4xbf16>
    %cst_33 = arith.constant dense<0.000000e+00> : vector<4x64xf32>
    %84 = tpu.matmul %83, %71, %cst_33 {dimension_numbers = #tpu.dot_dimension_numbers<[1], [0], [0], [1], [0, 0, 1, 1], [], []>} : vector<4x4xbf16>, vector<4x64xbf16>, vector<4x64xf32> -> vector<4x64xf32>
    %85 = tpu.concatenate %65, %84 in 1 : vector<4x64xf32>, vector<4x64xf32> -> vector<4x128xf32>
    %c0_34 = arith.constant 0 : index
    %c0_35 = arith.constant 0 : index
    %86 = vector.load %arg12[%c0_34, %c0_35] : memref<1x128xf32, #tpu.memory_space<vmem>>, vector<1x128xf32>
    %87 = arith.truncf %85 : vector<4x128xf32> to vector<4x128xbf16>
    %c0_36 = arith.constant 0 : index
    %c0_37 = arith.constant 0 : index
    %88 = vector.load %arg11[%c0_36, %c0_37] : memref<128x128xbf16, #tpu.memory_space<vmem>>, vector<128x128xbf16>
    %cst_38 = arith.constant dense<0.000000e+00> : vector<4x128xf32>
    %89 = tpu.matmul %87, %88, %cst_38 {dimension_numbers = #tpu.dot_dimension_numbers<[1], [0], [0], [1], [0, 0, 1, 1], [], []>} : vector<4x128xbf16>, vector<128x128xbf16>, vector<4x128xf32> -> vector<4x128xf32>
    %90 = vector.broadcast %86 : vector<1x128xf32> to vector<4x128xf32>
    %91 = arith.addf %89, %90 : vector<4x128xf32>
    %92 = arith.addf %15, %91 : vector<4x128xf32>
    %c0_39 = arith.constant 0 : index
    %c0_40 = arith.constant 0 : index
    %93 = vector.load %arg13[%c0_39, %c0_40] : memref<1x128xf32, #tpu.memory_space<vmem>>, vector<1x128xf32>
    %c0_41 = arith.constant 0 : index
    %c0_42 = arith.constant 0 : index
    %94 = vector.load %arg14[%c0_41, %c0_42] : memref<1x128xf32, #tpu.memory_space<vmem>>, vector<1x128xf32>
    %cst_43 = arith.constant dense<0.000000e+00> : vector<4xf32>
    %95 = vector.multi_reduction <add>, %92, %cst_43 [1] : vector<4x128xf32> to vector<4xf32>
    %96 = vector.shape_cast %95 : vector<4xf32> to vector<4x1xf32>
    %cst_44 = arith.constant 1.280000e+02 : f32
    %97 = vector.broadcast %cst_44 : f32 to vector<4x1xf32>
    %98 = arith.divf %96, %97 : vector<4x1xf32>
    %99 = vector.broadcast %98 : vector<4x1xf32> to vector<4x128xf32>
    %100 = arith.subf %92, %99 : vector<4x128xf32>
    %101 = arith.mulf %100, %100 : vector<4x128xf32>
    %cst_45 = arith.constant dense<0.000000e+00> : vector<4xf32>
    %102 = vector.multi_reduction <add>, %101, %cst_45 [1] : vector<4x128xf32> to vector<4xf32>
    %103 = vector.shape_cast %102 : vector<4xf32> to vector<4x1xf32>
    %cst_46 = arith.constant 1.280000e+02 : f32
    %104 = vector.broadcast %cst_46 : f32 to vector<4x1xf32>
    %105 = arith.divf %103, %104 : vector<4x1xf32>
    %cst_47 = arith.constant 9.99999997E-7 : f32
    %106 = vector.broadcast %cst_47 : f32 to vector<4x1xf32>
    %107 = arith.addf %105, %106 : vector<4x1xf32>
    %108 = math.rsqrt %107 : vector<4x1xf32>
    %109 = vector.broadcast %108 : vector<4x1xf32> to vector<4x128xf32>
    %110 = arith.mulf %100, %109 : vector<4x128xf32>
    %111 = vector.broadcast %93 : vector<1x128xf32> to vector<4x128xf32>
    %112 = arith.mulf %110, %111 : vector<4x128xf32>
    %113 = vector.broadcast %94 : vector<1x128xf32> to vector<4x128xf32>
    %114 = arith.addf %112, %113 : vector<4x128xf32>
    %c0_48 = arith.constant 0 : index
    %c0_49 = arith.constant 0 : index
    %115 = vector.load %arg16[%c0_48, %c0_49] : memref<1x512xf32, #tpu.memory_space<vmem>>, vector<1x512xf32>
    %116 = arith.truncf %114 : vector<4x128xf32> to vector<4x128xbf16>
    %c0_50 = arith.constant 0 : index
    %c0_51 = arith.constant 0 : index
    %117 = vector.load %arg15[%c0_50, %c0_51] : memref<128x512xbf16, #tpu.memory_space<vmem>>, vector<128x512xbf16>
    %cst_52 = arith.constant dense<0.000000e+00> : vector<4x512xf32>
    %118 = tpu.matmul %116, %117, %cst_52 {dimension_numbers = #tpu.dot_dimension_numbers<[1], [0], [0], [1], [0, 0, 1, 1], [], []>} : vector<4x128xbf16>, vector<128x512xbf16>, vector<4x512xf32> -> vector<4x512xf32>
    %119 = vector.broadcast %115 : vector<1x512xf32> to vector<4x512xf32>
    %120 = arith.addf %118, %119 : vector<4x512xf32>
    %121 = arith.mulf %120, %120 : vector<4x512xf32>
    %122 = arith.mulf %120, %121 : vector<4x512xf32>
    %cst_53 = arith.constant 4.471500e-02 : f32
    %123 = vector.broadcast %cst_53 : f32 to vector<4x512xf32>
    %124 = arith.mulf %123, %122 : vector<4x512xf32>
    %125 = arith.addf %120, %124 : vector<4x512xf32>
    %cst_54 = arith.constant 0.797884583 : f32
    %126 = vector.broadcast %cst_54 : f32 to vector<4x512xf32>
    %127 = arith.mulf %126, %125 : vector<4x512xf32>
    %128 = math.tanh %127 : vector<4x512xf32>
    %cst_55 = arith.constant 1.000000e+00 : f32
    %129 = vector.broadcast %cst_55 : f32 to vector<4x512xf32>
    %130 = arith.addf %129, %128 : vector<4x512xf32>
    %cst_56 = arith.constant 5.000000e-01 : f32
    %131 = vector.broadcast %cst_56 : f32 to vector<4x512xf32>
    %132 = arith.mulf %131, %130 : vector<4x512xf32>
    %133 = arith.mulf %120, %132 : vector<4x512xf32>
    %c0_57 = arith.constant 0 : index
    %c0_58 = arith.constant 0 : index
    %134 = vector.load %arg18[%c0_57, %c0_58] : memref<1x128xf32, #tpu.memory_space<vmem>>, vector<1x128xf32>
    %135 = arith.truncf %133 : vector<4x512xf32> to vector<4x512xbf16>
    %c0_59 = arith.constant 0 : index
    %c0_60 = arith.constant 0 : index
    %136 = vector.load %arg17[%c0_59, %c0_60] : memref<512x128xbf16, #tpu.memory_space<vmem>>, vector<512x128xbf16>
    %cst_61 = arith.constant dense<0.000000e+00> : vector<4x128xf32>
    %137 = tpu.matmul %135, %136, %cst_61 {dimension_numbers = #tpu.dot_dimension_numbers<[1], [0], [0], [1], [0, 0, 1, 1], [], []>} : vector<4x512xbf16>, vector<512x128xbf16>, vector<4x128xf32> -> vector<4x128xf32>
    %138 = vector.broadcast %134 : vector<1x128xf32> to vector<4x128xf32>
    %139 = arith.addf %137, %138 : vector<4x128xf32>
    %140 = arith.addf %92, %139 : vector<4x128xf32>
    %c0_62 = arith.constant 0 : index
    %c0_63 = arith.constant 0 : index
    %141 = vector.load %arg19[%c0_62, %c0_63] : memref<1x128xf32, #tpu.memory_space<vmem>>, vector<1x128xf32>
    %c0_64 = arith.constant 0 : index
    %c0_65 = arith.constant 0 : index
    %142 = vector.load %arg20[%c0_64, %c0_65] : memref<1x128xf32, #tpu.memory_space<vmem>>, vector<1x128xf32>
    %cst_66 = arith.constant dense<0.000000e+00> : vector<4xf32>
    %143 = vector.multi_reduction <add>, %140, %cst_66 [1] : vector<4x128xf32> to vector<4xf32>
    %144 = vector.shape_cast %143 : vector<4xf32> to vector<4x1xf32>
    %cst_67 = arith.constant 1.280000e+02 : f32
    %145 = vector.broadcast %cst_67 : f32 to vector<4x1xf32>
    %146 = arith.divf %144, %145 : vector<4x1xf32>
    %147 = vector.broadcast %146 : vector<4x1xf32> to vector<4x128xf32>
    %148 = arith.subf %140, %147 : vector<4x128xf32>
    %149 = arith.mulf %148, %148 : vector<4x128xf32>
    %cst_68 = arith.constant dense<0.000000e+00> : vector<4xf32>
    %150 = vector.multi_reduction <add>, %149, %cst_68 [1] : vector<4x128xf32> to vector<4xf32>
    %151 = vector.shape_cast %150 : vector<4xf32> to vector<4x1xf32>
    %cst_69 = arith.constant 1.280000e+02 : f32
    %152 = vector.broadcast %cst_69 : f32 to vector<4x1xf32>
    %153 = arith.divf %151, %152 : vector<4x1xf32>
    %cst_70 = arith.constant 9.99999997E-7 : f32
    %154 = vector.broadcast %cst_70 : f32 to vector<4x1xf32>
    %155 = arith.addf %153, %154 : vector<4x1xf32>
    %156 = math.rsqrt %155 : vector<4x1xf32>
    %157 = vector.broadcast %156 : vector<4x1xf32> to vector<4x128xf32>
    %158 = arith.mulf %148, %157 : vector<4x128xf32>
    %159 = vector.broadcast %141 : vector<1x128xf32> to vector<4x128xf32>
    %160 = arith.mulf %158, %159 : vector<4x128xf32>
    %161 = vector.broadcast %142 : vector<1x128xf32> to vector<4x128xf32>
    %162 = arith.addf %160, %161 : vector<4x128xf32>
    %c0_71 = arith.constant 0 : index
    %c0_72 = arith.constant 0 : index
    %c0_73 = arith.constant 0 : index
    %163 = vector.load %arg21[%c0_71, %c0_72, %c0_73] : memref<1x4x128xf32, #tpu.memory_space<vmem>>, vector<1x4x128xf32>
    %164 = vector.shape_cast %163 : vector<1x4x128xf32> to vector<4x128xf32>
    %165 = vector.shape_cast %162 : vector<4x128xf32> to vector<1x4x128xf32>
    tpu.vector_store %arg21[%c0_71, %c0_72, %c0_73], %165 {strides = array<i32>} : memref<1x4x128xf32, #tpu.memory_space<vmem>>, vector<1x4x128xf32>,
    return
  }
  func.func @transform_0(%arg0: i32) -> (i32, i32, i32) {
    %c0_i32 = arith.constant 0 : i32
    %c0_i32_0 = arith.constant 0 : i32
    %c0_i32_1 = arith.constant 0 : i32
    return %arg0, %c0_i32, %c0_i32_0 : i32, i32, i32
  }
  func.func @transform_1(%arg0: i32) -> (i32, i32) {
    %c0_i32 = arith.constant 0 : i32
    %c0_i32_0 = arith.constant 0 : i32
    %c0_i32_1 = arith.constant 0 : i32
    return %c0_i32, %c0_i32_0 : i32, i32
  }
  func.func @transform_2(%arg0: i32) -> (i32, i32) {
    %c0_i32 = arith.constant 0 : i32
    %c0_i32_0 = arith.constant 0 : i32
    %c0_i32_1 = arith.constant 0 : i32
    return %c0_i32, %c0_i32_0 : i32, i32
  }
  func.func @transform_3(%arg0: i32) -> (i32, i32) {
    %c0_i32 = arith.constant 0 : i32
    %c0_i32_0 = arith.constant 0 : i32
    %c0_i32_1 = arith.constant 0 : i32
    return %c0_i32, %c0_i32_0 : i32, i32
  }
  func.func @transform_4(%arg0: i32) -> (i32, i32) {
    %c0_i32 = arith.constant 0 : i32
    %c0_i32_0 = arith.constant 0 : i32
    %c0_i32_1 = arith.constant 0 : i32
    return %c0_i32, %c0_i32_0 : i32, i32
  }
  func.func @transform_5(%arg0: i32) -> (i32, i32) {
    %c0_i32 = arith.constant 0 : i32
    %c0_i32_0 = arith.constant 0 : i32
    %c0_i32_1 = arith.constant 0 : i32
    return %c0_i32, %c0_i32_0 : i32, i32
  }
  func.func @transform_6(%arg0: i32) -> (i32, i32) {
    %c0_i32 = arith.constant 0 : i32
    %c0_i32_0 = arith.constant 0 : i32
    %c0_i32_1 = arith.constant 0 : i32
    return %c0_i32, %c0_i32_0 : i32, i32
  }
  func.func @transform_7(%arg0: i32) -> (i32, i32) {
    %c0_i32 = arith.constant 0 : i32
    %c0_i32_0 = arith.constant 0 : i32
    %c0_i32_1 = arith.constant 0 : i32
    return %c0_i32, %c0_i32_0 : i32, i32
  }
  func.func @transform_8(%arg0: i32) -> (i32, i32) {
    %c0_i32 = arith.constant 0 : i32
    %c0_i32_0 = arith.constant 0 : i32
    %c0_i32_1 = arith.constant 0 : i32
    return %c0_i32, %c0_i32_0 : i32, i32
  }
  func.func @transform_9(%arg0: i32) -> (i32, i32) {
    %c0_i32 = arith.constant 0 : i32
    %c0_i32_0 = arith.constant 0 : i32
    %c0_i32_1 = arith.constant 0 : i32
    return %c0_i32, %c0_i32_0 : i32, i32
  }
  func.func @transform_10(%arg0: i32) -> (i32, i32) {
    %c0_i32 = arith.constant 0 : i32
    %c0_i32_0 = arith.constant 0 : i32
    %c0_i32_1 = arith.constant 0 : i32
    return %c0_i32, %c0_i32_0 : i32, i32
  }
  func.func @transform_11(%arg0: i32) -> (i32, i32) {
    %c0_i32 = arith.constant 0 : i32
    %c0_i32_0 = arith.constant 0 : i32
    %c0_i32_1 = arith.constant 0 : i32
    return %c0_i32, %c0_i32_0 : i32, i32
  }
  func.func @transform_12(%arg0: i32) -> (i32, i32) {
    %c0_i32 = arith.constant 0 : i32
    %c0_i32_0 = arith.constant 0 : i32
    %c0_i32_1 = arith.constant 0 : i32
    return %c0_i32, %c0_i32_0 : i32, i32
  }
  func.func @transform_13(%arg0: i32) -> (i32, i32) {
    %c0_i32 = arith.constant 0 : i32
    %c0_i32_0 = arith.constant 0 : i32
    %c0_i32_1 = arith.constant 0 : i32
    return %c0_i32, %c0_i32_0 : i32, i32
  }
  func.func @transform_14(%arg0: i32) -> (i32, i32) {
    %c0_i32 = arith.constant 0 : i32
    %c0_i32_0 = arith.constant 0 : i32
    %c0_i32_1 = arith.constant 0 : i32
    return %c0_i32, %c0_i32_0 : i32, i32
  }
  func.func @transform_15(%arg0: i32) -> (i32, i32) {
    %c0_i32 = arith.constant 0 : i32
    %c0_i32_0 = arith.constant 0 : i32
    %c0_i32_1 = arith.constant 0 : i32
    return %c0_i32, %c0_i32_0 : i32, i32
  }
  func.func @transform_16(%arg0: i32) -> (i32, i32) {
    %c0_i32 = arith.constant 0 : i32
    %c0_i32_0 = arith.constant 0 : i32
    %c0_i32_1 = arith.constant 0 : i32
    return %c0_i32, %c0_i32_0 : i32, i32
  }
  func.func @transform_17(%arg0: i32) -> (i32, i32) {
    %c0_i32 = arith.constant 0 : i32
    %c0_i32_0 = arith.constant 0 : i32
    %c0_i32_1 = arith.constant 0 : i32
    return %c0_i32, %c0_i32_0 : i32, i32
  }
  func.func @transform_18(%arg0: i32) -> (i32, i32) {
    %c0_i32 = arith.constant 0 : i32
    %c0_i32_0 = arith.constant 0 : i32
    %c0_i32_1 = arith.constant 0 : i32
    return %c0_i32, %c0_i32_0 : i32, i32
  }
  func.func @transform_19(%arg0: i32) -> (i32, i32) {
    %c0_i32 = arith.constant 0 : i32
    %c0_i32_0 = arith.constant 0 : i32
    %c0_i32_1 = arith.constant 0 : i32
    return %c0_i32, %c0_i32_0 : i32, i32
  }
  func.func @transform_20(%arg0: i32) -> (i32, i32, i32) {
    %c0_i32 = arith.constant 0 : i32
    %c0_i32_0 = arith.constant 0 : i32
    %c0_i32_1 = arith.constant 0 : i32
    return %arg0, %c0_i32, %c0_i32_0 : i32, i32, i32
  }
}

module attributes {stable_mosaic.version = 11 : i64} {
  func.func @_qformer_embed_kernel(%arg0: i32, %arg1: memref<8x128xf32, #tpu.memory_space<vmem>>, %arg2: memref<1x4x128xf32, #tpu.memory_space<vmem>>, %arg3: memref<128x384xbf16, #tpu.memory_space<vmem>>, %arg4: memref<1x384xf32, #tpu.memory_space<vmem>>, %arg5: memref<128x128xbf16, #tpu.memory_space<vmem>>, %arg6: memref<1x128xf32, #tpu.memory_space<vmem>>, %arg7: memref<1x128xf32, #tpu.memory_space<vmem>>, %arg8: memref<1x128xf32, #tpu.memory_space<vmem>>, %arg9: memref<128x128xbf16, #tpu.memory_space<vmem>>, %arg10: memref<1x128xf32, #tpu.memory_space<vmem>>, %arg11: memref<128x256xbf16, #tpu.memory_space<vmem>>, %arg12: memref<1x256xf32, #tpu.memory_space<vmem>>, %arg13: memref<128x128xbf16, #tpu.memory_space<vmem>>, %arg14: memref<1x128xf32, #tpu.memory_space<vmem>>, %arg15: memref<1x128xf32, #tpu.memory_space<vmem>>, %arg16: memref<1x128xf32, #tpu.memory_space<vmem>>, %arg17: memref<128x512xbf16, #tpu.memory_space<vmem>>, %arg18: memref<1x512xf32, #tpu.memory_space<vmem>>, %arg19: memref<512x128xbf16, #tpu.memory_space<vmem>>, %arg20: memref<1x128xf32, #tpu.memory_space<vmem>>, %arg21: memref<1x128xf32, #tpu.memory_space<vmem>>, %arg22: memref<1x128xf32, #tpu.memory_space<vmem>>, %arg23: memref<128x128xbf16, #tpu.memory_space<vmem>>, %arg24: memref<1x128xf32, #tpu.memory_space<vmem>>, %arg25: memref<1x8x128xf32, #tpu.memory_space<vmem>>) attributes {dimension_semantics = [#tpu.dimension_semantics<parallel>], iteration_bounds = array<i64: 4>, scalar_prefetch = 0 : i64, scratch_operands = 0 : i64, tpu.core_type = #tpu.core_type<tc>, window_params = [{pipeline_mode = #tpu.pipeline_mode<synchronous>, transform_indices = @transform_0, window_bounds = array<i64: 8, 128>}, {transform_indices = @transform_1, window_bounds = array<i64: 1, 4, 128>}, {pipeline_mode = #tpu.pipeline_mode<synchronous>, transform_indices = @transform_2, window_bounds = array<i64: 128, 384>}, {pipeline_mode = #tpu.pipeline_mode<synchronous>, transform_indices = @transform_3, window_bounds = array<i64: 1, 384>}, {pipeline_mode = #tpu.pipeline_mode<synchronous>, transform_indices = @transform_4, window_bounds = array<i64: 128, 128>}, {pipeline_mode = #tpu.pipeline_mode<synchronous>, transform_indices = @transform_5, window_bounds = array<i64: 1, 128>}, {pipeline_mode = #tpu.pipeline_mode<synchronous>, transform_indices = @transform_6, window_bounds = array<i64: 1, 128>}, {pipeline_mode = #tpu.pipeline_mode<synchronous>, transform_indices = @transform_7, window_bounds = array<i64: 1, 128>}, {pipeline_mode = #tpu.pipeline_mode<synchronous>, transform_indices = @transform_8, window_bounds = array<i64: 128, 128>}, {pipeline_mode = #tpu.pipeline_mode<synchronous>, transform_indices = @transform_9, window_bounds = array<i64: 1, 128>}, {pipeline_mode = #tpu.pipeline_mode<synchronous>, transform_indices = @transform_10, window_bounds = array<i64: 128, 256>}, {pipeline_mode = #tpu.pipeline_mode<synchronous>, transform_indices = @transform_11, window_bounds = array<i64: 1, 256>}, {pipeline_mode = #tpu.pipeline_mode<synchronous>, transform_indices = @transform_12, window_bounds = array<i64: 128, 128>}, {pipeline_mode = #tpu.pipeline_mode<synchronous>, transform_indices = @transform_13, window_bounds = array<i64: 1, 128>}, {pipeline_mode = #tpu.pipeline_mode<synchronous>, transform_indices = @transform_14, window_bounds = array<i64: 1, 128>}, {pipeline_mode = #tpu.pipeline_mode<synchronous>, transform_indices = @transform_15, window_bounds = array<i64: 1, 128>}, {pipeline_mode = #tpu.pipeline_mode<synchronous>, transform_indices = @transform_16, window_bounds = array<i64: 128, 512>}, {pipeline_mode = #tpu.pipeline_mode<synchronous>, transform_indices = @transform_17, window_bounds = array<i64: 1, 512>}, {pipeline_mode = #tpu.pipeline_mode<synchronous>, transform_indices = @transform_18, window_bounds = array<i64: 512, 128>}, {pipeline_mode = #tpu.pipeline_mode<synchronous>, transform_indices = @transform_19, window_bounds = array<i64: 1, 128>}, {pipeline_mode = #tpu.pipeline_mode<synchronous>, transform_indices = @transform_20, window_bounds = array<i64: 1, 128>}, {pipeline_mode = #tpu.pipeline_mode<synchronous>, transform_indices = @transform_21, window_bounds = array<i64: 1, 128>}, {pipeline_mode = #tpu.pipeline_mode<synchronous>, transform_indices = @transform_22, window_bounds = array<i64: 128, 128>}, {pipeline_mode = #tpu.pipeline_mode<synchronous>, transform_indices = @transform_23, window_bounds = array<i64: 1, 128>}, {transform_indices = @transform_24, window_bounds = array<i64: 1, 8, 128>}]} {
    %c0 = arith.constant 0 : index
    %c0_0 = arith.constant 0 : index
    %0 = vector.load %arg1[%c0, %c0_0] : memref<8x128xf32, #tpu.memory_space<vmem>>, vector<8x128xf32>
    %c0_1 = arith.constant 0 : index
    %c0_2 = arith.constant 0 : index
    %c0_3 = arith.constant 0 : index
    %1 = vector.load %arg2[%c0_1, %c0_2, %c0_3] : memref<1x4x128xf32, #tpu.memory_space<vmem>>, vector<1x4x128xf32>
    %2 = vector.shape_cast %1 : vector<1x4x128xf32> to vector<4x128xf32>
    %c0_4 = arith.constant 0 : index
    %c0_5 = arith.constant 0 : index
    %3 = vector.load %arg4[%c0_4, %c0_5] : memref<1x384xf32, #tpu.memory_space<vmem>>, vector<1x384xf32>
    %4 = arith.truncf %0 : vector<8x128xf32> to vector<8x128xbf16>
    %c0_6 = arith.constant 0 : index
    %c0_7 = arith.constant 0 : index
    %5 = vector.load %arg3[%c0_6, %c0_7] : memref<128x384xbf16, #tpu.memory_space<vmem>>, vector<128x384xbf16>
    %cst = arith.constant dense<0.000000e+00> : vector<8x384xf32>
    %6 = tpu.matmul %4, %5, %cst {dimension_numbers = #tpu.dot_dimension_numbers<[1], [0], [0], [1], [0, 0, 1, 1], [], []>} : vector<8x128xbf16>, vector<128x384xbf16>, vector<8x384xf32> -> vector<8x384xf32>
    %7 = vector.broadcast %3 : vector<1x384xf32> to vector<8x384xf32>
    %8 = arith.addf %6, %7 : vector<8x384xf32>
    %9 = vector.extract_strided_slice %8 {offsets = [0, 0], sizes = [8, 128], strides = [1, 1]} : vector<8x384xf32> to vector<8x128xf32>
    %10 = vector.extract_strided_slice %8 {offsets = [0, 128], sizes = [8, 128], strides = [1, 1]} : vector<8x384xf32> to vector<8x128xf32>
    %11 = vector.extract_strided_slice %8 {offsets = [0, 256], sizes = [8, 128], strides = [1, 1]} : vector<8x384xf32> to vector<8x128xf32>
    %12 = vector.extract_strided_slice %9 {offsets = [0, 0], sizes = [8, 64], strides = [1, 1]} : vector<8x128xf32> to vector<8x64xf32>
    %13 = arith.truncf %12 : vector<8x64xf32> to vector<8x64xbf16>
    %14 = vector.extract_strided_slice %10 {offsets = [0, 0], sizes = [8, 64], strides = [1, 1]} : vector<8x128xf32> to vector<8x64xf32>
    %15 = arith.truncf %14 : vector<8x64xf32> to vector<8x64xbf16>
    %16 = vector.extract_strided_slice %11 {offsets = [0, 0], sizes = [8, 64], strides = [1, 1]} : vector<8x128xf32> to vector<8x64xf32>
    %17 = arith.truncf %16 : vector<8x64xf32> to vector<8x64xbf16>
    %cst_8 = arith.constant dense<0.000000e+00> : vector<8x8xf32>
    %18 = tpu.matmul %13, %15, %cst_8 {dimension_numbers = #tpu.dot_dimension_numbers<[1], [1], [0], [0], [0, 0, 1, 0], [], []>} : vector<8x64xbf16>, vector<8x64xbf16>, vector<8x8xf32> -> vector<8x8xf32>
    %cst_9 = arith.constant dense<0xFF800000> : vector<8xf32>
    %19 = vector.multi_reduction <maximumf>, %18, %cst_9 [1] : vector<8x8xf32> to vector<8xf32>
    %20 = vector.shape_cast %19 : vector<8xf32> to vector<8x1xf32>
    %21 = vector.broadcast %20 : vector<8x1xf32> to vector<8x8xf32>
    %22 = arith.subf %18, %21 : vector<8x8xf32>
    %23 = math.exp %22 : vector<8x8xf32>
    %cst_10 = arith.constant dense<0.000000e+00> : vector<8xf32>
    %24 = vector.multi_reduction <add>, %23, %cst_10 [1] : vector<8x8xf32> to vector<8xf32>
    %25 = vector.shape_cast %24 : vector<8xf32> to vector<8x1xf32>
    %26 = tpu.reciprocal %25 {approx = true} : vector<8x1xf32> -> vector<8x1xf32>
    %27 = vector.broadcast %26 : vector<8x1xf32> to vector<8x8xf32>
    %28 = arith.mulf %23, %27 : vector<8x8xf32>
    %29 = arith.truncf %28 : vector<8x8xf32> to vector<8x8xbf16>
    %cst_11 = arith.constant dense<0.000000e+00> : vector<8x64xf32>
    %30 = tpu.matmul %29, %17, %cst_11 {dimension_numbers = #tpu.dot_dimension_numbers<[1], [0], [0], [1], [0, 0, 1, 1], [], []>} : vector<8x8xbf16>, vector<8x64xbf16>, vector<8x64xf32> -> vector<8x64xf32>
    %31 = vector.extract_strided_slice %9 {offsets = [0, 64], sizes = [8, 64], strides = [1, 1]} : vector<8x128xf32> to vector<8x64xf32>
    %32 = arith.truncf %31 : vector<8x64xf32> to vector<8x64xbf16>
    %33 = vector.extract_strided_slice %10 {offsets = [0, 64], sizes = [8, 64], strides = [1, 1]} : vector<8x128xf32> to vector<8x64xf32>
    %34 = arith.truncf %33 : vector<8x64xf32> to vector<8x64xbf16>
    %35 = vector.extract_strided_slice %11 {offsets = [0, 64], sizes = [8, 64], strides = [1, 1]} : vector<8x128xf32> to vector<8x64xf32>
    %36 = arith.truncf %35 : vector<8x64xf32> to vector<8x64xbf16>
    %cst_12 = arith.constant dense<0.000000e+00> : vector<8x8xf32>
    %37 = tpu.matmul %32, %34, %cst_12 {dimension_numbers = #tpu.dot_dimension_numbers<[1], [1], [0], [0], [0, 0, 1, 0], [], []>} : vector<8x64xbf16>, vector<8x64xbf16>, vector<8x8xf32> -> vector<8x8xf32>
    %cst_13 = arith.constant dense<0xFF800000> : vector<8xf32>
    %38 = vector.multi_reduction <maximumf>, %37, %cst_13 [1] : vector<8x8xf32> to vector<8xf32>
    %39 = vector.shape_cast %38 : vector<8xf32> to vector<8x1xf32>
    %40 = vector.broadcast %39 : vector<8x1xf32> to vector<8x8xf32>
    %41 = arith.subf %37, %40 : vector<8x8xf32>
    %42 = math.exp %41 : vector<8x8xf32>
    %cst_14 = arith.constant dense<0.000000e+00> : vector<8xf32>
    %43 = vector.multi_reduction <add>, %42, %cst_14 [1] : vector<8x8xf32> to vector<8xf32>
    %44 = vector.shape_cast %43 : vector<8xf32> to vector<8x1xf32>
    %45 = tpu.reciprocal %44 {approx = true} : vector<8x1xf32> -> vector<8x1xf32>
    %46 = vector.broadcast %45 : vector<8x1xf32> to vector<8x8xf32>
    %47 = arith.mulf %42, %46 : vector<8x8xf32>
    %48 = arith.truncf %47 : vector<8x8xf32> to vector<8x8xbf16>
    %cst_15 = arith.constant dense<0.000000e+00> : vector<8x64xf32>
    %49 = tpu.matmul %48, %36, %cst_15 {dimension_numbers = #tpu.dot_dimension_numbers<[1], [0], [0], [1], [0, 0, 1, 1], [], []>} : vector<8x8xbf16>, vector<8x64xbf16>, vector<8x64xf32> -> vector<8x64xf32>
    %50 = tpu.concatenate %30, %49 in 1 : vector<8x64xf32>, vector<8x64xf32> -> vector<8x128xf32>
    %c0_16 = arith.constant 0 : index
    %c0_17 = arith.constant 0 : index
    %51 = vector.load %arg6[%c0_16, %c0_17] : memref<1x128xf32, #tpu.memory_space<vmem>>, vector<1x128xf32>
    %52 = arith.truncf %50 : vector<8x128xf32> to vector<8x128xbf16>
    %c0_18 = arith.constant 0 : index
    %c0_19 = arith.constant 0 : index
    %53 = vector.load %arg5[%c0_18, %c0_19] : memref<128x128xbf16, #tpu.memory_space<vmem>>, vector<128x128xbf16>
    %cst_20 = arith.constant dense<0.000000e+00> : vector<8x128xf32>
    %54 = tpu.matmul %52, %53, %cst_20 {dimension_numbers = #tpu.dot_dimension_numbers<[1], [0], [0], [1], [0, 0, 1, 1], [], []>} : vector<8x128xbf16>, vector<128x128xbf16>, vector<8x128xf32> -> vector<8x128xf32>
    %55 = vector.broadcast %51 : vector<1x128xf32> to vector<8x128xf32>
    %56 = arith.addf %54, %55 : vector<8x128xf32>
    %57 = arith.addf %0, %56 : vector<8x128xf32>
    %c0_21 = arith.constant 0 : index
    %c0_22 = arith.constant 0 : index
    %58 = vector.load %arg7[%c0_21, %c0_22] : memref<1x128xf32, #tpu.memory_space<vmem>>, vector<1x128xf32>
    %c0_23 = arith.constant 0 : index
    %c0_24 = arith.constant 0 : index
    %59 = vector.load %arg8[%c0_23, %c0_24] : memref<1x128xf32, #tpu.memory_space<vmem>>, vector<1x128xf32>
    %cst_25 = arith.constant dense<0.000000e+00> : vector<8xf32>
    %60 = vector.multi_reduction <add>, %57, %cst_25 [1] : vector<8x128xf32> to vector<8xf32>
    %61 = vector.shape_cast %60 : vector<8xf32> to vector<8x1xf32>
    %cst_26 = arith.constant 1.280000e+02 : f32
    %62 = vector.broadcast %cst_26 : f32 to vector<8x1xf32>
    %63 = arith.divf %61, %62 : vector<8x1xf32>
    %64 = vector.broadcast %63 : vector<8x1xf32> to vector<8x128xf32>
    %65 = arith.subf %57, %64 : vector<8x128xf32>
    %66 = arith.mulf %65, %65 : vector<8x128xf32>
    %cst_27 = arith.constant dense<0.000000e+00> : vector<8xf32>
    %67 = vector.multi_reduction <add>, %66, %cst_27 [1] : vector<8x128xf32> to vector<8xf32>
    %68 = vector.shape_cast %67 : vector<8xf32> to vector<8x1xf32>
    %cst_28 = arith.constant 1.280000e+02 : f32
    %69 = vector.broadcast %cst_28 : f32 to vector<8x1xf32>
    %70 = arith.divf %68, %69 : vector<8x1xf32>
    %cst_29 = arith.constant 9.99999996E-13 : f32
    %71 = vector.broadcast %cst_29 : f32 to vector<8x1xf32>
    %72 = arith.addf %70, %71 : vector<8x1xf32>
    %73 = math.rsqrt %72 : vector<8x1xf32>
    %74 = vector.broadcast %73 : vector<8x1xf32> to vector<8x128xf32>
    %75 = arith.mulf %65, %74 : vector<8x128xf32>
    %76 = vector.broadcast %58 : vector<1x128xf32> to vector<8x128xf32>
    %77 = arith.mulf %75, %76 : vector<8x128xf32>
    %78 = vector.broadcast %59 : vector<1x128xf32> to vector<8x128xf32>
    %79 = arith.addf %77, %78 : vector<8x128xf32>
    %c0_30 = arith.constant 0 : index
    %c0_31 = arith.constant 0 : index
    %80 = vector.load %arg10[%c0_30, %c0_31] : memref<1x128xf32, #tpu.memory_space<vmem>>, vector<1x128xf32>
    %81 = arith.truncf %79 : vector<8x128xf32> to vector<8x128xbf16>
    %c0_32 = arith.constant 0 : index
    %c0_33 = arith.constant 0 : index
    %82 = vector.load %arg9[%c0_32, %c0_33] : memref<128x128xbf16, #tpu.memory_space<vmem>>, vector<128x128xbf16>
    %cst_34 = arith.constant dense<0.000000e+00> : vector<8x128xf32>
    %83 = tpu.matmul %81, %82, %cst_34 {dimension_numbers = #tpu.dot_dimension_numbers<[1], [0], [0], [1], [0, 0, 1, 1], [], []>} : vector<8x128xbf16>, vector<128x128xbf16>, vector<8x128xf32> -> vector<8x128xf32>
    %84 = vector.broadcast %80 : vector<1x128xf32> to vector<8x128xf32>
    %85 = arith.addf %83, %84 : vector<8x128xf32>
    %c0_35 = arith.constant 0 : index
    %c0_36 = arith.constant 0 : index
    %86 = vector.load %arg12[%c0_35, %c0_36] : memref<1x256xf32, #tpu.memory_space<vmem>>, vector<1x256xf32>
    %87 = arith.truncf %2 : vector<4x128xf32> to vector<4x128xbf16>
    %c0_37 = arith.constant 0 : index
    %c0_38 = arith.constant 0 : index
    %88 = vector.load %arg11[%c0_37, %c0_38] : memref<128x256xbf16, #tpu.memory_space<vmem>>, vector<128x256xbf16>
    %cst_39 = arith.constant dense<0.000000e+00> : vector<4x256xf32>
    %89 = tpu.matmul %87, %88, %cst_39 {dimension_numbers = #tpu.dot_dimension_numbers<[1], [0], [0], [1], [0, 0, 1, 1], [], []>} : vector<4x128xbf16>, vector<128x256xbf16>, vector<4x256xf32> -> vector<4x256xf32>
    %90 = vector.broadcast %86 : vector<1x256xf32> to vector<4x256xf32>
    %91 = arith.addf %89, %90 : vector<4x256xf32>
    %92 = vector.extract_strided_slice %91 {offsets = [0, 0], sizes = [4, 128], strides = [1, 1]} : vector<4x256xf32> to vector<4x128xf32>
    %93 = vector.extract_strided_slice %91 {offsets = [0, 128], sizes = [4, 128], strides = [1, 1]} : vector<4x256xf32> to vector<4x128xf32>
    %94 = vector.extract_strided_slice %85 {offsets = [0, 0], sizes = [8, 64], strides = [1, 1]} : vector<8x128xf32> to vector<8x64xf32>
    %95 = arith.truncf %94 : vector<8x64xf32> to vector<8x64xbf16>
    %96 = vector.extract_strided_slice %92 {offsets = [0, 0], sizes = [4, 64], strides = [1, 1]} : vector<4x128xf32> to vector<4x64xf32>
    %97 = arith.truncf %96 : vector<4x64xf32> to vector<4x64xbf16>
    %98 = vector.extract_strided_slice %93 {offsets = [0, 0], sizes = [4, 64], strides = [1, 1]} : vector<4x128xf32> to vector<4x64xf32>
    %99 = arith.truncf %98 : vector<4x64xf32> to vector<4x64xbf16>
    %cst_40 = arith.constant dense<0.000000e+00> : vector<8x4xf32>
    %100 = tpu.matmul %95, %97, %cst_40 {dimension_numbers = #tpu.dot_dimension_numbers<[1], [1], [0], [0], [0, 0, 1, 0], [], []>} : vector<8x64xbf16>, vector<4x64xbf16>, vector<8x4xf32> -> vector<8x4xf32>
    %cst_41 = arith.constant dense<0xFF800000> : vector<8xf32>
    %101 = vector.multi_reduction <maximumf>, %100, %cst_41 [1] : vector<8x4xf32> to vector<8xf32>
    %102 = vector.shape_cast %101 : vector<8xf32> to vector<8x1xf32>
    %103 = vector.broadcast %102 : vector<8x1xf32> to vector<8x4xf32>
    %104 = arith.subf %100, %103 : vector<8x4xf32>
    %105 = math.exp %104 : vector<8x4xf32>
    %cst_42 = arith.constant dense<0.000000e+00> : vector<8xf32>
    %106 = vector.multi_reduction <add>, %105, %cst_42 [1] : vector<8x4xf32> to vector<8xf32>
    %107 = vector.shape_cast %106 : vector<8xf32> to vector<8x1xf32>
    %108 = tpu.reciprocal %107 {approx = true} : vector<8x1xf32> -> vector<8x1xf32>
    %109 = vector.broadcast %108 : vector<8x1xf32> to vector<8x4xf32>
    %110 = arith.mulf %105, %109 : vector<8x4xf32>
    %111 = arith.truncf %110 : vector<8x4xf32> to vector<8x4xbf16>
    %cst_43 = arith.constant dense<0.000000e+00> : vector<8x64xf32>
    %112 = tpu.matmul %111, %99, %cst_43 {dimension_numbers = #tpu.dot_dimension_numbers<[1], [0], [0], [1], [0, 0, 1, 1], [], []>} : vector<8x4xbf16>, vector<4x64xbf16>, vector<8x64xf32> -> vector<8x64xf32>
    %113 = vector.extract_strided_slice %85 {offsets = [0, 64], sizes = [8, 64], strides = [1, 1]} : vector<8x128xf32> to vector<8x64xf32>
    %114 = arith.truncf %113 : vector<8x64xf32> to vector<8x64xbf16>
    %115 = vector.extract_strided_slice %92 {offsets = [0, 64], sizes = [4, 64], strides = [1, 1]} : vector<4x128xf32> to vector<4x64xf32>
    %116 = arith.truncf %115 : vector<4x64xf32> to vector<4x64xbf16>
    %117 = vector.extract_strided_slice %93 {offsets = [0, 64], sizes = [4, 64], strides = [1, 1]} : vector<4x128xf32> to vector<4x64xf32>
    %118 = arith.truncf %117 : vector<4x64xf32> to vector<4x64xbf16>
    %cst_44 = arith.constant dense<0.000000e+00> : vector<8x4xf32>
    %119 = tpu.matmul %114, %116, %cst_44 {dimension_numbers = #tpu.dot_dimension_numbers<[1], [1], [0], [0], [0, 0, 1, 0], [], []>} : vector<8x64xbf16>, vector<4x64xbf16>, vector<8x4xf32> -> vector<8x4xf32>
    %cst_45 = arith.constant dense<0xFF800000> : vector<8xf32>
    %120 = vector.multi_reduction <maximumf>, %119, %cst_45 [1] : vector<8x4xf32> to vector<8xf32>
    %121 = vector.shape_cast %120 : vector<8xf32> to vector<8x1xf32>
    %122 = vector.broadcast %121 : vector<8x1xf32> to vector<8x4xf32>
    %123 = arith.subf %119, %122 : vector<8x4xf32>
    %124 = math.exp %123 : vector<8x4xf32>
    %cst_46 = arith.constant dense<0.000000e+00> : vector<8xf32>
    %125 = vector.multi_reduction <add>, %124, %cst_46 [1] : vector<8x4xf32> to vector<8xf32>
    %126 = vector.shape_cast %125 : vector<8xf32> to vector<8x1xf32>
    %127 = tpu.reciprocal %126 {approx = true} : vector<8x1xf32> -> vector<8x1xf32>
    %128 = vector.broadcast %127 : vector<8x1xf32> to vector<8x4xf32>
    %129 = arith.mulf %124, %128 : vector<8x4xf32>
    %130 = arith.truncf %129 : vector<8x4xf32> to vector<8x4xbf16>
    %cst_47 = arith.constant dense<0.000000e+00> : vector<8x64xf32>
    %131 = tpu.matmul %130, %118, %cst_47 {dimension_numbers = #tpu.dot_dimension_numbers<[1], [0], [0], [1], [0, 0, 1, 1], [], []>} : vector<8x4xbf16>, vector<4x64xbf16>, vector<8x64xf32> -> vector<8x64xf32>
    %132 = tpu.concatenate %112, %131 in 1 : vector<8x64xf32>, vector<8x64xf32> -> vector<8x128xf32>
    %c0_48 = arith.constant 0 : index
    %c0_49 = arith.constant 0 : index
    %133 = vector.load %arg14[%c0_48, %c0_49] : memref<1x128xf32, #tpu.memory_space<vmem>>, vector<1x128xf32>
    %134 = arith.truncf %132 : vector<8x128xf32> to vector<8x128xbf16>
    %c0_50 = arith.constant 0 : index
    %c0_51 = arith.constant 0 : index
    %135 = vector.load %arg13[%c0_50, %c0_51] : memref<128x128xbf16, #tpu.memory_space<vmem>>, vector<128x128xbf16>
    %cst_52 = arith.constant dense<0.000000e+00> : vector<8x128xf32>
    %136 = tpu.matmul %134, %135, %cst_52 {dimension_numbers = #tpu.dot_dimension_numbers<[1], [0], [0], [1], [0, 0, 1, 1], [], []>} : vector<8x128xbf16>, vector<128x128xbf16>, vector<8x128xf32> -> vector<8x128xf32>
    %137 = vector.broadcast %133 : vector<1x128xf32> to vector<8x128xf32>
    %138 = arith.addf %136, %137 : vector<8x128xf32>
    %139 = arith.addf %79, %138 : vector<8x128xf32>
    %c0_53 = arith.constant 0 : index
    %c0_54 = arith.constant 0 : index
    %140 = vector.load %arg15[%c0_53, %c0_54] : memref<1x128xf32, #tpu.memory_space<vmem>>, vector<1x128xf32>
    %c0_55 = arith.constant 0 : index
    %c0_56 = arith.constant 0 : index
    %141 = vector.load %arg16[%c0_55, %c0_56] : memref<1x128xf32, #tpu.memory_space<vmem>>, vector<1x128xf32>
    %cst_57 = arith.constant dense<0.000000e+00> : vector<8xf32>
    %142 = vector.multi_reduction <add>, %139, %cst_57 [1] : vector<8x128xf32> to vector<8xf32>
    %143 = vector.shape_cast %142 : vector<8xf32> to vector<8x1xf32>
    %cst_58 = arith.constant 1.280000e+02 : f32
    %144 = vector.broadcast %cst_58 : f32 to vector<8x1xf32>
    %145 = arith.divf %143, %144 : vector<8x1xf32>
    %146 = vector.broadcast %145 : vector<8x1xf32> to vector<8x128xf32>
    %147 = arith.subf %139, %146 : vector<8x128xf32>
    %148 = arith.mulf %147, %147 : vector<8x128xf32>
    %cst_59 = arith.constant dense<0.000000e+00> : vector<8xf32>
    %149 = vector.multi_reduction <add>, %148, %cst_59 [1] : vector<8x128xf32> to vector<8xf32>
    %150 = vector.shape_cast %149 : vector<8xf32> to vector<8x1xf32>
    %cst_60 = arith.constant 1.280000e+02 : f32
    %151 = vector.broadcast %cst_60 : f32 to vector<8x1xf32>
    %152 = arith.divf %150, %151 : vector<8x1xf32>
    %cst_61 = arith.constant 9.99999996E-13 : f32
    %153 = vector.broadcast %cst_61 : f32 to vector<8x1xf32>
    %154 = arith.addf %152, %153 : vector<8x1xf32>
    %155 = math.rsqrt %154 : vector<8x1xf32>
    %156 = vector.broadcast %155 : vector<8x1xf32> to vector<8x128xf32>
    %157 = arith.mulf %147, %156 : vector<8x128xf32>
    %158 = vector.broadcast %140 : vector<1x128xf32> to vector<8x128xf32>
    %159 = arith.mulf %157, %158 : vector<8x128xf32>
    %160 = vector.broadcast %141 : vector<1x128xf32> to vector<8x128xf32>
    %161 = arith.addf %159, %160 : vector<8x128xf32>
    %c0_62 = arith.constant 0 : index
    %c0_63 = arith.constant 0 : index
    %162 = vector.load %arg18[%c0_62, %c0_63] : memref<1x512xf32, #tpu.memory_space<vmem>>, vector<1x512xf32>
    %163 = arith.truncf %161 : vector<8x128xf32> to vector<8x128xbf16>
    %c0_64 = arith.constant 0 : index
    %c0_65 = arith.constant 0 : index
    %164 = vector.load %arg17[%c0_64, %c0_65] : memref<128x512xbf16, #tpu.memory_space<vmem>>, vector<128x512xbf16>
    %cst_66 = arith.constant dense<0.000000e+00> : vector<8x512xf32>
    %165 = tpu.matmul %163, %164, %cst_66 {dimension_numbers = #tpu.dot_dimension_numbers<[1], [0], [0], [1], [0, 0, 1, 1], [], []>} : vector<8x128xbf16>, vector<128x512xbf16>, vector<8x512xf32> -> vector<8x512xf32>
    %166 = vector.broadcast %162 : vector<1x512xf32> to vector<8x512xf32>
    %167 = arith.addf %165, %166 : vector<8x512xf32>
    %168 = arith.mulf %167, %167 : vector<8x512xf32>
    %169 = arith.mulf %167, %168 : vector<8x512xf32>
    %cst_67 = arith.constant 4.471500e-02 : f32
    %170 = vector.broadcast %cst_67 : f32 to vector<8x512xf32>
    %171 = arith.mulf %170, %169 : vector<8x512xf32>
    %172 = arith.addf %167, %171 : vector<8x512xf32>
    %cst_68 = arith.constant 0.797884583 : f32
    %173 = vector.broadcast %cst_68 : f32 to vector<8x512xf32>
    %174 = arith.mulf %173, %172 : vector<8x512xf32>
    %175 = math.tanh %174 : vector<8x512xf32>
    %cst_69 = arith.constant 1.000000e+00 : f32
    %176 = vector.broadcast %cst_69 : f32 to vector<8x512xf32>
    %177 = arith.addf %176, %175 : vector<8x512xf32>
    %cst_70 = arith.constant 5.000000e-01 : f32
    %178 = vector.broadcast %cst_70 : f32 to vector<8x512xf32>
    %179 = arith.mulf %178, %177 : vector<8x512xf32>
    %180 = arith.mulf %167, %179 : vector<8x512xf32>
    %c0_71 = arith.constant 0 : index
    %c0_72 = arith.constant 0 : index
    %181 = vector.load %arg20[%c0_71, %c0_72] : memref<1x128xf32, #tpu.memory_space<vmem>>, vector<1x128xf32>
    %182 = arith.truncf %180 : vector<8x512xf32> to vector<8x512xbf16>
    %c0_73 = arith.constant 0 : index
    %c0_74 = arith.constant 0 : index
    %183 = vector.load %arg19[%c0_73, %c0_74] : memref<512x128xbf16, #tpu.memory_space<vmem>>, vector<512x128xbf16>
    %cst_75 = arith.constant dense<0.000000e+00> : vector<8x128xf32>
    %184 = tpu.matmul %182, %183, %cst_75 {dimension_numbers = #tpu.dot_dimension_numbers<[1], [0], [0], [1], [0, 0, 1, 1], [], []>} : vector<8x512xbf16>, vector<512x128xbf16>, vector<8x128xf32> -> vector<8x128xf32>
    %185 = vector.broadcast %181 : vector<1x128xf32> to vector<8x128xf32>
    %186 = arith.addf %184, %185 : vector<8x128xf32>
    %187 = arith.addf %161, %186 : vector<8x128xf32>
    %c0_76 = arith.constant 0 : index
    %c0_77 = arith.constant 0 : index
    %188 = vector.load %arg21[%c0_76, %c0_77] : memref<1x128xf32, #tpu.memory_space<vmem>>, vector<1x128xf32>
    %c0_78 = arith.constant 0 : index
    %c0_79 = arith.constant 0 : index
    %189 = vector.load %arg22[%c0_78, %c0_79] : memref<1x128xf32, #tpu.memory_space<vmem>>, vector<1x128xf32>
    %cst_80 = arith.constant dense<0.000000e+00> : vector<8xf32>
    %190 = vector.multi_reduction <add>, %187, %cst_80 [1] : vector<8x128xf32> to vector<8xf32>
    %191 = vector.shape_cast %190 : vector<8xf32> to vector<8x1xf32>
    %cst_81 = arith.constant 1.280000e+02 : f32
    %192 = vector.broadcast %cst_81 : f32 to vector<8x1xf32>
    %193 = arith.divf %191, %192 : vector<8x1xf32>
    %194 = vector.broadcast %193 : vector<8x1xf32> to vector<8x128xf32>
    %195 = arith.subf %187, %194 : vector<8x128xf32>
    %196 = arith.mulf %195, %195 : vector<8x128xf32>
    %cst_82 = arith.constant dense<0.000000e+00> : vector<8xf32>
    %197 = vector.multi_reduction <add>, %196, %cst_82 [1] : vector<8x128xf32> to vector<8xf32>
    %198 = vector.shape_cast %197 : vector<8xf32> to vector<8x1xf32>
    %cst_83 = arith.constant 1.280000e+02 : f32
    %199 = vector.broadcast %cst_83 : f32 to vector<8x1xf32>
    %200 = arith.divf %198, %199 : vector<8x1xf32>
    %cst_84 = arith.constant 9.99999996E-13 : f32
    %201 = vector.broadcast %cst_84 : f32 to vector<8x1xf32>
    %202 = arith.addf %200, %201 : vector<8x1xf32>
    %203 = math.rsqrt %202 : vector<8x1xf32>
    %204 = vector.broadcast %203 : vector<8x1xf32> to vector<8x128xf32>
    %205 = arith.mulf %195, %204 : vector<8x128xf32>
    %206 = vector.broadcast %188 : vector<1x128xf32> to vector<8x128xf32>
    %207 = arith.mulf %205, %206 : vector<8x128xf32>
    %208 = vector.broadcast %189 : vector<1x128xf32> to vector<8x128xf32>
    %209 = arith.addf %207, %208 : vector<8x128xf32>
    %c0_85 = arith.constant 0 : index
    %c0_86 = arith.constant 0 : index
    %210 = vector.load %arg24[%c0_85, %c0_86] : memref<1x128xf32, #tpu.memory_space<vmem>>, vector<1x128xf32>
    %211 = arith.truncf %209 : vector<8x128xf32> to vector<8x128xbf16>
    %c0_87 = arith.constant 0 : index
    %c0_88 = arith.constant 0 : index
    %212 = vector.load %arg23[%c0_87, %c0_88] : memref<128x128xbf16, #tpu.memory_space<vmem>>, vector<128x128xbf16>
    %cst_89 = arith.constant dense<0.000000e+00> : vector<8x128xf32>
    %213 = tpu.matmul %211, %212, %cst_89 {dimension_numbers = #tpu.dot_dimension_numbers<[1], [0], [0], [1], [0, 0, 1, 1], [], []>} : vector<8x128xbf16>, vector<128x128xbf16>, vector<8x128xf32> -> vector<8x128xf32>
    %214 = vector.broadcast %210 : vector<1x128xf32> to vector<8x128xf32>
    %215 = arith.addf %213, %214 : vector<8x128xf32>
    %216 = arith.mulf %215, %215 : vector<8x128xf32>
    %cst_90 = arith.constant dense<0.000000e+00> : vector<8xf32>
    %217 = vector.multi_reduction <add>, %216, %cst_90 [1] : vector<8x128xf32> to vector<8xf32>
    %218 = vector.shape_cast %217 : vector<8xf32> to vector<8x1xf32>
    %219 = math.sqrt %218 : vector<8x1xf32>
    %cst_91 = arith.constant 9.99999996E-13 : f32
    %220 = vector.broadcast %cst_91 : f32 to vector<8x1xf32>
    %221 = arith.maximumf %219, %220 : vector<8x1xf32>
    %222 = vector.broadcast %221 : vector<8x1xf32> to vector<8x128xf32>
    %223 = arith.divf %215, %222 : vector<8x128xf32>
    %c0_92 = arith.constant 0 : index
    %c0_93 = arith.constant 0 : index
    %c0_94 = arith.constant 0 : index
    %224 = vector.load %arg25[%c0_92, %c0_93, %c0_94] : memref<1x8x128xf32, #tpu.memory_space<vmem>>, vector<1x8x128xf32>
    %225 = vector.shape_cast %224 : vector<1x8x128xf32> to vector<8x128xf32>
    %226 = vector.shape_cast %223 : vector<8x128xf32> to vector<1x8x128xf32>
    tpu.vector_store %arg25[%c0_92, %c0_93, %c0_94], %226 {strides = array<i32>} : memref<1x8x128xf32, #tpu.memory_space<vmem>>, vector<1x8x128xf32>,
    return
  }
  func.func @transform_0(%arg0: i32) -> (i32, i32) {
    %c0_i32 = arith.constant 0 : i32
    %c0_i32_0 = arith.constant 0 : i32
    %c0_i32_1 = arith.constant 0 : i32
    return %c0_i32, %c0_i32_0 : i32, i32
  }
  func.func @transform_1(%arg0: i32) -> (i32, i32, i32) {
    %c0_i32 = arith.constant 0 : i32
    %c0_i32_0 = arith.constant 0 : i32
    %c0_i32_1 = arith.constant 0 : i32
    return %arg0, %c0_i32, %c0_i32_0 : i32, i32, i32
  }
  func.func @transform_2(%arg0: i32) -> (i32, i32) {
    %c0_i32 = arith.constant 0 : i32
    %c0_i32_0 = arith.constant 0 : i32
    %c0_i32_1 = arith.constant 0 : i32
    return %c0_i32, %c0_i32_0 : i32, i32
  }
  func.func @transform_3(%arg0: i32) -> (i32, i32) {
    %c0_i32 = arith.constant 0 : i32
    %c0_i32_0 = arith.constant 0 : i32
    %c0_i32_1 = arith.constant 0 : i32
    return %c0_i32, %c0_i32_0 : i32, i32
  }
  func.func @transform_4(%arg0: i32) -> (i32, i32) {
    %c0_i32 = arith.constant 0 : i32
    %c0_i32_0 = arith.constant 0 : i32
    %c0_i32_1 = arith.constant 0 : i32
    return %c0_i32, %c0_i32_0 : i32, i32
  }
  func.func @transform_5(%arg0: i32) -> (i32, i32) {
    %c0_i32 = arith.constant 0 : i32
    %c0_i32_0 = arith.constant 0 : i32
    %c0_i32_1 = arith.constant 0 : i32
    return %c0_i32, %c0_i32_0 : i32, i32
  }
  func.func @transform_6(%arg0: i32) -> (i32, i32) {
    %c0_i32 = arith.constant 0 : i32
    %c0_i32_0 = arith.constant 0 : i32
    %c0_i32_1 = arith.constant 0 : i32
    return %c0_i32, %c0_i32_0 : i32, i32
  }
  func.func @transform_7(%arg0: i32) -> (i32, i32) {
    %c0_i32 = arith.constant 0 : i32
    %c0_i32_0 = arith.constant 0 : i32
    %c0_i32_1 = arith.constant 0 : i32
    return %c0_i32, %c0_i32_0 : i32, i32
  }
  func.func @transform_8(%arg0: i32) -> (i32, i32) {
    %c0_i32 = arith.constant 0 : i32
    %c0_i32_0 = arith.constant 0 : i32
    %c0_i32_1 = arith.constant 0 : i32
    return %c0_i32, %c0_i32_0 : i32, i32
  }
  func.func @transform_9(%arg0: i32) -> (i32, i32) {
    %c0_i32 = arith.constant 0 : i32
    %c0_i32_0 = arith.constant 0 : i32
    %c0_i32_1 = arith.constant 0 : i32
    return %c0_i32, %c0_i32_0 : i32, i32
  }
  func.func @transform_10(%arg0: i32) -> (i32, i32) {
    %c0_i32 = arith.constant 0 : i32
    %c0_i32_0 = arith.constant 0 : i32
    %c0_i32_1 = arith.constant 0 : i32
    return %c0_i32, %c0_i32_0 : i32, i32
  }
  func.func @transform_11(%arg0: i32) -> (i32, i32) {
    %c0_i32 = arith.constant 0 : i32
    %c0_i32_0 = arith.constant 0 : i32
    %c0_i32_1 = arith.constant 0 : i32
    return %c0_i32, %c0_i32_0 : i32, i32
  }
  func.func @transform_12(%arg0: i32) -> (i32, i32) {
    %c0_i32 = arith.constant 0 : i32
    %c0_i32_0 = arith.constant 0 : i32
    %c0_i32_1 = arith.constant 0 : i32
    return %c0_i32, %c0_i32_0 : i32, i32
  }
  func.func @transform_13(%arg0: i32) -> (i32, i32) {
    %c0_i32 = arith.constant 0 : i32
    %c0_i32_0 = arith.constant 0 : i32
    %c0_i32_1 = arith.constant 0 : i32
    return %c0_i32, %c0_i32_0 : i32, i32
  }
  func.func @transform_14(%arg0: i32) -> (i32, i32) {
    %c0_i32 = arith.constant 0 : i32
    %c0_i32_0 = arith.constant 0 : i32
    %c0_i32_1 = arith.constant 0 : i32
    return %c0_i32, %c0_i32_0 : i32, i32
  }
  func.func @transform_15(%arg0: i32) -> (i32, i32) {
    %c0_i32 = arith.constant 0 : i32
    %c0_i32_0 = arith.constant 0 : i32
    %c0_i32_1 = arith.constant 0 : i32
    return %c0_i32, %c0_i32_0 : i32, i32
  }
  func.func @transform_16(%arg0: i32) -> (i32, i32) {
    %c0_i32 = arith.constant 0 : i32
    %c0_i32_0 = arith.constant 0 : i32
    %c0_i32_1 = arith.constant 0 : i32
    return %c0_i32, %c0_i32_0 : i32, i32
  }
  func.func @transform_17(%arg0: i32) -> (i32, i32) {
    %c0_i32 = arith.constant 0 : i32
    %c0_i32_0 = arith.constant 0 : i32
    %c0_i32_1 = arith.constant 0 : i32
    return %c0_i32, %c0_i32_0 : i32, i32
  }
  func.func @transform_18(%arg0: i32) -> (i32, i32) {
    %c0_i32 = arith.constant 0 : i32
    %c0_i32_0 = arith.constant 0 : i32
    %c0_i32_1 = arith.constant 0 : i32
    return %c0_i32, %c0_i32_0 : i32, i32
  }
  func.func @transform_19(%arg0: i32) -> (i32, i32) {
    %c0_i32 = arith.constant 0 : i32
    %c0_i32_0 = arith.constant 0 : i32
    %c0_i32_1 = arith.constant 0 : i32
    return %c0_i32, %c0_i32_0 : i32, i32
  }
  func.func @transform_20(%arg0: i32) -> (i32, i32) {
    %c0_i32 = arith.constant 0 : i32
    %c0_i32_0 = arith.constant 0 : i32
    %c0_i32_1 = arith.constant 0 : i32
    return %c0_i32, %c0_i32_0 : i32, i32
  }
  func.func @transform_21(%arg0: i32) -> (i32, i32) {
    %c0_i32 = arith.constant 0 : i32
    %c0_i32_0 = arith.constant 0 : i32
    %c0_i32_1 = arith.constant 0 : i32
    return %c0_i32, %c0_i32_0 : i32, i32
  }
  func.func @transform_22(%arg0: i32) -> (i32, i32) {
    %c0_i32 = arith.constant 0 : i32
    %c0_i32_0 = arith.constant 0 : i32
    %c0_i32_1 = arith.constant 0 : i32
    return %c0_i32, %c0_i32_0 : i32, i32
  }
  func.func @transform_23(%arg0: i32) -> (i32, i32) {
    %c0_i32 = arith.constant 0 : i32
    %c0_i32_0 = arith.constant 0 : i32
    %c0_i32_1 = arith.constant 0 : i32
    return %c0_i32, %c0_i32_0 : i32, i32
  }
  func.func @transform_24(%arg0: i32) -> (i32, i32, i32) {
    %c0_i32 = arith.constant 0 : i32
    %c0_i32_0 = arith.constant 0 : i32
    %c0_i32_1 = arith.constant 0 : i32
    return %arg0, %c0_i32, %c0_i32_0 : i32, i32, i32
  }
}

module attributes {stable_mosaic.version = 11 : i64} {
  func.func @_mse_kernel(%arg0: memref<16x128xf32, #tpu.memory_space<vmem>>, %arg1: memref<16x128xf32, #tpu.memory_space<vmem>>, %arg2: memref<1x1xf32, #tpu.memory_space<vmem>>) attributes {dimension_semantics = [], scalar_prefetch = 0 : i64, scratch_operands = 0 : i64, tpu.core_type = #tpu.core_type<tc>} {
    %c0 = arith.constant 0 : index
    %c0_0 = arith.constant 0 : index
    %0 = vector.load %arg0[%c0, %c0_0] : memref<16x128xf32, #tpu.memory_space<vmem>>, vector<16x128xf32>
    %c0_1 = arith.constant 0 : index
    %c0_2 = arith.constant 0 : index
    %1 = vector.load %arg1[%c0_1, %c0_2] : memref<16x128xf32, #tpu.memory_space<vmem>>, vector<16x128xf32>
    %2 = arith.subf %0, %1 : vector<16x128xf32>
    %3 = arith.mulf %2, %2 : vector<16x128xf32>
    %cst = arith.constant dense<0.000000e+00> : vector<16xf32>
    %4 = vector.multi_reduction <add>, %3, %cst [1] : vector<16x128xf32> to vector<16xf32>
    %5 = vector.shape_cast %4 : vector<16xf32> to vector<16x1xf32>
    %cst_3 = arith.constant dense<0.000000e+00> : vector<1xf32>
    %6 = vector.multi_reduction <add>, %5, %cst_3 [0] : vector<16x1xf32> to vector<1xf32>
    %7 = vector.shape_cast %6 : vector<1xf32> to vector<1x1xf32>
    %cst_4 = arith.constant 2.048000e+03 : f32
    %8 = vector.broadcast %cst_4 : f32 to vector<1x1xf32>
    %9 = arith.divf %7, %8 : vector<1x1xf32>
    %c0_5 = arith.constant 0 : index
    %c0_6 = arith.constant 0 : index
    %10 = vector.load %arg2[%c0_5, %c0_6] : memref<1x1xf32, #tpu.memory_space<vmem>>, vector<1x1xf32>
    tpu.vector_store %arg2[%c0_5, %c0_6], %9 {strides = array<i32>} : memref<1x1xf32, #tpu.memory_space<vmem>>, vector<1x1xf32>,
    return
  }
}

</mosaic_0001>

<llo_original>
// kernel: _lambda_.5
$region0: #{_lambda_.5}
  #allocation0 [shape = 'u32[]', space=smem, size = 0x4, offset = 0x4, fixed_abs, tag = 'smem constant byte address 0x4 - core index']
  #allocation1 [shape = 'u32[144,128]{1,0:T(1,128)}', space=vmem, size = 0x12000, scoped, tag = 'internal scratch']
  %s0 = inlined_call_operand.vmem [shape: f32[16,128], index: 0, kind: input, shape index: {}]
  %s1 = inlined_call_operand.vmem [shape: f32[16,128], index: 1, kind: input, shape index: {}]
  %s2 = inlined_call_operand.hbm [shape: f32[1,1], index: 2, kind: output, shape index: {}]
  %s3 = sld [smem:[#allocation0]]
  $region18: #{_lambda_.5} parent=0
    _
  %s5 = ssub.s32 1, %s3
  %s6 = scalar_select 0, %s5, %s3
  $region1: #{_lambda_.5} parent=0
    #allocation2 [shape = 'u8[512]{0}', space=vmem, size = 0x400, scoped, tag = 'output window, operand 0, single buffered']
    #allocation3 [shape = 's32[1]{0}', space=sflag, size = 0x4, scoped, tag = 'scoped memory for _lambda_.5']
    %7 = vsyncpa [#allocation3], 0
    // Predicated region
    $region2: #{_lambda_.5} parent=1 // pred_check
      _
    $region3: #{_lambda_.5} parent=1 // pred_check_branch
      %9 = sbr.rel (0) target = $region5
    $region4: #{_lambda_.5} parent=1 // pred_region
      _
    $region5: #{_lambda_.5} parent=1 // pred_fallthru
      _
    // Predicated region
    $region6: #{_lambda_.5} parent=1 // pred_check
      _
    $region7: #{_lambda_.5} parent=1 // pred_check_branch
      %11 = sbr.rel (0) target = $region9
    $region8: #{_lambda_.5} parent=1 // pred_region
      _
    $region9: #{_lambda_.5} parent=1 // pred_fallthru
      _
    %v12 = vld [vmem:[%s0] sm:$0xff]
    %v13 = vld [vmem:[%s0 + $0x8] sm:$0xff]
    %v14 = vld [vmem:[%s1] sm:$0xff]
    %v15 = vld [vmem:[%s1 + $0x8] sm:$0xff]
    %v16 = vsub.f32 %v12, %v14
    %v17 = vsub.f32 %v13, %v15
    %v18 = vmul.f32 %v16, %v16
    %v19 = vmul.f32 %v17, %v17
    %20 = vadd.xlane.f32.xlu0 %v18
    %v21 = vpop.xlane.xlu0 %20
    %22 = vadd.xlane.f32.xlu0 %v19
    %v23 = vpop.xlane.xlu0 %22
    %v24 = vadd.f32 %v21, %v23
    %v25 = vrot.slane %v24, 4
    %v26 = vadd.f32 %v24, %v25
    %v27 = vrot.slane %v26, 2
    %v28 = vadd.f32 %v26, %v27
    %v29 = vrot.slane %v28, 1
    %v30 = vadd.f32 %v28, %v29
    %v31 = vrcp.pop 2048.0
    %v32 = vmul.f32 %v30, %v31
    %vm33 = vcmask 0
    %34 = vst.msk [vmem:[#allocation2] sm:$0x1] %vm33, %v32
    // Predicated region
    $region10: #{_lambda_.5} parent=1 // pred_check
      _
    $region11: #{_lambda_.5} parent=1 // pred_check_branch
      %36 = sbr.rel (0) target = $region13
    $region12: #{_lambda_.5} parent=1 // pred_region
      %s38 = ssub.s32 16, 16
      %39 = vsyncadd [#allocation3], %s38
      %s41 = sshll.u32 [#allocation2], 4
      %s42 = int_to_ptr.vmem [resolvable:$true] %s41
      %44 = dma.vmem_to_hbm [thread:$0]  %s42, 16, %s2, [#allocation3]
    $region13: #{_lambda_.5} parent=1 // pred_fallthru
      _
    // Predicated region
    $region14: #{_lambda_.5} parent=1 // pred_check
      _
    $region15: #{_lambda_.5} parent=1 // pred_check_branch
      %46 = sbr.rel (0) target = $region17
    $region16: #{_lambda_.5} parent=1 // pred_region
      %47 = dma.done [#allocation3], 16
    $region17: #{_lambda_.5} parent=1 // pred_fallthru
      _
    %48 = vsyncpa [#allocation3], 1

// kernel: _lambda_.3
$region0: #{_lambda_.3}
  #allocation0 [shape = 'u32[]', space=smem, size = 0x4, offset = 0x4, fixed_abs, tag = 'smem constant byte address 0x4 - core index']
  #allocation1 [shape = 'u32[144,128]{1,0:T(1,128)}', space=vmem, size = 0x12000, scoped, tag = 'internal scratch']
  %s0 = inlined_call_operand.vmem [shape: f32[4,4,192], index: 0, kind: input, shape index: {}]
  %s1 = inlined_call_operand.vmem [shape: f32[1,192], index: 1, kind: input, shape index: {}]
  %s2 = inlined_call_operand.vmem [shape: f32[1,192], index: 2, kind: input, shape index: {}]
  %s3 = inlined_call_operand.vmem [shape: bf16[192,128], index: 3, kind: input, shape index: {}]
  %s4 = inlined_call_operand.vmem [shape: f32[1,128], index: 4, kind: input, shape index: {}, may-alias: {4,7,11,13,17,19}]
  %s5 = inlined_call_operand.vmem [shape: f32[4,128], index: 5, kind: input, shape index: {}]
  %s6 = inlined_call_operand.vmem [shape: f32[1,128], index: 6, kind: input, shape index: {}, may-alias: {6,12,18}]
  %s7 = inlined_call_operand.vmem [shape: f32[1,128], index: 7, kind: input, shape index: {}, may-alias: {4,7,11,13,17,19}]
  %s8 = inlined_call_operand.vmem [shape: bf16[128,384], index: 8, kind: input, shape index: {}]
  %s9 = inlined_call_operand.vmem [shape: f32[1,384], index: 9, kind: input, shape index: {}]
  %s10 = inlined_call_operand.vmem [shape: bf16[128,128], index: 10, kind: input, shape index: {}]
  %s11 = inlined_call_operand.vmem [shape: f32[1,128], index: 11, kind: input, shape index: {}, may-alias: {4,7,11,13,17,19}]
  %s12 = inlined_call_operand.vmem [shape: f32[1,128], index: 12, kind: input, shape index: {}, may-alias: {6,12,18}]
  %s13 = inlined_call_operand.vmem [shape: f32[1,128], index: 13, kind: input, shape index: {}, may-alias: {4,7,11,13,17,19}]
  %s14 = inlined_call_operand.vmem [shape: bf16[128,512], index: 14, kind: input, shape index: {}]
  %s15 = inlined_call_operand.vmem [shape: f32[1,512], index: 15, kind: input, shape index: {}]
  %s16 = inlined_call_operand.vmem [shape: bf16[512,128], index: 16, kind: input, shape index: {}]
  %s17 = inlined_call_operand.vmem [shape: f32[1,128], index: 17, kind: input, shape index: {}, may-alias: {4,7,11,13,17,19}]
  %s18 = inlined_call_operand.vmem [shape: f32[1,128], index: 18, kind: input, shape index: {}, may-alias: {6,12,18}]
  %s19 = inlined_call_operand.vmem [shape: f32[1,128], index: 19, kind: input, shape index: {}, may-alias: {4,7,11,13,17,19}]
  %s20 = inlined_call_operand.vmem [shape: f32[4,4,128], index: 20, kind: output, shape index: {}]
  %s21 = sld [smem:[#allocation0]]
  $region113: #{_lambda_.3} parent=0
    _
  %s23 = ssub.s32 1, %s21
  %s24 = scalar_select 0, %s23, %s21
  loop: start=0, step=1, limit=6
  $region2: #{_lambda_.3} parent=0 // loop_pre_header
    _
  $region3: #{_lambda_.3} parent=0 // loop_header
    %s26 = sphi 0, %s30
    %p27 = scmp.ge.s32.totalorder %s26, 6
    %s36 = sphi 0, %s38
    %s39 = sphi 0, %s36
    %s40 = sphi 0, %s39
    %s56 = sphi 0, %s40
    %s60 = sphi 0, %s60
    %s62 = sphi 0, %s60
    %s63 = sphi 0, %s62
    %s77 = sphi 0, %s63
    %s81 = sphi 0, %s81
    %s83 = sphi 0, %s81
    %s84 = sphi 0, %s83
    %s98 = sphi 0, %s84
    %s102 = sphi 0, %s102
    %s104 = sphi 0, %s102
    %s105 = sphi 0, %s104
    %s119 = sphi 0, %s105
    %s123 = sphi 0, %s123
    %s125 = sphi 0, %s123
    %s126 = sphi 0, %s125
    %s140 = sphi 0, %s126
    %s144 = sphi 0, %s144
    %s146 = sphi 0, %s144
    %s147 = sphi 0, %s146
    %s161 = sphi 0, %s147
    %s165 = sphi 0, %s165
    %s167 = sphi 0, %s165
    %s168 = sphi 0, %s167
    %s182 = sphi 0, %s168
    %s186 = sphi 0, %s186
    %s188 = sphi 0, %s186
    %s189 = sphi 0, %s188
    %s203 = sphi 0, %s189
    %s207 = sphi 0, %s207
    %s209 = sphi 0, %s207
    %s210 = sphi 0, %s209
    %s224 = sphi 0, %s210
    %s228 = sphi 0, %s228
    %s230 = sphi 0, %s228
    %s231 = sphi 0, %s230
    %s245 = sphi 0, %s231
    %s249 = sphi 0, %s249
    %s251 = sphi 0, %s249
    %s252 = sphi 0, %s251
    %s266 = sphi 0, %s252
    %s270 = sphi 0, %s270
    %s272 = sphi 0, %s270
    %s273 = sphi 0, %s272
    %s287 = sphi 0, %s273
    %s291 = sphi 0, %s291
    %s293 = sphi 0, %s291
    %s294 = sphi 0, %s293
    %s308 = sphi 0, %s294
    %s312 = sphi 0, %s312
    %s314 = sphi 0, %s312
    %s315 = sphi 0, %s314
    %s329 = sphi 0, %s315
    %s333 = sphi 0, %s333
    %s335 = sphi 0, %s333
    %s336 = sphi 0, %s335
    %s350 = sphi 0, %s336
    %s354 = sphi 0, %s354
    %s356 = sphi 0, %s354
    %s357 = sphi 0, %s356
    %s371 = sphi 0, %s357
    %s375 = sphi 0, %s375
    %s377 = sphi 0, %s375
    %s378 = sphi 0, %s377
    %s392 = sphi 0, %s378
    %s396 = sphi 0, %s396
    %s398 = sphi 0, %s396
    %s399 = sphi 0, %s398
    %s413 = sphi 0, %s399
    %s417 = sphi 0, %s417
    %s419 = sphi 0, %s417
    %s420 = sphi 0, %s419
    %s434 = sphi 0, %s420
    %s438 = sphi 0, %s438
    %s440 = sphi 0, %s438
    %s441 = sphi 0, %s440
    %s455 = sphi 0, %s441
    %s461 = sphi 0, %s463
    %s464 = sphi 0, %s461
    %s465 = sphi 0, %s464
    %s481 = sphi 0, %s465
  $region4: #{_lambda_.3} parent=0 // loop_header_branch
    %29 = sbr.rel (%p27) target = $region8
  $region5: #{_lambda_.3} parent=0 // loop_body
    %s31 = ssub.s32 %s26, 1
    %s32 = ssub.s32 %s26, 2
    %s33 = sadd.s32 %s26, 1
    %s34 = ssub.s32 %s26, %s33
    %p35 = scmp.eq.s32.totalorder %s34, 0
    %s37 = sadd.s32 %s36, 1
    %s38 = scalar_select %p35, %s36, %s37
    %p41 = pneg %p35
    %p42 = scmp.eq.s32.totalorder %s26, 3
    %p43 = por %p41, %p42
    %p44 = scmp.ne.s32.totalorder %s36, %s39
    %p45 = scmp.eq.s32.totalorder %s26, 0
    %p46 = por %p44, %p45
    %p47 = scmp.ne.s32.totalorder %s36, %s39
    %p48 = scmp.eq.s32.totalorder %s31, 3
    %p49 = por %p47, %p48
    %p50 = scmp.ne.s32.totalorder %s39, %s40
    %p51 = scmp.eq.s32.totalorder %s31, 0
    %p52 = por %p50, %p51
    %p53 = scmp.ne.s32.totalorder %s39, %s40
    %p54 = scmp.eq.s32.totalorder %s32, 3
    %p55 = por %p53, %p54
    %p57 = scmp.ne.s32.totalorder %s40, %s56
    %p58 = scmp.eq.s32.totalorder %s32, 0
    %p59 = por %p57, %p58
    %s61 = sadd.s32 %s60, 1
    %p64 = scmp.eq.s32.totalorder %s26, 3
    %p65 = scmp.ne.s32.totalorder %s60, %s62
    %p66 = scmp.eq.s32.totalorder %s26, 0
    %p67 = por %p65, %p66
    %p68 = scmp.ne.s32.totalorder %s60, %s62
    %p69 = scmp.eq.s32.totalorder %s31, 3
    %p70 = por %p68, %p69
    %p71 = scmp.ne.s32.totalorder %s62, %s63
    %p72 = scmp.eq.s32.totalorder %s31, 0
    %p73 = por %p71, %p72
    %p74 = scmp.ne.s32.totalorder %s62, %s63
    %p75 = scmp.eq.s32.totalorder %s32, 3
    %p76 = por %p74, %p75
    %p78 = scmp.ne.s32.totalorder %s63, %s77
    %p79 = scmp.eq.s32.totalorder %s32, 0
    %p80 = por %p78, %p79
    %s82 = sadd.s32 %s81, 1
    %p85 = scmp.eq.s32.totalorder %s26, 3
    %p86 = scmp.ne.s32.totalorder %s81, %s83
    %p87 = scmp.eq.s32.totalorder %s26, 0
    %p88 = por %p86, %p87
    %p89 = scmp.ne.s32.totalorder %s81, %s83
    %p90 = scmp.eq.s32.totalorder %s31, 3
    %p91 = por %p89, %p90
    %p92 = scmp.ne.s32.totalorder %s83, %s84
    %p93 = scmp.eq.s32.totalorder %s31, 0
    %p94 = por %p92, %p93
    %p95 = scmp.ne.s32.totalorder %s83, %s84
    %p96 = scmp.eq.s32.totalorder %s32, 3
    %p97 = por %p95, %p96
    %p99 = scmp.ne.s32.totalorder %s84, %s98
    %p100 = scmp.eq.s32.totalorder %s32, 0
    %p101 = por %p99, %p100
    %s103 = sadd.s32 %s102, 1
    %p106 = scmp.eq.s32.totalorder %s26, 3
    %p107 = scmp.ne.s32.totalorder %s102, %s104
    %p108 = scmp.eq.s32.totalorder %s26, 0
    %p109 = por %p107, %p108
    %p110 = scmp.ne.s32.totalorder %s102, %s104
    %p111 = scmp.eq.s32.totalorder %s31, 3
    %p112 = por %p110, %p111
    %p113 = scmp.ne.s32.totalorder %s104, %s105
    %p114 = scmp.eq.s32.totalorder %s31, 0
    %p115 = por %p113, %p114
    %p116 = scmp.ne.s32.totalorder %s104, %s105
    %p117 = scmp.eq.s32.totalorder %s32, 3
    %p118 = por %p116, %p117
    %p120 = scmp.ne.s32.totalorder %s105, %s119
    %p121 = scmp.eq.s32.totalorder %s32, 0
    %p122 = por %p120, %p121
    %s124 = sadd.s32 %s123, 1
    %p127 = scmp.eq.s32.totalorder %s26, 3
    %p128 = scmp.ne.s32.totalorder %s123, %s125
    %p129 = scmp.eq.s32.totalorder %s26, 0
    %p130 = por %p128, %p129
    %p131 = scmp.ne.s32.totalorder %s123, %s125
    %p132 = scmp.eq.s32.totalorder %s31, 3
    %p133 = por %p131, %p132
    %p134 = scmp.ne.s32.totalorder %s125, %s126
    %p135 = scmp.eq.s32.totalorder %s31, 0
    %p136 = por %p134, %p135
    %p137 = scmp.ne.s32.totalorder %s125, %s126
    %p138 = scmp.eq.s32.totalorder %s32, 3
    %p139 = por %p137, %p138
    %p141 = scmp.ne.s32.totalorder %s126, %s140
    %p142 = scmp.eq.s32.totalorder %s32, 0
    %p143 = por %p141, %p142
    %s145 = sadd.s32 %s144, 1
    %p148 = scmp.eq.s32.totalorder %s26, 3
    %p149 = scmp.ne.s32.totalorder %s144, %s146
    %p150 = scmp.eq.s32.totalorder %s26, 0
    %p151 = por %p149, %p150
    %p152 = scmp.ne.s32.totalorder %s144, %s146
    %p153 = scmp.eq.s32.totalorder %s31, 3
    %p154 = por %p152, %p153
    %p155 = scmp.ne.s32.totalorder %s146, %s147
    %p156 = scmp.eq.s32.totalorder %s31, 0
    %p157 = por %p155, %p156
    %p158 = scmp.ne.s32.totalorder %s146, %s147
    %p159 = scmp.eq.s32.totalorder %s32, 3
    %p160 = por %p158, %p159
    %p162 = scmp.ne.s32.totalorder %s147, %s161
    %p163 = scmp.eq.s32.totalorder %s32, 0
    %p164 = por %p162, %p163
    %s166 = sadd.s32 %s165, 1
    %p169 = scmp.eq.s32.totalorder %s26, 3
    %p170 = scmp.ne.s32.totalorder %s165, %s167
    %p171 = scmp.eq.s32.totalorder %s26, 0
    %p172 = por %p170, %p171
    %p173 = scmp.ne.s32.totalorder %s165, %s167
    %p174 = scmp.eq.s32.totalorder %s31, 3
    %p175 = por %p173, %p174
    %p176 = scmp.ne.s32.totalorder %s167, %s168
    %p177 = scmp.eq.s32.totalorder %s31, 0
    %p178 = por %p176, %p177
    %p179 = scmp.ne.s32.totalorder %s167, %s168
    %p180 = scmp.eq.s32.totalorder %s32, 3
    %p181 = por %p179, %p180
    %p183 = scmp.ne.s32.totalorder %s168, %s182
    %p184 = scmp.eq.s32.totalorder %s32, 0
    %p185 = por %p183, %p184
    %s187 = sadd.s32 %s186, 1
    %p190 = scmp.eq.s32.totalorder %s26, 3
    %p191 = scmp.ne.s32.totalorder %s186, %s188
    %p192 = scmp.eq.s32.totalorder %s26, 0
    %p193 = por %p191, %p192
    %p194 = scmp.ne.s32.totalorder %s186, %s188
    %p195 = scmp.eq.s32.totalorder %s31, 3
    %p196 = por %p194, %p195
    %p197 = scmp.ne.s32.totalorder %s188, %s189
    %p198 = scmp.eq.s32.totalorder %s31, 0
    %p199 = por %p197, %p198
    %p200 = scmp.ne.s32.totalorder %s188, %s189
    %p201 = scmp.eq.s32.totalorder %s32, 3
    %p202 = por %p200, %p201
    %p204 = scmp.ne.s32.totalorder %s189, %s203
    %p205 = scmp.eq.s32.totalorder %s32, 0
    %p206 = por %p204, %p205
    %s208 = sadd.s32 %s207, 1
    %p211 = scmp.eq.s32.totalorder %s26, 3
    %p212 = scmp.ne.s32.totalorder %s207, %s209
    %p213 = scmp.eq.s32.totalorder %s26, 0
    %p214 = por %p212, %p213
    %p215 = scmp.ne.s32.totalorder %s207, %s209
    %p216 = scmp.eq.s32.totalorder %s31, 3
    %p217 = por %p215, %p216
    %p218 = scmp.ne.s32.totalorder %s209, %s210
    %p219 = scmp.eq.s32.totalorder %s31, 0
    %p220 = por %p218, %p219
    %p221 = scmp.ne.s32.totalorder %s209, %s210
    %p222 = scmp.eq.s32.totalorder %s32, 3
    %p223 = por %p221, %p222
    %p225 = scmp.ne.s32.totalorder %s210, %s224
    %p226 = scmp.eq.s32.totalorder %s32, 0
    %p227 = por %p225, %p226
    %s229 = sadd.s32 %s228, 1
    %p232 = scmp.eq.s32.totalorder %s26, 3
    %p233 = scmp.ne.s32.totalorder %s228, %s230
    %p234 = scmp.eq.s32.totalorder %s26, 0
    %p235 = por %p233, %p234
    %p236 = scmp.ne.s32.totalorder %s228, %s230
    %p237 = scmp.eq.s32.totalorder %s31, 3
    %p238 = por %p236, %p237
    %p239 = scmp.ne.s32.totalorder %s230, %s231
    %p240 = scmp.eq.s32.totalorder %s31, 0
    %p241 = por %p239, %p240
    %p242 = scmp.ne.s32.totalorder %s230, %s231
    %p243 = scmp.eq.s32.totalorder %s32, 3
    %p244 = por %p242, %p243
    %p246 = scmp.ne.s32.totalorder %s231, %s245
    %p247 = scmp.eq.s32.totalorder %s32, 0
    %p248 = por %p246, %p247
    %s250 = sadd.s32 %s249, 1
    %p253 = scmp.eq.s32.totalorder %s26, 3
    %p254 = scmp.ne.s32.totalorder %s249, %s251
    %p255 = scmp.eq.s32.totalorder %s26, 0
    %p256 = por %p254, %p255
    %p257 = scmp.ne.s32.totalorder %s249, %s251
    %p258 = scmp.eq.s32.totalorder %s31, 3
    %p259 = por %p257, %p258
    %p260 = scmp.ne.s32.totalorder %s251, %s252
    %p261 = scmp.eq.s32.totalorder %s31, 0
    %p262 = por %p260, %p261
    %p263 = scmp.ne.s32.totalorder %s251, %s252
    %p264 = scmp.eq.s32.totalorder %s32, 3
    %p265 = por %p263, %p264
    %p267 = scmp.ne.s32.totalorder %s252, %s266
    %p268 = scmp.eq.s32.totalorder %s32, 0
    %p269 = por %p267, %p268
    %s271 = sadd.s32 %s270, 1
    %p274 = scmp.eq.s32.totalorder %s26, 3
    %p275 = scmp.ne.s32.totalorder %s270, %s272
    %p276 = scmp.eq.s32.totalorder %s26, 0
    %p277 = por %p275, %p276
    %p278 = scmp.ne.s32.totalorder %s270, %s272
    %p279 = scmp.eq.s32.totalorder %s31, 3
    %p280 = por %p278, %p279
    %p281 = scmp.ne.s32.totalorder %s272, %s273
    %p282 = scmp.eq.s32.totalorder %s31, 0
    %p283 = por %p281, %p282
    %p284 = scmp.ne.s32.totalorder %s272, %s273
    %p285 = scmp.eq.s32.totalorder %s32, 3
    %p286 = por %p284, %p285
    %p288 = scmp.ne.s32.totalorder %s273, %s287
    %p289 = scmp.eq.s32.totalorder %s32, 0
    %p290 = por %p288, %p289
    %s292 = sadd.s32 %s291, 1
    %p295 = scmp.eq.s32.totalorder %s26, 3
    %p296 = scmp.ne.s32.totalorder %s291, %s293
    %p297 = scmp.eq.s32.totalorder %s26, 0
    %p298 = por %p296, %p297
    %p299 = scmp.ne.s32.totalorder %s291, %s293
    %p300 = scmp.eq.s32.totalorder %s31, 3
    %p301 = por %p299, %p300
    %p302 = scmp.ne.s32.totalorder %s293, %s294
    %p303 = scmp.eq.s32.totalorder %s31, 0
    %p304 = por %p302, %p303
    %p305 = scmp.ne.s32.totalorder %s293, %s294
    %p306 = scmp.eq.s32.totalorder %s32, 3
    %p307 = por %p305, %p306
    %p309 = scmp.ne.s32.totalorder %s294, %s308
    %p310 = scmp.eq.s32.totalorder %s32, 0
    %p311 = por %p309, %p310
    %s313 = sadd.s32 %s312, 1
    %p316 = scmp.eq.s32.totalorder %s26, 3
    %p317 = scmp.ne.s32.totalorder %s312, %s314
    %p318 = scmp.eq.s32.totalorder %s26, 0
    %p319 = por %p317, %p318
    %p320 = scmp.ne.s32.totalorder %s312, %s314
    %p321 = scmp.eq.s32.totalorder %s31, 3
    %p322 = por %p320, %p321
    %p323 = scmp.ne.s32.totalorder %s314, %s315
    %p324 = scmp.eq.s32.totalorder %s31, 0
    %p325 = por %p323, %p324
    %p326 = scmp.ne.s32.totalorder %s314, %s315
    %p327 = scmp.eq.s32.totalorder %s32, 3
    %p328 = por %p326, %p327
    %p330 = scmp.ne.s32.totalorder %s315, %s329
    %p331 = scmp.eq.s32.totalorder %s32, 0
    %p332 = por %p330, %p331
    %s334 = sadd.s32 %s333, 1
    %p337 = scmp.eq.s32.totalorder %s26, 3
    %p338 = scmp.ne.s32.totalorder %s333, %s335
    %p339 = scmp.eq.s32.totalorder %s26, 0
    %p340 = por %p338, %p339
    %p341 = scmp.ne.s32.totalorder %s333, %s335
    %p342 = scmp.eq.s32.totalorder %s31, 3
    %p343 = por %p341, %p342
    %p344 = scmp.ne.s32.totalorder %s335, %s336
    %p345 = scmp.eq.s32.totalorder %s31, 0
    %p346 = por %p344, %p345
    %p347 = scmp.ne.s32.totalorder %s335, %s336
    %p348 = scmp.eq.s32.totalorder %s32, 3
    %p349 = por %p347, %p348
    %p351 = scmp.ne.s32.totalorder %s336, %s350
    %p352 = scmp.eq.s32.totalorder %s32, 0
    %p353 = por %p351, %p352
    %s355 = sadd.s32 %s354, 1
    %p358 = scmp.eq.s32.totalorder %s26, 3
    %p359 = scmp.ne.s32.totalorder %s354, %s356
    %p360 = scmp.eq.s32.totalorder %s26, 0
    %p361 = por %p359, %p360
    %p362 = scmp.ne.s32.totalorder %s354, %s356
    %p363 = scmp.eq.s32.totalorder %s31, 3
    %p364 = por %p362, %p363
    %p365 = scmp.ne.s32.totalorder %s356, %s357
    %p366 = scmp.eq.s32.totalorder %s31, 0
    %p367 = por %p365, %p366
    %p368 = scmp.ne.s32.totalorder %s356, %s357
    %p369 = scmp.eq.s32.totalorder %s32, 3
    %p370 = por %p368, %p369
    %p372 = scmp.ne.s32.totalorder %s357, %s371
    %p373 = scmp.eq.s32.totalorder %s32, 0
    %p374 = por %p372, %p373
    %s376 = sadd.s32 %s375, 1
    %p379 = scmp.eq.s32.totalorder %s26, 3
    %p380 = scmp.ne.s32.totalorder %s375, %s377
    %p381 = scmp.eq.s32.totalorder %s26, 0
    %p382 = por %p380, %p381
    %p383 = scmp.ne.s32.totalorder %s375, %s377
    %p384 = scmp.eq.s32.totalorder %s31, 3
    %p385 = por %p383, %p384
    %p386 = scmp.ne.s32.totalorder %s377, %s378
    %p387 = scmp.eq.s32.totalorder %s31, 0
    %p388 = por %p386, %p387
    %p389 = scmp.ne.s32.totalorder %s377, %s378
    %p390 = scmp.eq.s32.totalorder %s32, 3
    %p391 = por %p389, %p390
    %p393 = scmp.ne.s32.totalorder %s378, %s392
    %p394 = scmp.eq.s32.totalorder %s32, 0
    %p395 = por %p393, %p394
    %s397 = sadd.s32 %s396, 1
    %p400 = scmp.eq.s32.totalorder %s26, 3
    %p401 = scmp.ne.s32.totalorder %s396, %s398
    %p402 = scmp.eq.s32.totalorder %s26, 0
    %p403 = por %p401, %p402
    %p404 = scmp.ne.s32.totalorder %s396, %s398
    %p405 = scmp.eq.s32.totalorder %s31, 3
    %p406 = por %p404, %p405
    %p407 = scmp.ne.s32.totalorder %s398, %s399
    %p408 = scmp.eq.s32.totalorder %s31, 0
    %p409 = por %p407, %p408
    %p410 = scmp.ne.s32.totalorder %s398, %s399
    %p411 = scmp.eq.s32.totalorder %s32, 3
    %p412 = por %p410, %p411
    %p414 = scmp.ne.s32.totalorder %s399, %s413
    %p415 = scmp.eq.s32.totalorder %s32, 0
    %p416 = por %p414, %p415
    %s418 = sadd.s32 %s417, 1
    %p421 = scmp.eq.s32.totalorder %s26, 3
    %p422 = scmp.ne.s32.totalorder %s417, %s419
    %p423 = scmp.eq.s32.totalorder %s26, 0
    %p424 = por %p422, %p423
    %p425 = scmp.ne.s32.totalorder %s417, %s419
    %p426 = scmp.eq.s32.totalorder %s31, 3
    %p427 = por %p425, %p426
    %p428 = scmp.ne.s32.totalorder %s419, %s420
    %p429 = scmp.eq.s32.totalorder %s31, 0
    %p430 = por %p428, %p429
    %p431 = scmp.ne.s32.totalorder %s419, %s420
    %p432 = scmp.eq.s32.totalorder %s32, 3
    %p433 = por %p431, %p432
    %p435 = scmp.ne.s32.totalorder %s420, %s434
    %p436 = scmp.eq.s32.totalorder %s32, 0
    %p437 = por %p435, %p436
    %s439 = sadd.s32 %s438, 1
    %p442 = scmp.eq.s32.totalorder %s26, 3
    %p443 = scmp.ne.s32.totalorder %s438, %s440
    %p444 = scmp.eq.s32.totalorder %s26, 0
    %p445 = por %p443, %p444
    %p446 = scmp.ne.s32.totalorder %s438, %s440
    %p447 = scmp.eq.s32.totalorder %s31, 3
    %p448 = por %p446, %p447
    %p449 = scmp.ne.s32.totalorder %s440, %s441
    %p450 = scmp.eq.s32.totalorder %s31, 0
    %p451 = por %p449, %p450
    %p452 = scmp.ne.s32.totalorder %s440, %s441
    %p453 = scmp.eq.s32.totalorder %s32, 3
    %p454 = por %p452, %p453
    %p456 = scmp.ne.s32.totalorder %s441, %s455
    %p457 = scmp.eq.s32.totalorder %s32, 0
    %p458 = por %p456, %p457
    %s459 = ssub.s32 %s26, %s33
    %p460 = scmp.eq.s32.totalorder %s459, 0
    %s462 = sadd.s32 %s461, 1
    %s463 = scalar_select %p460, %s461, %s462
    %p466 = pneg %p460
    %p467 = scmp.eq.s32.totalorder %s26, 3
    %p468 = por %p466, %p467
    %p469 = scmp.ne.s32.totalorder %s461, %s464
    %p470 = scmp.eq.s32.totalorder %s26, 0
    %p471 = por %p469, %p470
    %p472 = scmp.ne.s32.totalorder %s461, %s464
    %p473 = scmp.eq.s32.totalorder %s31, 3
    %p474 = por %p472, %p473
    %p475 = scmp.ne.s32.totalorder %s464, %s465
    %p476 = scmp.eq.s32.totalorder %s31, 0
    %p477 = por %p475, %p476
    %p478 = scmp.ne.s32.totalorder %s464, %s465
    %p479 = scmp.eq.s32.totalorder %s32, 3
    %p480 = por %p478, %p479
    %p482 = scmp.ne.s32.totalorder %s465, %s481
    %p483 = scmp.eq.s32.totalorder %s32, 0
    %p484 = por %p482, %p483
    %p485 = scmp.le.s32.totalorder 1, %s26
    %p486 = scmp.lt.s32.totalorder %s26, 5
    %p487 = pnand %p485, %p486
    %p488 = pneg %p487
    // Predicated region
    $region9: #{_lambda_.3} parent=5 // pred_check
      _
    $region10: #{_lambda_.3} parent=5 // pred_check_branch
      %490 = sbr.rel (%p487) target = $region12
    $region11: #{_lambda_.3} parent=5 // pred_region
      %s491 = ssub.s32 %s26, 1
      // Predicated region
      $region13: #{_lambda_.3} parent=11 // pred_check
        %p492 = pneg %p73
      $region14: #{_lambda_.3} parent=11 // pred_check_branch
        %494 = sbr.rel (%p492) target = $region16
      $region15: #{_lambda_.3} parent=11 // pred_region
        _
      $region16: #{_lambda_.3} parent=11 // pred_fallthru
        _
      // Predicated region
      $region17: #{_lambda_.3} parent=11 // pred_check
        %p495 = pneg %p94
      $region18: #{_lambda_.3} parent=11 // pred_check_branch
        %497 = sbr.rel (%p495) target = $region20
      $region19: #{_lambda_.3} parent=11 // pred_region
        _
      $region20: #{_lambda_.3} parent=11 // pred_fallthru
        _
      // Predicated region
      $region21: #{_lambda_.3} parent=11 // pred_check
        %p498 = pneg %p115
      $region22: #{_lambda_.3} parent=11 // pred_check_branch
        %500 = sbr.rel (%p498) target = $region24
      $region23: #{_lambda_.3} parent=11 // pred_region
        _
      $region24: #{_lambda_.3} parent=11 // pred_fallthru
        _
      // Predicated region
      $region25: #{_lambda_.3} parent=11 // pred_check
        %p501 = pneg %p136
      $region26: #{_lambda_.3} parent=11 // pred_check_branch
        %503 = sbr.rel (%p501) target = $region28
      $region27: #{_lambda_.3} parent=11 // pred_region
        _
      $region28: #{_lambda_.3} parent=11 // pred_fallthru
        _
      // Predicated region
      $region29: #{_lambda_.3} parent=11 // pred_check
        %p504 = pneg %p157
      $region30: #{_lambda_.3} parent=11 // pred_check_branch
        %506 = sbr.rel (%p504) target = $region32
      $region31: #{_lambda_.3} parent=11 // pred_region
        _
      $region32: #{_lambda_.3} parent=11 // pred_fallthru
        _
      // Predicated region
      $region33: #{_lambda_.3} parent=11 // pred_check
        %p507 = pneg %p178
      $region34: #{_lambda_.3} parent=11 // pred_check_branch
        %509 = sbr.rel (%p507) target = $region36
      $region35: #{_lambda_.3} parent=11 // pred_region
        _
      $region36: #{_lambda_.3} parent=11 // pred_fallthru
        _
      // Predicated region
      $region37: #{_lambda_.3} parent=11 // pred_check
        %p510 = pneg %p199
      $region38: #{_lambda_.3} parent=11 // pred_check_branch
        %512 = sbr.rel (%p510) target = $region40
      $region39: #{_lambda_.3} parent=11 // pred_region
        _
      $region40: #{_lambda_.3} parent=11 // pred_fallthru
        _
      // Predicated region
      $region41: #{_lambda_.3} parent=11 // pred_check
        %p513 = pneg %p220
      $region42: #{_lambda_.3} parent=11 // pred_check_branch
        %515 = sbr.rel (%p513) target = $region44
      $region43: #{_lambda_.3} parent=11 // pred_region
        _
      $region44: #{_lambda_.3} parent=11 // pred_fallthru
        _
      // Predicated region
      $region45: #{_lambda_.3} parent=11 // pred_check
        %p516 = pneg %p241
      $region46: #{_lambda_.3} parent=11 // pred_check_branch
        %518 = sbr.rel (%p516) target = $region48
      $region47: #{_lambda_.3} parent=11 // pred_region
        _
      $region48: #{_lambda_.3} parent=11 // pred_fallthru
        _
      // Predicated region
      $region49: #{_lambda_.3} parent=11 // pred_check
        %p519 = pneg %p262
      $region50: #{_lambda_.3} parent=11 // pred_check_branch
        %521 = sbr.rel (%p519) target = $region52
      $region51: #{_lambda_.3} parent=11 // pred_region
        _
      $region52: #{_lambda_.3} parent=11 // pred_fallthru
        _
      // Predicated region
      $region53: #{_lambda_.3} parent=11 // pred_check
        %p522 = pneg %p283
      $region54: #{_lambda_.3} parent=11 // pred_check_branch
        %524 = sbr.rel (%p522) target = $region56
      $region55: #{_lambda_.3} parent=11 // pred_region
        _
      $region56: #{_lambda_.3} parent=11 // pred_fallthru
        _
      // Predicated region
      $region57: #{_lambda_.3} parent=11 // pred_check
        %p525 = pneg %p304
      $region58: #{_lambda_.3} parent=11 // pred_check_branch
        %527 = sbr.rel (%p525) target = $region60
      $region59: #{_lambda_.3} parent=11 // pred_region
        _
      $region60: #{_lambda_.3} parent=11 // pred_fallthru
        _
      // Predicated region
      $region61: #{_lambda_.3} parent=11 // pred_check
        %p528 = pneg %p325
      $region62: #{_lambda_.3} parent=11 // pred_check_branch
        %530 = sbr.rel (%p528) target = $region64
      $region63: #{_lambda_.3} parent=11 // pred_region
        _
      $region64: #{_lambda_.3} parent=11 // pred_fallthru
        _
      // Predicated region
      $region65: #{_lambda_.3} parent=11 // pred_check
        %p531 = pneg %p346
      $region66: #{_lambda_.3} parent=11 // pred_check_branch
        %533 = sbr.rel (%p531) target = $region68
      $region67: #{_lambda_.3} parent=11 // pred_region
        _
      $region68: #{_lambda_.3} parent=11 // pred_fallthru
        _
      // Predicated region
      $region69: #{_lambda_.3} parent=11 // pred_check
        %p534 = pneg %p367
      $region70: #{_lambda_.3} parent=11 // pred_check_branch
        %536 = sbr.rel (%p534) target = $region72
      $region71: #{_lambda_.3} parent=11 // pred_region
        _
      $region72: #{_lambda_.3} parent=11 // pred_fallthru
        _
      // Predicated region
      $region73: #{_lambda_.3} parent=11 // pred_check
        %p537 = pneg %p388
      $region74: #{_lambda_.3} parent=11 // pred_check_branch
        %539 = sbr.rel (%p537) target = $region76
      $region75: #{_lambda_.3} parent=11 // pred_region
        _
      $region76: #{_lambda_.3} parent=11 // pred_fallthru
        _
      // Predicated region
      $region77: #{_lambda_.3} parent=11 // pred_check
        %p540 = pneg %p409
      $region78: #{_lambda_.3} parent=11 // pred_check_branch
        %542 = sbr.rel (%p540) target = $region80
      $region79: #{_lambda_.3} parent=11 // pred_region
        _
      $region80: #{_lambda_.3} parent=11 // pred_fallthru
        _
      // Predicated region
      $region81: #{_lambda_.3} parent=11 // pred_check
        %p543 = pneg %p430
      $region82: #{_lambda_.3} parent=11 // pred_check_branch
        %545 = sbr.rel (%p543) target = $region84
      $region83: #{_lambda_.3} parent=11 // pred_region
        _
      $region84: #{_lambda_.3} parent=11 // pred_fallthru
        _
      // Predicated region
      $region85: #{_lambda_.3} parent=11 // pred_check
        %p546 = pneg %p451
      $region86: #{_lambda_.3} parent=11 // pred_check_branch
        %548 = sbr.rel (%p546) target = $region88
      $region87: #{_lambda_.3} parent=11 // pred_region
        _
      $region88: #{_lambda_.3} parent=11 // pred_fallthru
        _
    $region12: #{_lambda_.3} parent=5 // pred_fallthru
      _
    %p549 = scmp.lt.s32.totalorder %s26, 4
    // Predicated region
    $region89: #{_lambda_.3} parent=5 // pred_check
      %p550 = pneg %p549
    $region90: #{_lambda_.3} parent=5 // pred_check_branch
      %552 = sbr.rel (%p550) target = $region92
    $region91: #{_lambda_.3} parent=5 // pred_region
      // Predicated region
      $region93: #{_lambda_.3} parent=91 // pred_check
        %p553 = pneg %p46
      $region94: #{_lambda_.3} parent=91 // pred_check_branch
        %555 = sbr.rel (%p553) target = $region96
      $region95: #{_lambda_.3} parent=91 // pred_region
        %p556 = scmp.lt.s32.totalorder %s26, 3
        %s557 = scalar_select %p556, %s26, 3
        %s558 = smul.addr %s557, 2
        %s559 = smul.addr %s558, 4
        %s560 = scalar_lea.vmem %s0, %s559
      $region96: #{_lambda_.3} parent=91 // pred_fallthru
        _
    $region92: #{_lambda_.3} parent=5 // pred_fallthru
      _
    %p561 = scmp.le.s32.totalorder 1, %s26
    %p562 = scmp.lt.s32.totalorder %s26, 5
    %p563 = pnand %p561, %p562
    %p564 = pneg %p563
    // Predicated region
    $region97: #{_lambda_.3} parent=5 // pred_check
      _
    $region98: #{_lambda_.3} parent=5 // pred_check_branch
      %566 = sbr.rel (%p563) target = $region100
    $region99: #{_lambda_.3} parent=5 // pred_region
      %s567 = ssub.s32 %s26, 1
      %p568 = scmp.lt.s32.totalorder %s31, 3
      %s569 = scalar_select %p568, %s31, 3
      %s570 = smul.addr %s569, 2
      %s571 = smul.addr %s570, 4
      %s572 = scalar_lea.vmem %s0, %s571
      %p573 = pneg %p52
      %p574 = pneg %p49
      %p575 = pneg %p73
      %p576 = pneg %p70
      %p577 = pneg %p94
      %p578 = pneg %p91
      %p579 = pneg %p115
      %p580 = pneg %p112
      %p581 = pneg %p136
      %p582 = pneg %p133
      %p583 = pneg %p157
      %p584 = pneg %p154
      %p585 = pneg %p178
      %p586 = pneg %p175
      %p587 = pneg %p199
      %p588 = pneg %p196
      %p589 = pneg %p220
      %p590 = pneg %p217
      %p591 = pneg %p241
      %p592 = pneg %p238
      %p593 = pneg %p262
      %p594 = pneg %p259
      %p595 = pneg %p283
      %p596 = pneg %p280
      %p597 = pneg %p304
      %p598 = pneg %p301
      %p599 = pneg %p325
      %p600 = pneg %p322
      %p601 = pneg %p346
      %p602 = pneg %p343
      %p603 = pneg %p367
      %p604 = pneg %p364
      %p605 = pneg %p388
      %p606 = pneg %p385
      %p607 = pneg %p409
      %p608 = pneg %p406
      %p609 = pneg %p430
      %p610 = pneg %p427
      %p611 = pneg %p451
      %p612 = pneg %p448
      %p613 = pneg %p477
      %p614 = pneg %p474
      %p615 = scmp.lt.s32.totalorder %s31, 3
      %s616 = scalar_select %p615, %s31, 3
      %s617 = smul.addr %s616, 4
      %s618 = scalar_lea.vmem %s20, %s617
      %p619 = scmp.lt.s32.totalorder %s31, 3
      %s620 = scalar_select %p619, %s31, 3
      %s621 = smul.addr %s620, 2
      %s622 = smul.addr %s621, 4
      %s623 = scalar_lea.vmem %s0, %s622
      %p624 = scmp.lt.s32.totalorder %s31, 3
      %s625 = scalar_select %p624, %s31, 3
      %s626 = smul.addr %s625, 4
      %s627 = scalar_lea.vmem %s20, %s626
      %v629 = vld [vmem:[%s623] sm:$0xff]
      %v630 = vld [vmem:[%s1] sm:$0x3]
      %v632 = vlaneseq
      %v633 = vshrl.u32 %v632, 7
      %v634 = vsub.s32 0, %v633
      %v635 = vrot.slane %v630, %v634
      %v636 = vlaneseq
      %v637 = vshrl.u32 %v636, 7
      %v638 = vsub.s32 1, %v637
      %v639 = vrot.slane %v630, %v638
      %v640 = vcombine.low %v635, %v639
      %v642 = vmul.f32 %v629, %v640
      %v643 = vld [vmem:[%s2] sm:$0x3]
      %v645 = vlaneseq
      %v646 = vshrl.u32 %v645, 7
      %v647 = vsub.s32 0, %v646
      %v648 = vrot.slane %v643, %v647
      %v649 = vlaneseq
      %v650 = vshrl.u32 %v649, 7
      %v651 = vsub.s32 1, %v650
      %v652 = vrot.slane %v643, %v651
      %v653 = vcombine.low %v648, %v652
      %v655 = vadd.f32 %v642, %v653
      %v656 = vld [vmem:[%s4] sm:$0x1]
      %v658 = vcombine.high %v655, %v655
      %v660 = vpack.c.bf16 %v655, %v655
      %v661 = vpack.c.bf16 %v658, %v658
      %v662 = vld [vmem:[%s3] sm:$0xf]
      %v663 = vld [vmem:[%s3 + $0x4] sm:$0xf]
      %v664 = vld [vmem:[%s3 + $0x8] sm:$0xf]
      %v665 = vld [vmem:[%s3 + $0xc] sm:$0xf]
      %v666 = vld [vmem:[%s3 + $0x10] sm:$0xf]
      %v667 = vld [vmem:[%s3 + $0x14] sm:$0xf]
      %v668 = vld [vmem:[%s3 + $0x18] sm:$0xf]
      %v669 = vld [vmem:[%s3 + $0x1c] sm:$0xf]
      %v670 = vld [vmem:[%s3 + $0x20] sm:$0xf]
      %v671 = vld [vmem:[%s3 + $0x24] sm:$0xf]
      %v672 = vld [vmem:[%s3 + $0x28] sm:$0xf]
      %v673 = vld [vmem:[%s3 + $0x2c] sm:$0xf]
      %v674 = vld [vmem:[%s3 + $0x30] sm:$0xf]
      %v675 = vld [vmem:[%s3 + $0x34] sm:$0xf]
      %v676 = vld [vmem:[%s3 + $0x38] sm:$0xf]
      %v677 = vld [vmem:[%s3 + $0x3c] sm:$0xf]
      %v678 = vld [vmem:[%s3 + $0x40] sm:$0xf]
      %v679 = vld [vmem:[%s3 + $0x44] sm:$0xf]
      %v680 = vld [vmem:[%s3 + $0x48] sm:$0xf]
      %v681 = vld [vmem:[%s3 + $0x4c] sm:$0xf]
      %v682 = vld [vmem:[%s3 + $0x50] sm:$0xf]
      %v683 = vld [vmem:[%s3 + $0x54] sm:$0xf]
      %v684 = vld [vmem:[%s3 + $0x58] sm:$0xf]
      %v685 = vld [vmem:[%s3 + $0x5c] sm:$0xf]
      %v687 = vlaneseq
      %v688 = vshrl.u32 %v687, 7
      %v689 = vsub.s32 0, %v688
      %v690 = vrot.slane %v656, %v689
      %v716 = vunpack.c.l.b16 %v662
      %v717 = vunpack.c.l.b16 %v663
      %v718 = vunpack.c.l.b16 %v664
      %v719 = vunpack.c.l.b16 %v665
      %v720 = vunpack.c.l.b16 %v666
      %v721 = vunpack.c.l.b16 %v667
      %v722 = vunpack.c.l.b16 %v668
      %v723 = vunpack.c.l.b16 %v669
      %v724 = vunpack.c.l.b16 %v670
      %v725 = vunpack.c.l.b16 %v671
      %v726 = vunpack.c.l.b16 %v672
      %v727 = vunpack.c.l.b16 %v673
      %v728 = vunpack.c.l.b16 %v674
      %v729 = vunpack.c.l.b16 %v675
      %v730 = vunpack.c.l.b16 %v676
      %v731 = vunpack.c.l.b16 %v677
      %v732 = vunpack.c.l.b16 %v678
      %v733 = vunpack.c.l.b16 %v679
      %v734 = vunpack.c.l.b16 %v680
      %v735 = vunpack.c.l.b16 %v681
      %v736 = vunpack.c.l.b16 %v682
      %v737 = vunpack.c.l.b16 %v683
      %v738 = vunpack.c.l.b16 %v684
      %v739 = vunpack.c.l.b16 %v685
      %v740 = vpack.c.b16 %v717, %v716
      %v741 = vpack.c.b16 %v719, %v718
      %v742 = vpack.c.b16 %v721, %v720
      %v743 = vpack.c.b16 %v723, %v722
      %v744 = vpack.c.b16 %v725, %v724
      %v745 = vpack.c.b16 %v727, %v726
      %v746 = vpack.c.b16 %v729, %v728
      %v747 = vpack.c.b16 %v731, %v730
      %v748 = vpack.c.b16 %v733, %v732
      %v749 = vpack.c.b16 %v735, %v734
      %v750 = vpack.c.b16 %v737, %v736
      %v751 = vpack.c.b16 %v739, %v738
      %vm764 = vcmask 523264
      %v766 = vsel %vm764, %v661, 0
      %768 = vmatprep.subr.bf16.mxu0 0
      %769 = vmatpush1.bf16.msra.mxu0 %v747
      %770 = vmatprep.subr.bf16.mxu0 0
      %771 = vmatpush1.bf16.msra.mxu0 %v746
      %772 = vmatprep.subr.bf16.mxu0 0
      %773 = vmatpush1.bf16.msra.mxu0 %v745
      %774 = vmatprep.subr.bf16.mxu0 0
      %775 = vmatpush1.bf16.msra.mxu0 %v744
      %776 = vmatprep.subr.bf16.mxu0 0
      %777 = vmatpush1.bf16.msra.mxu0 %v743
      %778 = vmatprep.subr.bf16.mxu0 0
      %779 = vmatpush1.bf16.msra.mxu0 %v742
      %780 = vmatprep.subr.bf16.mxu0 0
      %781 = vmatpush1.bf16.msra.mxu0 %v741
      %782 = vmatprep.subr.bf16.mxu0 0
      %783 = vmatpush1.bf16.msra.mxu0 %v740
      %784 = vmatprep.subr.bf16.mxu0 0
      %785 = vmatpush2.bf16.msra.mxu0 0
      %786 = vmatprep.subr.bf16.mxu0 0
      %787 = vmatpush2.bf16.msra.mxu0 0
      %788 = vmatprep.subr.bf16.mxu0 0
      %789 = vmatpush2.bf16.msra.mxu0 0
      %790 = vmatprep.subr.bf16.mxu0 0
      %791 = vmatpush2.bf16.msra.mxu0 0
      %792 = vmatprep.subr.bf16.mxu0 0
      %793 = vmatpush2.bf16.msra.mxu0 %v751
      %794 = vmatprep.subr.bf16.mxu0 0
      %795 = vmatpush2.bf16.msra.mxu0 %v750
      %796 = vmatprep.subr.bf16.mxu0 0
      %797 = vmatpush2.bf16.msra.mxu0 %v749
      %798 = vmatprep.subr.bf16.mxu0 0
      %799 = vmatpush2.bf16.msra.mxu0 %v748
      %800 = vmatprep.mubr.bf16.mxu0 %v766
      %801 = vmatmul.mubr.bf16.gmra.mxu0 %v660
      %v802 = vpop.f32.mrf.mxu0
      %v803 = vadd.f32 %v690, %v802
      %v804 = vpop.f32.mrf.mxu0
      %v805 = vpop.f32.mrf.mxu0
      %v806 = vpop.f32.mrf.mxu0
      %807 = vdwg.mxu0
      %v808 = vld [vmem:[%s5] sm:$0xf]
      %v809 = vadd.f32 %v803, %v808
      %v810 = vld [vmem:[%s6] sm:$0x1]
      %v811 = vld [vmem:[%s7] sm:$0x1]
      %vm812 = vcmask 1043456
      %v813 = vsel %vm812, %v809, 0.0
      %814 = vadd.xlane.f32.xlu0 %v813
      %v815 = vpop.xlane.xlu0 %814
      %v816 = vrcp.pop 128.0
      %v817 = vmul.f32 %v815, %v816
      %v818 = vsub.f32 %v809, %v817
      %v819 = vmul.f32 %v818, %v818
      %v820 = vsel %vm812, %v819, 0.0
      %821 = vadd.xlane.f32.xlu0 %v820
      %v822 = vpop.xlane.xlu0 %821
      %v823 = vmul.f32 %v822, %v816
      %v824 = vadd.f32 %v823, 1e-06
      %v825 = vrsqrt.pop %v824
      %v826 = vmul.f32 %v818, %v825
      %v828 = vlaneseq
      %v829 = vshrl.u32 %v828, 7
      %v830 = vsub.s32 0, %v829
      %v831 = vrot.slane %v810, %v830
      %v833 = vmul.f32 %v826, %v831
      %v835 = vlaneseq
      %v836 = vshrl.u32 %v835, 7
      %v837 = vsub.s32 0, %v836
      %v838 = vrot.slane %v811, %v837
      %v840 = vadd.f32 %v833, %v838
      %v841 = vld [vmem:[%s9] sm:$0x7]
      %v842 = vpack.c.bf16 %v840, %v840
      %v843 = vld [vmem:[%s8] sm:$0xff]
      %v844 = vld [vmem:[%s8 + $0x8] sm:$0xf]
      %v845 = vld [vmem:[%s8 + $0xc] sm:$0xff]
      %v846 = vld [vmem:[%s8 + $0x14] sm:$0xf]
      %v847 = vld [vmem:[%s8 + $0x18] sm:$0xff]
      %v848 = vld [vmem:[%s8 + $0x20] sm:$0xf]
      %v849 = vld [vmem:[%s8 + $0x24] sm:$0xff]
      %v850 = vld [vmem:[%s8 + $0x2c] sm:$0xf]
      %v851 = vld [vmem:[%s8 + $0x30] sm:$0xff]
      %v852 = vld [vmem:[%s8 + $0x38] sm:$0xf]
      %v853 = vld [vmem:[%s8 + $0x3c] sm:$0xff]
      %v854 = vld [vmem:[%s8 + $0x44] sm:$0xf]
      %v855 = vld [vmem:[%s8 + $0x48] sm:$0xff]
      %v856 = vld [vmem:[%s8 + $0x50] sm:$0xf]
      %v857 = vld [vmem:[%s8 + $0x54] sm:$0xff]
      %v858 = vld [vmem:[%s8 + $0x5c] sm:$0xf]
      %v859 = vld [vmem:[%s8 + $0x60] sm:$0xff]
      %v860 = vld [vmem:[%s8 + $0x68] sm:$0xf]
      %v861 = vld [vmem:[%s8 + $0x6c] sm:$0xff]
      %v862 = vld [vmem:[%s8 + $0x74] sm:$0xf]
      %v863 = vld [vmem:[%s8 + $0x78] sm:$0xff]
      %v864 = vld [vmem:[%s8 + $0x80] sm:$0xf]
      %v865 = vld [vmem:[%s8 + $0x84] sm:$0xff]
      %v866 = vld [vmem:[%s8 + $0x8c] sm:$0xf]
      %v867 = vld [vmem:[%s8 + $0x90] sm:$0xff]
      %v868 = vld [vmem:[%s8 + $0x98] sm:$0xf]
      %v869 = vld [vmem:[%s8 + $0x9c] sm:$0xff]
      %v870 = vld [vmem:[%s8 + $0xa4] sm:$0xf]
      %v871 = vld [vmem:[%s8 + $0xa8] sm:$0xff]
      %v872 = vld [vmem:[%s8 + $0xb0] sm:$0xf]
      %v873 = vld [vmem:[%s8 + $0xb4] sm:$0xff]
      %v874 = vld [vmem:[%s8 + $0xbc] sm:$0xf]
      %v876 = vlaneseq
      %v877 = vshrl.u32 %v876, 7
      %v878 = vsub.s32 0, %v877
      %v879 = vrot.slane %v841, %v878
      %v880 = vlaneseq
      %v881 = vshrl.u32 %v880, 7
      %v882 = vsub.s32 1, %v881
      %v883 = vrot.slane %v841, %v882
      %v884 = vlaneseq
      %v885 = vshrl.u32 %v884, 7
      %v886 = vsub.s32 2, %v885
      %v887 = vrot.slane %v841, %v886
      %v923 = vunpack.c.l.b16 %v843
      %v924 = vunpack.c.h.b16 %v843
      %v925 = vunpack.c.l.b16 %v844
      %v926 = vunpack.c.l.b16 %v845
      %v927 = vunpack.c.h.b16 %v845
      %v928 = vunpack.c.l.b16 %v846
      %v929 = vunpack.c.l.b16 %v847
      %v930 = vunpack.c.h.b16 %v847
      %v931 = vunpack.c.l.b16 %v848
      %v932 = vunpack.c.l.b16 %v849
      %v933 = vunpack.c.h.b16 %v849
      %v934 = vunpack.c.l.b16 %v850
      %v935 = vunpack.c.l.b16 %v851
      %v936 = vunpack.c.h.b16 %v851
      %v937 = vunpack.c.l.b16 %v852
      %v938 = vunpack.c.l.b16 %v853
      %v939 = vunpack.c.h.b16 %v853
      %v940 = vunpack.c.l.b16 %v854
      %v941 = vunpack.c.l.b16 %v855
      %v942 = vunpack.c.h.b16 %v855
      %v943 = vunpack.c.l.b16 %v856
      %v944 = vunpack.c.l.b16 %v857
      %v945 = vunpack.c.h.b16 %v857
      %v946 = vunpack.c.l.b16 %v858
      %v947 = vunpack.c.l.b16 %v859
      %v948 = vunpack.c.h.b16 %v859
      %v949 = vunpack.c.l.b16 %v860
      %v950 = vunpack.c.l.b16 %v861
      %v951 = vunpack.c.h.b16 %v861
      %v952 = vunpack.c.l.b16 %v862
      %v953 = vunpack.c.l.b16 %v863
      %v954 = vunpack.c.h.b16 %v863
      %v955 = vunpack.c.l.b16 %v864
      %v956 = vunpack.c.l.b16 %v865
      %v957 = vunpack.c.h.b16 %v865
      %v958 = vunpack.c.l.b16 %v866
      %v959 = vunpack.c.l.b16 %v867
      %v960 = vunpack.c.h.b16 %v867
      %v961 = vunpack.c.l.b16 %v868
      %v962 = vunpack.c.l.b16 %v869
      %v963 = vunpack.c.h.b16 %v869
      %v964 = vunpack.c.l.b16 %v870
      %v965 = vunpack.c.l.b16 %v871
      %v966 = vunpack.c.h.b16 %v871
      %v967 = vunpack.c.l.b16 %v872
      %v968 = vunpack.c.l.b16 %v873
      %v969 = vunpack.c.h.b16 %v873
      %v970 = vunpack.c.l.b16 %v874
      %v971 = vpack.c.b16 %v926, %v923
      %v972 = vpack.c.b16 %v927, %v924
      %v973 = vpack.c.b16 %v928, %v925
      %v974 = vpack.c.b16 %v932, %v929
      %v975 = vpack.c.b16 %v933, %v930
      %v976 = vpack.c.b16 %v934, %v931
      %v977 = vpack.c.b16 %v938, %v935
      %v978 = vpack.c.b16 %v939, %v936
      %v979 = vpack.c.b16 %v940, %v937
      %v980 = vpack.c.b16 %v944, %v941
      %v981 = vpack.c.b16 %v945, %v942
      %v982 = vpack.c.b16 %v946, %v943
      %v983 = vpack.c.b16 %v950, %v947
      %v984 = vpack.c.b16 %v951, %v948
      %v985 = vpack.c.b16 %v952, %v949
      %v986 = vpack.c.b16 %v956, %v953
      %v987 = vpack.c.b16 %v957, %v954
      %v988 = vpack.c.b16 %v958, %v955
      %v989 = vpack.c.b16 %v962, %v959
      %v990 = vpack.c.b16 %v963, %v960
      %v991 = vpack.c.b16 %v964, %v961
      %v992 = vpack.c.b16 %v968, %v965
      %v993 = vpack.c.b16 %v969, %v966
      %v994 = vpack.c.b16 %v970, %v967
      %1019 = vmatprep.subr.bf16.mxu0 %v993
      %1020 = vmatpush1.bf16.msra.mxu0 %v992
      %1021 = vmatprep.subr.bf16.mxu0 %v990
      %1022 = vmatpush1.bf16.msra.mxu0 %v989
      %1023 = vmatprep.subr.bf16.mxu0 %v987
      %1024 = vmatpush1.bf16.msra.mxu0 %v986
      %1025 = vmatprep.subr.bf16.mxu0 %v984
      %1026 = vmatpush1.bf16.msra.mxu0 %v983
      %1027 = vmatprep.subr.bf16.mxu0 %v981
      %1028 = vmatpush1.bf16.msra.mxu0 %v980
      %1029 = vmatprep.subr.bf16.mxu0 %v978
      %1030 = vmatpush1.bf16.msra.mxu0 %v977
      %1031 = vmatprep.subr.bf16.mxu0 %v975
      %1032 = vmatpush1.bf16.msra.mxu0 %v974
      %1033 = vmatprep.subr.bf16.mxu0 %v972
      %1034 = vmatpush1.bf16.msra.mxu0 %v971
      %1035 = vmatprep.subr.bf16.mxu0 0
      %1036 = vmatpush2.bf16.msra.mxu0 0
      %1037 = vmatprep.subr.bf16.mxu0 0
      %1038 = vmatpush2.bf16.msra.mxu0 0
      %1039 = vmatprep.subr.bf16.mxu0 0
      %1040 = vmatpush2.bf16.msra.mxu0 0
      %1041 = vmatprep.subr.bf16.mxu0 0
      %1042 = vmatpush2.bf16.msra.mxu0 0
      %1043 = vmatprep.subr.bf16.mxu0 0
      %1044 = vmatpush2.bf16.msra.mxu0 0
      %1045 = vmatprep.subr.bf16.mxu0 0
      %1046 = vmatpush2.bf16.msra.mxu0 0
      %1047 = vmatprep.subr.bf16.mxu0 0
      %1048 = vmatpush2.bf16.msra.mxu0 0
      %1049 = vmatprep.subr.bf16.mxu0 0
      %1050 = vmatpush2.bf16.msra.mxu0 0
      %1051 = vmatprep.mubr.bf16.mxu0 0
      %1052 = vmatmul.mubr.bf16.gmra.mxu0 %v842
      %v1053 = vpop.f32.mrf.mxu0
      %v1054 = vadd.f32 %v879, %v1053
      %v1055 = vpop.f32.mrf.mxu0
      %v1056 = vadd.f32 %v883, %v1055
      %v1057 = vpop.f32.mrf.mxu0
      %v1058 = vpop.f32.mrf.mxu0
      %1059 = vdwg.mxu0
      %1060 = vmatprep.subr.bf16.mxu0 0
      %1061 = vmatpush1.bf16.msra.mxu0 %v994
      %1062 = vmatprep.subr.bf16.mxu0 0
      %1063 = vmatpush1.bf16.msra.mxu0 %v991
      %1064 = vmatprep.subr.bf16.mxu0 0
      %1065 = vmatpush1.bf16.msra.mxu0 %v988
      %1066 = vmatprep.subr.bf16.mxu0 0
      %1067 = vmatpush1.bf16.msra.mxu0 %v985
      %1068 = vmatprep.subr.bf16.mxu0 0
      %1069 = vmatpush1.bf16.msra.mxu0 %v982
      %1070 = vmatprep.subr.bf16.mxu0 0
      %1071 = vmatpush1.bf16.msra.mxu0 %v979
      %1072 = vmatprep.subr.bf16.mxu0 0
      %1073 = vmatpush1.bf16.msra.mxu0 %v976
      %1074 = vmatprep.subr.bf16.mxu0 0
      %1075 = vmatpush1.bf16.msra.mxu0 %v973
      %1076 = vmatprep.subr.bf16.mxu0 0
      %1077 = vmatpush2.bf16.msra.mxu0 0
      %1078 = vmatprep.subr.bf16.mxu0 0
      %1079 = vmatpush2.bf16.msra.mxu0 0
      %1080 = vmatprep.subr.bf16.mxu0 0
      %1081 = vmatpush2.bf16.msra.mxu0 0
      %1082 = vmatprep.subr.bf16.mxu0 0
      %1083 = vmatpush2.bf16.msra.mxu0 0
      %1084 = vmatprep.subr.bf16.mxu0 0
      %1085 = vmatpush2.bf16.msra.mxu0 0
      %1086 = vmatprep.subr.bf16.mxu0 0
      %1087 = vmatpush2.bf16.msra.mxu0 0
      %1088 = vmatprep.subr.bf16.mxu0 0
      %1089 = vmatpush2.bf16.msra.mxu0 0
      %1090 = vmatprep.subr.bf16.mxu0 0
      %1091 = vmatpush2.bf16.msra.mxu0 0
      %1092 = vmatprep.mubr.bf16.mxu0 0
      %1093 = vmatmul.mubr.bf16.gmra.mxu0 %v842
      %v1094 = vpop.f32.mrf.mxu0
      %v1095 = vadd.f32 %v887, %v1094
      %v1096 = vpop.f32.mrf.mxu0
      %v1097 = vpop.f32.mrf.mxu0
      %v1098 = vpop.f32.mrf.mxu0
      %1099 = vdwg.mxu0
      %v1100 = vpack.c.bf16 %v1054, %v1054
      %v1101 = vpack.c.bf16 %v1056, %v1056
      %v1102 = vpack.c.bf16 %v1095, %v1095
      %v1104 = vsel %vm764, %v1100, 0
      %v1107 = vsel %vm764, %v1101, 0
      %1109 = vmatprep.subr.bf16.mxu0 0
      %1110 = vmatpush1.bf16.xpose.msra.mxu0 0
      %1111 = vmatprep.subr.bf16.mxu0 0
      %1112 = vmatpush1.bf16.xpose.msra.mxu0 0
      %1113 = vmatprep.subr.bf16.mxu0 0
      %1114 = vmatpush1.bf16.xpose.msra.mxu0 0
      %1115 = vmatprep.subr.bf16.mxu0 0
      %1116 = vmatpush1.bf16.xpose.msra.mxu0 0
      %1117 = vmatprep.subr.bf16.mxu0 0
      %1118 = vmatpush1.bf16.xpose.msra.mxu0 0
      %1119 = vmatprep.subr.bf16.mxu0 0
      %1120 = vmatpush1.bf16.xpose.msra.mxu0 0
      %1121 = vmatprep.subr.bf16.mxu0 0
      %1122 = vmatpush1.bf16.xpose.msra.mxu0 0
      %1123 = vmatprep.subr.bf16.mxu0 0
      %1124 = vmatpush1.bf16.xpose.msra.mxu0 %v1107
      %1125 = vmatprep.subr.bf16.mxu0 0
      %1126 = vmatpush2.bf16.xpose.msra.mxu0 0
      %1127 = vmatprep.subr.bf16.mxu0 0
      %1128 = vmatpush2.bf16.xpose.msra.mxu0 0
      %1129 = vmatprep.subr.bf16.mxu0 0
      %1130 = vmatpush2.bf16.xpose.msra.mxu0 0
      %1131 = vmatprep.subr.bf16.mxu0 0
      %1132 = vmatpush2.bf16.xpose.msra.mxu0 0
      %1133 = vmatprep.subr.bf16.mxu0 0
      %1134 = vmatpush2.bf16.xpose.msra.mxu0 0
      %1135 = vmatprep.subr.bf16.mxu0 0
      %1136 = vmatpush2.bf16.xpose.msra.mxu0 0
      %1137 = vmatprep.subr.bf16.mxu0 0
      %1138 = vmatpush2.bf16.xpose.msra.mxu0 0
      %1139 = vmatprep.subr.bf16.mxu0 0
      %1140 = vmatpush2.bf16.xpose.msra.mxu0 0
      %1141 = vmatprep.mubr.bf16.mxu0 0
      %1142 = vmatmul.mubr.bf16.gmra.mxu0 %v1104
      %v1143 = vpop.f32.mrf.mxu0
      %v1144 = vadd.f32 0.0, %v1143
      %v1145 = vpop.f32.mrf.mxu0
      %v1146 = vpop.f32.mrf.mxu0
      %v1147 = vpop.f32.mrf.mxu0
      %1148 = vdwg.mxu0
      %vm1149 = vcmask 27648
      %v1150 = vsel %vm1149, %v1144, -inf
      %1151 = vmax.xlane.f32.xlu0 %v1150
      %v1152 = vpop.xlane.xlu0 %1151
      %v1153 = vsub.f32 %v1144, %v1152
      %v1154 = vmul.f32 %v1153, 1.442695
      %v1155 = vpow.pop %v1154
      %v1156 = vsel %vm1149, %v1155, 0.0
      %1157 = vadd.xlane.f32.xlu0 %v1156
      %v1158 = vpop.xlane.xlu0 %1157
      %v1159 = vrcp.pop %v1158
      %v1160 = vmul.f32 %v1155, %v1159
      %v1161 = vpack.c.bf16 %v1160, %v1160
      %vm1162 = vcmask 31744
      %v1164 = vsel %vm1162, %v1161, 0
      %vm1166 = vcmask 1041408
      %v1168 = vsel %vm1166, %v1102, 0
      %1170 = vmatprep.subr.bf16.mxu0 0
      %1171 = vmatpush1.bf16.msra.mxu0 0
      %1172 = vmatprep.subr.bf16.mxu0 0
      %1173 = vmatpush1.bf16.msra.mxu0 0
      %1174 = vmatprep.subr.bf16.mxu0 0
      %1175 = vmatpush1.bf16.msra.mxu0 0
      %1176 = vmatprep.subr.bf16.mxu0 0
      %1177 = vmatpush1.bf16.msra.mxu0 0
      %1178 = vmatprep.subr.bf16.mxu0 0
      %1179 = vmatpush1.bf16.msra.mxu0 0
      %1180 = vmatprep.subr.bf16.mxu0 0
      %1181 = vmatpush1.bf16.msra.mxu0 0
      %1182 = vmatprep.subr.bf16.mxu0 0
      %1183 = vmatpush1.bf16.msra.mxu0 0
      %1184 = vmatprep.subr.bf16.mxu0 0
      %1185 = vmatpush1.bf16.msra.mxu0 %v1168
      %1186 = vmatprep.subr.bf16.mxu0 0
      %1187 = vmatpush2.bf16.msra.mxu0 0
      %1188 = vmatprep.subr.bf16.mxu0 0
      %1189 = vmatpush2.bf16.msra.mxu0 0
      %1190 = vmatprep.subr.bf16.mxu0 0
      %1191 = vmatpush2.bf16.msra.mxu0 0
      %1192 = vmatprep.subr.bf16.mxu0 0
      %1193 = vmatpush2.bf16.msra.mxu0 0
      %1194 = vmatprep.subr.bf16.mxu0 0
      %1195 = vmatpush2.bf16.msra.mxu0 0
      %1196 = vmatprep.subr.bf16.mxu0 0
      %1197 = vmatpush2.bf16.msra.mxu0 0
      %1198 = vmatprep.subr.bf16.mxu0 0
      %1199 = vmatpush2.bf16.msra.mxu0 0
      %1200 = vmatprep.subr.bf16.mxu0 0
      %1201 = vmatpush2.bf16.msra.mxu0 0
      %1202 = vmatprep.mubr.bf16.mxu0 0
      %1203 = vmatmul.mubr.bf16.gmra.mxu0 %v1164
      %v1204 = vpop.f32.mrf.mxu0
      %v1205 = vadd.f32 0.0, %v1204
      %v1206 = vpop.f32.mrf.mxu0
      %v1207 = vpop.f32.mrf.mxu0
      %v1208 = vpop.f32.mrf.mxu0
      %1209 = vdwg.mxu0
      %1211 = vrot.lane.b32.xlu0 %v1100, 64
      %v1212 = vpop.permute.xlu0 %1211
      %1214 = vrot.lane.b32.xlu0 %v1101, 64
      %v1215 = vpop.permute.xlu0 %1214
      %v1217 = vsel %vm764, %v1212, 0
      %v1220 = vsel %vm764, %v1215, 0
      %1222 = vmatprep.subr.bf16.mxu0 0
      %1223 = vmatpush1.bf16.xpose.msra.mxu0 0
      %1224 = vmatprep.subr.bf16.mxu0 0
      %1225 = vmatpush1.bf16.xpose.msra.mxu0 0
      %1226 = vmatprep.subr.bf16.mxu0 0
      %1227 = vmatpush1.bf16.xpose.msra.mxu0 0
      %1228 = vmatprep.subr.bf16.mxu0 0
      %1229 = vmatpush1.bf16.xpose.msra.mxu0 0
      %1230 = vmatprep.subr.bf16.mxu0 0
      %1231 = vmatpush1.bf16.xpose.msra.mxu0 0
      %1232 = vmatprep.subr.bf16.mxu0 0
      %1233 = vmatpush1.bf16.xpose.msra.mxu0 0
      %1234 = vmatprep.subr.bf16.mxu0 0
      %1235 = vmatpush1.bf16.xpose.msra.mxu0 0
      %1236 = vmatprep.subr.bf16.mxu0 0
      %1237 = vmatpush1.bf16.xpose.msra.mxu0 %v1220
      %1238 = vmatprep.subr.bf16.mxu0 0
      %1239 = vmatpush2.bf16.xpose.msra.mxu0 0
      %1240 = vmatprep.subr.bf16.mxu0 0
      %1241 = vmatpush2.bf16.xpose.msra.mxu0 0
      %1242 = vmatprep.subr.bf16.mxu0 0
      %1243 = vmatpush2.bf16.xpose.msra.mxu0 0
      %1244 = vmatprep.subr.bf16.mxu0 0
      %1245 = vmatpush2.bf16.xpose.msra.mxu0 0
      %1246 = vmatprep.subr.bf16.mxu0 0
      %1247 = vmatpush2.bf16.xpose.msra.mxu0 0
      %1248 = vmatprep.subr.bf16.mxu0 0
      %1249 = vmatpush2.bf16.xpose.msra.mxu0 0
      %1250 = vmatprep.subr.bf16.mxu0 0
      %1251 = vmatpush2.bf16.xpose.msra.mxu0 0
      %1252 = vmatprep.subr.bf16.mxu0 0
      %1253 = vmatpush2.bf16.xpose.msra.mxu0 0
      %1254 = vmatprep.mubr.bf16.mxu0 0
      %1255 = vmatmul.mubr.bf16.gmra.mxu0 %v1217
      %v1256 = vpop.f32.mrf.mxu0
      %v1257 = vadd.f32 0.0, %v1256
      %v1258 = vpop.f32.mrf.mxu0
      %v1259 = vpop.f32.mrf.mxu0
      %v1260 = vpop.f32.mrf.mxu0
      %1261 = vdwg.mxu0
      %v1262 = vsel %vm1149, %v1257, -inf
      %1263 = vmax.xlane.f32.xlu0 %v1262
      %v1264 = vpop.xlane.xlu0 %1263
      %v1265 = vsub.f32 %v1257, %v1264
      %v1266 = vmul.f32 %v1265, 1.442695
      %v1267 = vpow.pop %v1266
      %v1268 = vsel %vm1149, %v1267, 0.0
      %1269 = vadd.xlane.f32.xlu0 %v1268
      %v1270 = vpop.xlane.xlu0 %1269
      %v1271 = vrcp.pop %v1270
      %v1272 = vmul.f32 %v1267, %v1271
      %v1273 = vpack.c.bf16 %v1272, %v1272
      %1275 = vrot.lane.b32.xlu0 %v1102, 64
      %v1276 = vpop.permute.xlu0 %1275
      %v1278 = vsel %vm1162, %v1273, 0
      %v1281 = vsel %vm1166, %v1276, 0
      %1283 = vmatprep.subr.bf16.mxu0 0
      %1284 = vmatpush1.bf16.msra.mxu0 0
      %1285 = vmatprep.subr.bf16.mxu0 0
      %1286 = vmatpush1.bf16.msra.mxu0 0
      %1287 = vmatprep.subr.bf16.mxu0 0
      %1288 = vmatpush1.bf16.msra.mxu0 0
      %1289 = vmatprep.subr.bf16.mxu0 0
      %1290 = vmatpush1.bf16.msra.mxu0 0
      %1291 = vmatprep.subr.bf16.mxu0 0
      %1292 = vmatpush1.bf16.msra.mxu0 0
      %1293 = vmatprep.subr.bf16.mxu0 0
      %1294 = vmatpush1.bf16.msra.mxu0 0
      %1295 = vmatprep.subr.bf16.mxu0 0
      %1296 = vmatpush1.bf16.msra.mxu0 0
      %1297 = vmatprep.subr.bf16.mxu0 0
      %1298 = vmatpush1.bf16.msra.mxu0 %v1281
      %1299 = vmatprep.subr.bf16.mxu0 0
      %1300 = vmatpush2.bf16.msra.mxu0 0
      %1301 = vmatprep.subr.bf16.mxu0 0
      %1302 = vmatpush2.bf16.msra.mxu0 0
      %1303 = vmatprep.subr.bf16.mxu0 0
      %1304 = vmatpush2.bf16.msra.mxu0 0
      %1305 = vmatprep.subr.bf16.mxu0 0
      %1306 = vmatpush2.bf16.msra.mxu0 0
      %1307 = vmatprep.subr.bf16.mxu0 0
      %1308 = vmatpush2.bf16.msra.mxu0 0
      %1309 = vmatprep.subr.bf16.mxu0 0
      %1310 = vmatpush2.bf16.msra.mxu0 0
      %1311 = vmatprep.subr.bf16.mxu0 0
      %1312 = vmatpush2.bf16.msra.mxu0 0
      %1313 = vmatprep.subr.bf16.mxu0 0
      %1314 = vmatpush2.bf16.msra.mxu0 0
      %1315 = vmatprep.mubr.bf16.mxu0 0
      %1316 = vmatmul.mubr.bf16.gmra.mxu0 %v1278
      %v1317 = vpop.f32.mrf.mxu0
      %v1318 = vadd.f32 0.0, %v1317
      %v1319 = vpop.f32.mrf.mxu0
      %v1320 = vpop.f32.mrf.mxu0
      %v1321 = vpop.f32.mrf.mxu0
      %1322 = vdwg.mxu0
      %1324 = vrot.lane.b32.xlu0 %v1318, 64
      %v1325 = vpop.permute.xlu0 %1324
      %v1327 = vsel %vm764, %v1205, %v1325
      %v1328 = vld [vmem:[%s11] sm:$0x1]
      %v1329 = vpack.c.bf16 %v1327, %v1327
      %v1330 = vld [vmem:[%s10] sm:$0xf]
      %v1331 = vld [vmem:[%s10 + $0x4] sm:$0xf]
      %v1332 = vld [vmem:[%s10 + $0x8] sm:$0xf]
      %v1333 = vld [vmem:[%s10 + $0xc] sm:$0xf]
      %v1334 = vld [vmem:[%s10 + $0x10] sm:$0xf]
      %v1335 = vld [vmem:[%s10 + $0x14] sm:$0xf]
      %v1336 = vld [vmem:[%s10 + $0x18] sm:$0xf]
      %v1337 = vld [vmem:[%s10 + $0x1c] sm:$0xf]
      %v1338 = vld [vmem:[%s10 + $0x20] sm:$0xf]
      %v1339 = vld [vmem:[%s10 + $0x24] sm:$0xf]
      %v1340 = vld [vmem:[%s10 + $0x28] sm:$0xf]
      %v1341 = vld [vmem:[%s10 + $0x2c] sm:$0xf]
      %v1342 = vld [vmem:[%s10 + $0x30] sm:$0xf]
      %v1343 = vld [vmem:[%s10 + $0x34] sm:$0xf]
      %v1344 = vld [vmem:[%s10 + $0x38] sm:$0xf]
      %v1345 = vld [vmem:[%s10 + $0x3c] sm:$0xf]
      %v1347 = vlaneseq
      %v1348 = vshrl.u32 %v1347, 7
      %v1349 = vsub.s32 0, %v1348
      %v1350 = vrot.slane %v1328, %v1349
      %v1368 = vunpack.c.l.b16 %v1330
      %v1369 = vunpack.c.l.b16 %v1331
      %v1370 = vunpack.c.l.b16 %v1332
      %v1371 = vunpack.c.l.b16 %v1333
      %v1372 = vunpack.c.l.b16 %v1334
      %v1373 = vunpack.c.l.b16 %v1335
      %v1374 = vunpack.c.l.b16 %v1336
      %v1375 = vunpack.c.l.b16 %v1337
      %v1376 = vunpack.c.l.b16 %v1338
      %v1377 = vunpack.c.l.b16 %v1339
      %v1378 = vunpack.c.l.b16 %v1340
      %v1379 = vunpack.c.l.b16 %v1341
      %v1380 = vunpack.c.l.b16 %v1342
      %v1381 = vunpack.c.l.b16 %v1343
      %v1382 = vunpack.c.l.b16 %v1344
      %v1383 = vunpack.c.l.b16 %v1345
      %v1384 = vpack.c.b16 %v1369, %v1368
      %v1385 = vpack.c.b16 %v1371, %v1370
      %v1386 = vpack.c.b16 %v1373, %v1372
      %v1387 = vpack.c.b16 %v1375, %v1374
      %v1388 = vpack.c.b16 %v1377, %v1376
      %v1389 = vpack.c.b16 %v1379, %v1378
      %v1390 = vpack.c.b16 %v1381, %v1380
      %v1391 = vpack.c.b16 %v1383, %v1382
      %1400 = vmatprep.subr.bf16.mxu0 0
      %1401 = vmatpush1.bf16.msra.mxu0 %v1391
      %1402 = vmatprep.subr.bf16.mxu0 0
      %1403 = vmatpush1.bf16.msra.mxu0 %v1390
      %1404 = vmatprep.subr.bf16.mxu0 0
      %1405 = vmatpush1.bf16.msra.mxu0 %v1389
      %1406 = vmatprep.subr.bf16.mxu0 0
      %1407 = vmatpush1.bf16.msra.mxu0 %v1388
      %1408 = vmatprep.subr.bf16.mxu0 0
      %1409 = vmatpush1.bf16.msra.mxu0 %v1387
      %1410 = vmatprep.subr.bf16.mxu0 0
      %1411 = vmatpush1.bf16.msra.mxu0 %v1386
      %1412 = vmatprep.subr.bf16.mxu0 0
      %1413 = vmatpush1.bf16.msra.mxu0 %v1385
      %1414 = vmatprep.subr.bf16.mxu0 0
      %1415 = vmatpush1.bf16.msra.mxu0 %v1384
      %1416 = vmatprep.subr.bf16.mxu0 0
      %1417 = vmatpush2.bf16.msra.mxu0 0
      %1418 = vmatprep.subr.bf16.mxu0 0
      %1419 = vmatpush2.bf16.msra.mxu0 0
      %1420 = vmatprep.subr.bf16.mxu0 0
      %1421 = vmatpush2.bf16.msra.mxu0 0
      %1422 = vmatprep.subr.bf16.mxu0 0
      %1423 = vmatpush2.bf16.msra.mxu0 0
      %1424 = vmatprep.subr.bf16.mxu0 0
      %1425 = vmatpush2.bf16.msra.mxu0 0
      %1426 = vmatprep.subr.bf16.mxu0 0
      %1427 = vmatpush2.bf16.msra.mxu0 0
      %1428 = vmatprep.subr.bf16.mxu0 0
      %1429 = vmatpush2.bf16.msra.mxu0 0
      %1430 = vmatprep.subr.bf16.mxu0 0
      %1431 = vmatpush2.bf16.msra.mxu0 0
      %1432 = vmatprep.mubr.bf16.mxu0 0
      %1433 = vmatmul.mubr.bf16.gmra.mxu0 %v1329
      %v1434 = vpop.f32.mrf.mxu0
      %v1435 = vadd.f32 %v1350, %v1434
      %v1436 = vpop.f32.mrf.mxu0
      %v1437 = vpop.f32.mrf.mxu0
      %v1438 = vpop.f32.mrf.mxu0
      %1439 = vdwg.mxu0
      %v1440 = vadd.f32 %v809, %v1435
      %v1441 = vld [vmem:[%s12] sm:$0x1]
      %v1442 = vld [vmem:[%s13] sm:$0x1]
      %v1443 = vsel %vm812, %v1440, 0.0
      %1444 = vadd.xlane.f32.xlu0 %v1443
      %v1445 = vpop.xlane.xlu0 %1444
      %v1446 = vmul.f32 %v1445, %v816
      %v1447 = vsub.f32 %v1440, %v1446
      %v1448 = vmul.f32 %v1447, %v1447
      %v1449 = vsel %vm812, %v1448, 0.0
      %1450 = vadd.xlane.f32.xlu0 %v1449
      %v1451 = vpop.xlane.xlu0 %1450
      %v1452 = vmul.f32 %v1451, %v816
      %v1453 = vadd.f32 %v1452, 1e-06
      %v1454 = vrsqrt.pop %v1453
      %v1455 = vmul.f32 %v1447, %v1454
      %v1457 = vlaneseq
      %v1458 = vshrl.u32 %v1457, 7
      %v1459 = vsub.s32 0, %v1458
      %v1460 = vrot.slane %v1441, %v1459
      %v1462 = vmul.f32 %v1455, %v1460
      %v1464 = vlaneseq
      %v1465 = vshrl.u32 %v1464, 7
      %v1466 = vsub.s32 0, %v1465
      %v1467 = vrot.slane %v1442, %v1466
      %v1469 = vadd.f32 %v1462, %v1467
      %v1470 = vld [vmem:[%s15] sm:$0xf]
      %v1471 = vpack.c.bf16 %v1469, %v1469
      %v1472 = vld [vmem:[%s14] sm:$0xff]
      %v1473 = vld [vmem:[%s14 + $0x8] sm:$0xff]
      %v1474 = vld [vmem:[%s14 + $0x10] sm:$0xff]
      %v1475 = vld [vmem:[%s14 + $0x18] sm:$0xff]
      %v1476 = vld [vmem:[%s14 + $0x20] sm:$0xff]
      %v1477 = vld [vmem:[%s14 + $0x28] sm:$0xff]
      %v1478 = vld [vmem:[%s14 + $0x30] sm:$0xff]
      %v1479 = vld [vmem:[%s14 + $0x38] sm:$0xff]
      %v1480 = vld [vmem:[%s14 + $0x40] sm:$0xff]
      %v1481 = vld [vmem:[%s14 + $0x48] sm:$0xff]
      %v1482 = vld [vmem:[%s14 + $0x50] sm:$0xff]
      %v1483 = vld [vmem:[%s14 + $0x58] sm:$0xff]
      %v1484 = vld [vmem:[%s14 + $0x60] sm:$0xff]
      %v1485 = vld [vmem:[%s14 + $0x68] sm:$0xff]
      %v1486 = vld [vmem:[%s14 + $0x70] sm:$0xff]
      %v1487 = vld [vmem:[%s14 + $0x78] sm:$0xff]
      %v1488 = vld [vmem:[%s14 + $0x80] sm:$0xff]
      %v1489 = vld [vmem:[%s14 + $0x88] sm:$0xff]
      %v1490 = vld [vmem:[%s14 + $0x90] sm:$0xff]
      %v1491 = vld [vmem:[%s14 + $0x98] sm:$0xff]
      %v1492 = vld [vmem:[%s14 + $0xa0] sm:$0xff]
      %v1493 = vld [vmem:[%s14 + $0xa8] sm:$0xff]
      %v1494 = vld [vmem:[%s14 + $0xb0] sm:$0xff]
      %v1495 = vld [vmem:[%s14 + $0xb8] sm:$0xff]
      %v1496 = vld [vmem:[%s14 + $0xc0] sm:$0xff]
      %v1497 = vld [vmem:[%s14 + $0xc8] sm:$0xff]
      %v1498 = vld [vmem:[%s14 + $0xd0] sm:$0xff]
      %v1499 = vld [vmem:[%s14 + $0xd8] sm:$0xff]
      %v1500 = vld [vmem:[%s14 + $0xe0] sm:$0xff]
      %v1501 = vld [vmem:[%s14 + $0xe8] sm:$0xff]
      %v1502 = vld [vmem:[%s14 + $0xf0] sm:$0xff]
      %v1503 = vld [vmem:[%s14 + $0xf8] sm:$0xff]
      %v1505 = vlaneseq
      %v1506 = vshrl.u32 %v1505, 7
      %v1507 = vsub.s32 0, %v1506
      %v1508 = vrot.slane %v1470, %v1507
      %v1509 = vlaneseq
      %v1510 = vshrl.u32 %v1509, 7
      %v1511 = vsub.s32 1, %v1510
      %v1512 = vrot.slane %v1470, %v1511
      %v1513 = vlaneseq
      %v1514 = vshrl.u32 %v1513, 7
      %v1515 = vsub.s32 2, %v1514
      %v1516 = vrot.slane %v1470, %v1515
      %v1517 = vlaneseq
      %v1518 = vshrl.u32 %v1517, 7
      %v1519 = vsub.s32 3, %v1518
      %v1520 = vrot.slane %v1470, %v1519
      %v1557 = vunpack.c.l.b16 %v1472
      %v1558 = vunpack.c.h.b16 %v1472
      %v1559 = vunpack.c.l.b16 %v1473
      %v1560 = vunpack.c.h.b16 %v1473
      %v1561 = vunpack.c.l.b16 %v1474
      %v1562 = vunpack.c.h.b16 %v1474
      %v1563 = vunpack.c.l.b16 %v1475
      %v1564 = vunpack.c.h.b16 %v1475
      %v1565 = vunpack.c.l.b16 %v1476
      %v1566 = vunpack.c.h.b16 %v1476
      %v1567 = vunpack.c.l.b16 %v1477
      %v1568 = vunpack.c.h.b16 %v1477
      %v1569 = vunpack.c.l.b16 %v1478
      %v1570 = vunpack.c.h.b16 %v1478
      %v1571 = vunpack.c.l.b16 %v1479
      %v1572 = vunpack.c.h.b16 %v1479
      %v1573 = vunpack.c.l.b16 %v1480
      %v1574 = vunpack.c.h.b16 %v1480
      %v1575 = vunpack.c.l.b16 %v1481
      %v1576 = vunpack.c.h.b16 %v1481
      %v1577 = vunpack.c.l.b16 %v1482
      %v1578 = vunpack.c.h.b16 %v1482
      %v1579 = vunpack.c.l.b16 %v1483
      %v1580 = vunpack.c.h.b16 %v1483
      %v1581 = vunpack.c.l.b16 %v1484
      %v1582 = vunpack.c.h.b16 %v1484
      %v1583 = vunpack.c.l.b16 %v1485
      %v1584 = vunpack.c.h.b16 %v1485
      %v1585 = vunpack.c.l.b16 %v1486
      %v1586 = vunpack.c.h.b16 %v1486
      %v1587 = vunpack.c.l.b16 %v1487
      %v1588 = vunpack.c.h.b16 %v1487
      %v1589 = vunpack.c.l.b16 %v1488
      %v1590 = vunpack.c.h.b16 %v1488
      %v1591 = vunpack.c.l.b16 %v1489
      %v1592 = vunpack.c.h.b16 %v1489
      %v1593 = vunpack.c.l.b16 %v1490
      %v1594 = vunpack.c.h.b16 %v1490
      %v1595 = vunpack.c.l.b16 %v1491
      %v1596 = vunpack.c.h.b16 %v1491
      %v1597 = vunpack.c.l.b16 %v1492
      %v1598 = vunpack.c.h.b16 %v1492
      %v1599 = vunpack.c.l.b16 %v1493
      %v1600 = vunpack.c.h.b16 %v1493
      %v1601 = vunpack.c.l.b16 %v1494
      %v1602 = vunpack.c.h.b16 %v1494
      %v1603 = vunpack.c.l.b16 %v1495
      %v1604 = vunpack.c.h.b16 %v1495
      %v1605 = vunpack.c.l.b16 %v1496
      %v1606 = vunpack.c.h.b16 %v1496
      %v1607 = vunpack.c.l.b16 %v1497
      %v1608 = vunpack.c.h.b16 %v1497
      %v1609 = vunpack.c.l.b16 %v1498
      %v1610 = vunpack.c.h.b16 %v1498
      %v1611 = vunpack.c.l.b16 %v1499
      %v1612 = vunpack.c.h.b16 %v1499
      %v1613 = vunpack.c.l.b16 %v1500
      %v1614 = vunpack.c.h.b16 %v1500
      %v1615 = vunpack.c.l.b16 %v1501
      %v1616 = vunpack.c.h.b16 %v1501
      %v1617 = vunpack.c.l.b16 %v1502
      %v1618 = vunpack.c.h.b16 %v1502
      %v1619 = vunpack.c.l.b16 %v1503
      %v1620 = vunpack.c.h.b16 %v1503
      %v1621 = vpack.c.b16 %v1561, %v1557
      %v1622 = vpack.c.b16 %v1562, %v1558
      %v1623 = vpack.c.b16 %v1563, %v1559
      %v1624 = vpack.c.b16 %v1564, %v1560
      %v1625 = vpack.c.b16 %v1569, %v1565
      %v1626 = vpack.c.b16 %v1570, %v1566
      %v1627 = vpack.c.b16 %v1571, %v1567
      %v1628 = vpack.c.b16 %v1572, %v1568
      %v1629 = vpack.c.b16 %v1577, %v1573
      %v1630 = vpack.c.b16 %v1578, %v1574
      %v1631 = vpack.c.b16 %v1579, %v1575
      %v1632 = vpack.c.b16 %v1580, %v1576
      %v1633 = vpack.c.b16 %v1585, %v1581
      %v1634 = vpack.c.b16 %v1586, %v1582
      %v1635 = vpack.c.b16 %v1587, %v1583
      %v1636 = vpack.c.b16 %v1588, %v1584
      %v1637 = vpack.c.b16 %v1593, %v1589
      %v1638 = vpack.c.b16 %v1594, %v1590
      %v1639 = vpack.c.b16 %v1595, %v1591
      %v1640 = vpack.c.b16 %v1596, %v1592
      %v1641 = vpack.c.b16 %v1601, %v1597
      %v1642 = vpack.c.b16 %v1602, %v1598
      %v1643 = vpack.c.b16 %v1603, %v1599
      %v1644 = vpack.c.b16 %v1604, %v1600
      %v1645 = vpack.c.b16 %v1609, %v1605
      %v1646 = vpack.c.b16 %v1610, %v1606
      %v1647 = vpack.c.b16 %v1611, %v1607
      %v1648 = vpack.c.b16 %v1612, %v1608
      %v1649 = vpack.c.b16 %v1617, %v1613
      %v1650 = vpack.c.b16 %v1618, %v1614
      %v1651 = vpack.c.b16 %v1619, %v1615
      %v1652 = vpack.c.b16 %v1620, %v1616
      %1685 = vmatprep.subr.bf16.mxu0 %v1650
      %1686 = vmatpush1.bf16.msra.mxu0 %v1649
      %1687 = vmatprep.subr.bf16.mxu0 %v1646
      %1688 = vmatpush1.bf16.msra.mxu0 %v1645
      %1689 = vmatprep.subr.bf16.mxu0 %v1642
      %1690 = vmatpush1.bf16.msra.mxu0 %v1641
      %1691 = vmatprep.subr.bf16.mxu0 %v1638
      %1692 = vmatpush1.bf16.msra.mxu0 %v1637
      %1693 = vmatprep.subr.bf16.mxu0 %v1634
      %1694 = vmatpush1.bf16.msra.mxu0 %v1633
      %1695 = vmatprep.subr.bf16.mxu0 %v1630
      %1696 = vmatpush1.bf16.msra.mxu0 %v1629
      %1697 = vmatprep.subr.bf16.mxu0 %v1626
      %1698 = vmatpush1.bf16.msra.mxu0 %v1625
      %1699 = vmatprep.subr.bf16.mxu0 %v1622
      %1700 = vmatpush1.bf16.msra.mxu0 %v1621
      %1701 = vmatprep.subr.bf16.mxu0 0
      %1702 = vmatpush2.bf16.msra.mxu0 0
      %1703 = vmatprep.subr.bf16.mxu0 0
      %1704 = vmatpush2.bf16.msra.mxu0 0
      %1705 = vmatprep.subr.bf16.mxu0 0
      %1706 = vmatpush2.bf16.msra.mxu0 0
      %1707 = vmatprep.subr.bf16.mxu0 0
      %1708 = vmatpush2.bf16.msra.mxu0 0
      %1709 = vmatprep.subr.bf16.mxu0 0
      %1710 = vmatpush2.bf16.msra.mxu0 0
      %1711 = vmatprep.subr.bf16.mxu0 0
      %1712 = vmatpush2.bf16.msra.mxu0 0
      %1713 = vmatprep.subr.bf16.mxu0 0
      %1714 = vmatpush2.bf16.msra.mxu0 0
      %1715 = vmatprep.subr.bf16.mxu0 0
      %1716 = vmatpush2.bf16.msra.mxu0 0
      %1717 = vmatprep.mubr.bf16.mxu0 0
      %1718 = vmatmul.mubr.bf16.gmra.mxu0 %v1471
      %v1719 = vpop.f32.mrf.mxu0
      %v1720 = vadd.f32 %v1508, %v1719
      %v1721 = vpop.f32.mrf.mxu0
      %v1722 = vadd.f32 %v1512, %v1721
      %v1723 = vpop.f32.mrf.mxu0
      %v1724 = vpop.f32.mrf.mxu0
      %1725 = vdwg.mxu0
      %1726 = vmatprep.subr.bf16.mxu0 %v1652
      %1727 = vmatpush1.bf16.msra.mxu0 %v1651
      %1728 = vmatprep.subr.bf16.mxu0 %v1648
      %1729 = vmatpush1.bf16.msra.mxu0 %v1647
      %1730 = vmatprep.subr.bf16.mxu0 %v1644
      %1731 = vmatpush1.bf16.msra.mxu0 %v1643
      %1732 = vmatprep.subr.bf16.mxu0 %v1640
      %1733 = vmatpush1.bf16.msra.mxu0 %v1639
      %1734 = vmatprep.subr.bf16.mxu0 %v1636
      %1735 = vmatpush1.bf16.msra.mxu0 %v1635
      %1736 = vmatprep.subr.bf16.mxu0 %v1632
      %1737 = vmatpush1.bf16.msra.mxu0 %v1631
      %1738 = vmatprep.subr.bf16.mxu0 %v1628
      %1739 = vmatpush1.bf16.msra.mxu0 %v1627
      %1740 = vmatprep.subr.bf16.mxu0 %v1624
      %1741 = vmatpush1.bf16.msra.mxu0 %v1623
      %1742 = vmatprep.subr.bf16.mxu0 0
      %1743 = vmatpush2.bf16.msra.mxu0 0
      %1744 = vmatprep.subr.bf16.mxu0 0
      %1745 = vmatpush2.bf16.msra.mxu0 0
      %1746 = vmatprep.subr.bf16.mxu0 0
      %1747 = vmatpush2.bf16.msra.mxu0 0
      %1748 = vmatprep.subr.bf16.mxu0 0
      %1749 = vmatpush2.bf16.msra.mxu0 0
      %1750 = vmatprep.subr.bf16.mxu0 0
      %1751 = vmatpush2.bf16.msra.mxu0 0
      %1752 = vmatprep.subr.bf16.mxu0 0
      %1753 = vmatpush2.bf16.msra.mxu0 0
      %1754 = vmatprep.subr.bf16.mxu0 0
      %1755 = vmatpush2.bf16.msra.mxu0 0
      %1756 = vmatprep.subr.bf16.mxu0 0
      %1757 = vmatpush2.bf16.msra.mxu0 0
      %1758 = vmatprep.mubr.bf16.mxu0 0
      %1759 = vmatmul.mubr.bf16.gmra.mxu0 %v1471
      %v1760 = vpop.f32.mrf.mxu0
      %v1761 = vadd.f32 %v1516, %v1760
      %v1762 = vpop.f32.mrf.mxu0
      %v1763 = vadd.f32 %v1520, %v1762
      %v1764 = vpop.f32.mrf.mxu0
      %v1765 = vpop.f32.mrf.mxu0
      %1766 = vdwg.mxu0
      %v1767 = vmul.f32 %v1720, %v1720
      %v1768 = vmul.f32 %v1722, %v1722
      %v1769 = vmul.f32 %v1761, %v1761
      %v1770 = vmul.f32 %v1763, %v1763
      %v1771 = vmul.f32 %v1720, %v1767
      %v1772 = vmul.f32 %v1722, %v1768
      %v1773 = vmul.f32 %v1761, %v1769
      %v1774 = vmul.f32 %v1763, %v1770
      %v1775 = vmul.f32 %v1771, 0.044715
      %v1776 = vmul.f32 %v1772, 0.044715
      %v1777 = vmul.f32 %v1773, 0.044715
      %v1778 = vmul.f32 %v1774, 0.044715
      %v1779 = vadd.f32 %v1720, %v1775
      %v1780 = vadd.f32 %v1722, %v1776
      %v1781 = vadd.f32 %v1761, %v1777
      %v1782 = vadd.f32 %v1763, %v1778
      %v1783 = vmul.f32 %v1779, 0.7978846
      %v1784 = vmul.f32 %v1780, 0.7978846
      %v1785 = vmul.f32 %v1781, 0.7978846
      %v1786 = vmul.f32 %v1782, 0.7978846
      %v1787 = vtanh.pop %v1783
      %v1788 = vtanh.pop %v1784
      %v1789 = vtanh.pop %v1785
      %v1790 = vtanh.pop %v1786
      %v1791 = vadd.f32 %v1787, 1.0
      %v1792 = vadd.f32 %v1788, 1.0
      %v1793 = vadd.f32 %v1789, 1.0
      %v1794 = vadd.f32 %v1790, 1.0
      %v1795 = vmul.f32 %v1791, 0.5
      %v1796 = vmul.f32 %v1792, 0.5
      %v1797 = vmul.f32 %v1793, 0.5
      %v1798 = vmul.f32 %v1794, 0.5
      %v1799 = vmul.f32 %v1720, %v1795
      %v1800 = vmul.f32 %v1722, %v1796
      %v1801 = vmul.f32 %v1761, %v1797
      %v1802 = vmul.f32 %v1763, %v1798
      %v1803 = vld [vmem:[%s17] sm:$0x1]
      %v1804 = vpack.c.bf16 %v1799, %v1799
      %v1805 = vpack.c.bf16 %v1800, %v1800
      %v1806 = vpack.c.bf16 %v1801, %v1801
      %v1807 = vpack.c.bf16 %v1802, %v1802
      %v1808 = vld [vmem:[%s16] sm:$0xf]
      %v1809 = vld [vmem:[%s16 + $0x4] sm:$0xf]
      %v1810 = vld [vmem:[%s16 + $0x8] sm:$0xf]
      %v1811 = vld [vmem:[%s16 + $0xc] sm:$0xf]
      %v1812 = vld [vmem:[%s16 + $0x10] sm:$0xf]
      %v1813 = vld [vmem:[%s16 + $0x14] sm:$0xf]
      %v1814 = vld [vmem:[%s16 + $0x18] sm:$0xf]
      %v1815 = vld [vmem:[%s16 + $0x1c] sm:$0xf]
      %v1816 = vld [vmem:[%s16 + $0x20] sm:$0xf]
      %v1817 = vld [vmem:[%s16 + $0x24] sm:$0xf]
      %v1818 = vld [vmem:[%s16 + $0x28] sm:$0xf]
      %v1819 = vld [vmem:[%s16 + $0x2c] sm:$0xf]
      %v1820 = vld [vmem:[%s16 + $0x30] sm:$0xf]
      %v1821 = vld [vmem:[%s16 + $0x34] sm:$0xf]
      %v1822 = vld [vmem:[%s16 + $0x38] sm:$0xf]
      %v1823 = vld [vmem:[%s16 + $0x3c] sm:$0xf]
      %v1824 = vld [vmem:[%s16 + $0x40] sm:$0xf]
      %v1825 = vld [vmem:[%s16 + $0x44] sm:$0xf]
      %v1826 = vld [vmem:[%s16 + $0x48] sm:$0xf]
      %v1827 = vld [vmem:[%s16 + $0x4c] sm:$0xf]
      %v1828 = vld [vmem:[%s16 + $0x50] sm:$0xf]
      %v1829 = vld [vmem:[%s16 + $0x54] sm:$0xf]
      %v1830 = vld [vmem:[%s16 + $0x58] sm:$0xf]
      %v1831 = vld [vmem:[%s16 + $0x5c] sm:$0xf]
      %v1832 = vld [vmem:[%s16 + $0x60] sm:$0xf]
      %v1833 = vld [vmem:[%s16 + $0x64] sm:$0xf]
      %v1834 = vld [vmem:[%s16 + $0x68] sm:$0xf]
      %v1835 = vld [vmem:[%s16 + $0x6c] sm:$0xf]
      %v1836 = vld [vmem:[%s16 + $0x70] sm:$0xf]
      %v1837 = vld [vmem:[%s16 + $0x74] sm:$0xf]
      %v1838 = vld [vmem:[%s16 + $0x78] sm:$0xf]
      %v1839 = vld [vmem:[%s16 + $0x7c] sm:$0xf]
      %v1840 = vld [vmem:[%s16 + $0x80] sm:$0xf]
      %v1841 = vld [vmem:[%s16 + $0x84] sm:$0xf]
      %v1842 = vld [vmem:[%s16 + $0x88] sm:$0xf]
      %v1843 = vld [vmem:[%s16 + $0x8c] sm:$0xf]
      %v1844 = vld [vmem:[%s16 + $0x90] sm:$0xf]
      %v1845 = vld [vmem:[%s16 + $0x94] sm:$0xf]
      %v1846 = vld [vmem:[%s16 + $0x98] sm:$0xf]
      %v1847 = vld [vmem:[%s16 + $0x9c] sm:$0xf]
      %v1848 = vld [vmem:[%s16 + $0xa0] sm:$0xf]
      %v1849 = vld [vmem:[%s16 + $0xa4] sm:$0xf]
      %v1850 = vld [vmem:[%s16 + $0xa8] sm:$0xf]
      %v1851 = vld [vmem:[%s16 + $0xac] sm:$0xf]
      %v1852 = vld [vmem:[%s16 + $0xb0] sm:$0xf]
      %v1853 = vld [vmem:[%s16 + $0xb4] sm:$0xf]
      %v1854 = vld [vmem:[%s16 + $0xb8] sm:$0xf]
      %v1855 = vld [vmem:[%s16 + $0xbc] sm:$0xf]
      %v1856 = vld [vmem:[%s16 + $0xc0] sm:$0xf]
      %v1857 = vld [vmem:[%s16 + $0xc4] sm:$0xf]
      %v1858 = vld [vmem:[%s16 + $0xc8] sm:$0xf]
      %v1859 = vld [vmem:[%s16 + $0xcc] sm:$0xf]
      %v1860 = vld [vmem:[%s16 + $0xd0] sm:$0xf]
      %v1861 = vld [vmem:[%s16 + $0xd4] sm:$0xf]
      %v1862 = vld [vmem:[%s16 + $0xd8] sm:$0xf]
      %v1863 = vld [vmem:[%s16 + $0xdc] sm:$0xf]
      %v1864 = vld [vmem:[%s16 + $0xe0] sm:$0xf]
      %v1865 = vld [vmem:[%s16 + $0xe4] sm:$0xf]
      %v1866 = vld [vmem:[%s16 + $0xe8] sm:$0xf]
      %v1867 = vld [vmem:[%s16 + $0xec] sm:$0xf]
      %v1868 = vld [vmem:[%s16 + $0xf0] sm:$0xf]
      %v1869 = vld [vmem:[%s16 + $0xf4] sm:$0xf]
      %v1870 = vld [vmem:[%s16 + $0xf8] sm:$0xf]
      %v1871 = vld [vmem:[%s16 + $0xfc] sm:$0xf]
      %v1873 = vlaneseq
      %v1874 = vshrl.u32 %v1873, 7
      %v1875 = vsub.s32 0, %v1874
      %v1876 = vrot.slane %v1803, %v1875
      %v1942 = vunpack.c.l.b16 %v1808
      %v1943 = vunpack.c.l.b16 %v1809
      %v1944 = vunpack.c.l.b16 %v1810
      %v1945 = vunpack.c.l.b16 %v1811
      %v1946 = vunpack.c.l.b16 %v1812
      %v1947 = vunpack.c.l.b16 %v1813
      %v1948 = vunpack.c.l.b16 %v1814
      %v1949 = vunpack.c.l.b16 %v1815
      %v1950 = vunpack.c.l.b16 %v1816
      %v1951 = vunpack.c.l.b16 %v1817
      %v1952 = vunpack.c.l.b16 %v1818
      %v1953 = vunpack.c.l.b16 %v1819
      %v1954 = vunpack.c.l.b16 %v1820
      %v1955 = vunpack.c.l.b16 %v1821
      %v1956 = vunpack.c.l.b16 %v1822
      %v1957 = vunpack.c.l.b16 %v1823
      %v1958 = vunpack.c.l.b16 %v1824
      %v1959 = vunpack.c.l.b16 %v1825
      %v1960 = vunpack.c.l.b16 %v1826
      %v1961 = vunpack.c.l.b16 %v1827
      %v1962 = vunpack.c.l.b16 %v1828
      %v1963 = vunpack.c.l.b16 %v1829
      %v1964 = vunpack.c.l.b16 %v1830
      %v1965 = vunpack.c.l.b16 %v1831
      %v1966 = vunpack.c.l.b16 %v1832
      %v1967 = vunpack.c.l.b16 %v1833
      %v1968 = vunpack.c.l.b16 %v1834
      %v1969 = vunpack.c.l.b16 %v1835
      %v1970 = vunpack.c.l.b16 %v1836
      %v1971 = vunpack.c.l.b16 %v1837
      %v1972 = vunpack.c.l.b16 %v1838
      %v1973 = vunpack.c.l.b16 %v1839
      %v1974 = vunpack.c.l.b16 %v1840
      %v1975 = vunpack.c.l.b16 %v1841
      %v1976 = vunpack.c.l.b16 %v1842
      %v1977 = vunpack.c.l.b16 %v1843
      %v1978 = vunpack.c.l.b16 %v1844
      %v1979 = vunpack.c.l.b16 %v1845
      %v1980 = vunpack.c.l.b16 %v1846
      %v1981 = vunpack.c.l.b16 %v1847
      %v1982 = vunpack.c.l.b16 %v1848
      %v1983 = vunpack.c.l.b16 %v1849
      %v1984 = vunpack.c.l.b16 %v1850
      %v1985 = vunpack.c.l.b16 %v1851
      %v1986 = vunpack.c.l.b16 %v1852
      %v1987 = vunpack.c.l.b16 %v1853
      %v1988 = vunpack.c.l.b16 %v1854
      %v1989 = vunpack.c.l.b16 %v1855
      %v1990 = vunpack.c.l.b16 %v1856
      %v1991 = vunpack.c.l.b16 %v1857
      %v1992 = vunpack.c.l.b16 %v1858
      %v1993 = vunpack.c.l.b16 %v1859
      %v1994 = vunpack.c.l.b16 %v1860
      %v1995 = vunpack.c.l.b16 %v1861
      %v1996 = vunpack.c.l.b16 %v1862
      %v1997 = vunpack.c.l.b16 %v1863
      %v1998 = vunpack.c.l.b16 %v1864
      %v1999 = vunpack.c.l.b16 %v1865
      %v2000 = vunpack.c.l.b16 %v1866
      %v2001 = vunpack.c.l.b16 %v1867
      %v2002 = vunpack.c.l.b16 %v1868
      %v2003 = vunpack.c.l.b16 %v1869
      %v2004 = vunpack.c.l.b16 %v1870
      %v2005 = vunpack.c.l.b16 %v1871
      %v2006 = vpack.c.b16 %v1943, %v1942
      %v2007 = vpack.c.b16 %v1945, %v1944
      %v2008 = vpack.c.b16 %v1947, %v1946
      %v2009 = vpack.c.b16 %v1949, %v1948
      %v2010 = vpack.c.b16 %v1951, %v1950
      %v2011 = vpack.c.b16 %v1953, %v1952
      %v2012 = vpack.c.b16 %v1955, %v1954
      %v2013 = vpack.c.b16 %v1957, %v1956
      %v2014 = vpack.c.b16 %v1959, %v1958
      %v2015 = vpack.c.b16 %v1961, %v1960
      %v2016 = vpack.c.b16 %v1963, %v1962
      %v2017 = vpack.c.b16 %v1965, %v1964
      %v2018 = vpack.c.b16 %v1967, %v1966
      %v2019 = vpack.c.b16 %v1969, %v1968
      %v2020 = vpack.c.b16 %v1971, %v1970
      %v2021 = vpack.c.b16 %v1973, %v1972
      %v2022 = vpack.c.b16 %v1975, %v1974
      %v2023 = vpack.c.b16 %v1977, %v1976
      %v2024 = vpack.c.b16 %v1979, %v1978
      %v2025 = vpack.c.b16 %v1981, %v1980
      %v2026 = vpack.c.b16 %v1983, %v1982
      %v2027 = vpack.c.b16 %v1985, %v1984
      %v2028 = vpack.c.b16 %v1987, %v1986
      %v2029 = vpack.c.b16 %v1989, %v1988
      %v2030 = vpack.c.b16 %v1991, %v1990
      %v2031 = vpack.c.b16 %v1993, %v1992
      %v2032 = vpack.c.b16 %v1995, %v1994
      %v2033 = vpack.c.b16 %v1997, %v1996
      %v2034 = vpack.c.b16 %v1999, %v1998
      %v2035 = vpack.c.b16 %v2001, %v2000
      %v2036 = vpack.c.b16 %v2003, %v2002
      %v2037 = vpack.c.b16 %v2005, %v2004
      %2070 = vmatprep.subr.bf16.mxu0 0
      %2071 = vmatpush1.bf16.msra.mxu0 %v2013
      %2072 = vmatprep.subr.bf16.mxu0 0
      %2073 = vmatpush1.bf16.msra.mxu0 %v2012
      %2074 = vmatprep.subr.bf16.mxu0 0
      %2075 = vmatpush1.bf16.msra.mxu0 %v2011
      %2076 = vmatprep.subr.bf16.mxu0 0
      %2077 = vmatpush1.bf16.msra.mxu0 %v2010
      %2078 = vmatprep.subr.bf16.mxu0 0
      %2079 = vmatpush1.bf16.msra.mxu0 %v2009
      %2080 = vmatprep.subr.bf16.mxu0 0
      %2081 = vmatpush1.bf16.msra.mxu0 %v2008
      %2082 = vmatprep.subr.bf16.mxu0 0
      %2083 = vmatpush1.bf16.msra.mxu0 %v2007
      %2084 = vmatprep.subr.bf16.mxu0 0
      %2085 = vmatpush1.bf16.msra.mxu0 %v2006
      %2086 = vmatprep.subr.bf16.mxu0 0
      %2087 = vmatpush2.bf16.msra.mxu0 %v2021
      %2088 = vmatprep.subr.bf16.mxu0 0
      %2089 = vmatpush2.bf16.msra.mxu0 %v2020
      %2090 = vmatprep.subr.bf16.mxu0 0
      %2091 = vmatpush2.bf16.msra.mxu0 %v2019
      %2092 = vmatprep.subr.bf16.mxu0 0
      %2093 = vmatpush2.bf16.msra.mxu0 %v2018
      %2094 = vmatprep.subr.bf16.mxu0 0
      %2095 = vmatpush2.bf16.msra.mxu0 %v2017
      %2096 = vmatprep.subr.bf16.mxu0 0
      %2097 = vmatpush2.bf16.msra.mxu0 %v2016
      %2098 = vmatprep.subr.bf16.mxu0 0
      %2099 = vmatpush2.bf16.msra.mxu0 %v2015
      %2100 = vmatprep.subr.bf16.mxu0 0
      %2101 = vmatpush2.bf16.msra.mxu0 %v2014
      %2102 = vmatprep.mubr.bf16.mxu0 %v1805
      %2103 = vmatmul.mubr.bf16.gmra.mxu0 %v1804
      %v2104 = vpop.f32.mrf.mxu0
      %v2105 = vadd.f32 %v1876, %v2104
      %v2106 = vpop.f32.mrf.mxu0
      %v2107 = vpop.f32.mrf.mxu0
      %v2108 = vpop.f32.mrf.mxu0
      %2109 = vdwg.mxu0
      %2110 = vmatprep.subr.bf16.mxu0 0
      %2111 = vmatpush1.bf16.msra.mxu0 %v2029
      %2112 = vmatprep.subr.bf16.mxu0 0
      %2113 = vmatpush1.bf16.msra.mxu0 %v2028
      %2114 = vmatprep.subr.bf16.mxu0 0
      %2115 = vmatpush1.bf16.msra.mxu0 %v2027
      %2116 = vmatprep.subr.bf16.mxu0 0
      %2117 = vmatpush1.bf16.msra.mxu0 %v2026
      %2118 = vmatprep.subr.bf16.mxu0 0
      %2119 = vmatpush1.bf16.msra.mxu0 %v2025
      %2120 = vmatprep.subr.bf16.mxu0 0
      %2121 = vmatpush1.bf16.msra.mxu0 %v2024
      %2122 = vmatprep.subr.bf16.mxu0 0
      %2123 = vmatpush1.bf16.msra.mxu0 %v2023
      %2124 = vmatprep.subr.bf16.mxu0 0
      %2125 = vmatpush1.bf16.msra.mxu0 %v2022
      %2126 = vmatprep.subr.bf16.mxu0 0
      %2127 = vmatpush2.bf16.msra.mxu0 %v2037
      %2128 = vmatprep.subr.bf16.mxu0 0
      %2129 = vmatpush2.bf16.msra.mxu0 %v2036
      %2130 = vmatprep.subr.bf16.mxu0 0
      %2131 = vmatpush2.bf16.msra.mxu0 %v2035
      %2132 = vmatprep.subr.bf16.mxu0 0
      %2133 = vmatpush2.bf16.msra.mxu0 %v2034
      %2134 = vmatprep.subr.bf16.mxu0 0
      %2135 = vmatpush2.bf16.msra.mxu0 %v2033
      %2136 = vmatprep.subr.bf16.mxu0 0
      %2137 = vmatpush2.bf16.msra.mxu0 %v2032
      %2138 = vmatprep.subr.bf16.mxu0 0
      %2139 = vmatpush2.bf16.msra.mxu0 %v2031
      %2140 = vmatprep.subr.bf16.mxu0 0
      %2141 = vmatpush2.bf16.msra.mxu0 %v2030
      %2142 = vmatprep.mubr.bf16.mxu0 %v1807
      %2143 = vmatmul.mubr.bf16.gmra.mxu0 %v1806
      %v2144 = vpop.f32.mrf.mxu0
      %v2145 = vadd.f32 %v2105, %v2144
      %v2146 = vpop.f32.mrf.mxu0
      %v2147 = vpop.f32.mrf.mxu0
      %v2148 = vpop.f32.mrf.mxu0
      %2149 = vdwg.mxu0
      %v2150 = vadd.f32 %v1440, %v2145
      %v2151 = vld [vmem:[%s18] sm:$0x1]
      %v2152 = vld [vmem:[%s19] sm:$0x1]
      %v2153 = vsel %vm812, %v2150, 0.0
      %2154 = vadd.xlane.f32.xlu0 %v2153
      %v2155 = vpop.xlane.xlu0 %2154
      %v2156 = vmul.f32 %v2155, %v816
      %v2157 = vsub.f32 %v2150, %v2156
      %v2158 = vmul.f32 %v2157, %v2157
      %v2159 = vsel %vm812, %v2158, 0.0
      %2160 = vadd.xlane.f32.xlu0 %v2159
      %v2161 = vpop.xlane.xlu0 %2160
      %v2162 = vmul.f32 %v2161, %v816
      %v2163 = vadd.f32 %v2162, 1e-06
      %v2164 = vrsqrt.pop %v2163
      %v2165 = vmul.f32 %v2157, %v2164
      %v2167 = vlaneseq
      %v2168 = vshrl.u32 %v2167, 7
      %v2169 = vsub.s32 0, %v2168
      %v2170 = vrot.slane %v2151, %v2169
      %v2172 = vmul.f32 %v2165, %v2170
      %v2174 = vlaneseq
      %v2175 = vshrl.u32 %v2174, 7
      %v2176 = vsub.s32 0, %v2175
      %v2177 = vrot.slane %v2152, %v2176
      %v2179 = vadd.f32 %v2172, %v2177
      %2180 = vst [vmem:[%s627] sm:$0xf] %v2179
      %p2181 = scmp.lt.s32.totalorder %s31, 3
      %s2182 = scalar_select %p2181, %s31, 3
      %s2183 = smul.addr %s2182, 4
      %s2184 = scalar_lea.vmem %s20, %s2183
      // Predicated region
      $region101: #{_lambda_.3} parent=99 // pred_check
        %p2185 = pneg %p474
      $region102: #{_lambda_.3} parent=99 // pred_check_branch
        %2187 = sbr.rel (%p2185) target = $region104
      $region103: #{_lambda_.3} parent=99 // pred_region
        _
      $region104: #{_lambda_.3} parent=99 // pred_fallthru
        _
    $region100: #{_lambda_.3} parent=5 // pred_fallthru
      _
    %p2188 = scmp.le.s32.totalorder 2, %s26
    // Predicated region
    $region105: #{_lambda_.3} parent=5 // pred_check
      %p2189 = pneg %p2188
    $region106: #{_lambda_.3} parent=5 // pred_check_branch
      %2191 = sbr.rel (%p2189) target = $region108
    $region107: #{_lambda_.3} parent=5 // pred_region
      %s2192 = ssub.s32 %s26, 2
      // Predicated region
      $region109: #{_lambda_.3} parent=107 // pred_check
        %p2193 = pneg %p480
      $region110: #{_lambda_.3} parent=107 // pred_check_branch
        %2195 = sbr.rel (%p2193) target = $region112
      $region111: #{_lambda_.3} parent=107 // pred_region
        %p2196 = scmp.lt.s32.totalorder %s32, 3
        %s2197 = scalar_select %p2196, %s32, 3
        %s2198 = smul.addr %s2197, 4
        %s2199 = scalar_lea.vmem %s20, %s2198
      $region112: #{_lambda_.3} parent=107 // pred_fallthru
        _
    $region108: #{_lambda_.3} parent=5 // pred_fallthru
      _
  $region6: #{_lambda_.3} parent=0 // loop_footer
    %s30 = sadd.s32 1, %s26
  $region7: #{_lambda_.3} parent=0 // loop_footer_branch
    %25 = sbr.rel target = $region3
  $region8: #{_lambda_.3} parent=0 // loop_exit
    _

// kernel: _lambda_.4
$region0: #{_lambda_.4}
  #allocation0 [shape = 'u32[]', space=smem, size = 0x4, offset = 0x4, fixed_abs, tag = 'smem constant byte address 0x4 - core index']
  #allocation1 [shape = 'u32[144,128]{1,0:T(1,128)}', space=vmem, size = 0x12000, scoped, tag = 'internal scratch']
  %s0 = inlined_call_operand.vmem [shape: f32[8,128], index: 0, kind: input, shape index: {}]
  %s1 = inlined_call_operand.vmem [shape: f32[4,4,128], index: 1, kind: input, shape index: {}]
  %s2 = inlined_call_operand.vmem [shape: bf16[128,384], index: 2, kind: input, shape index: {}]
  %s3 = inlined_call_operand.vmem [shape: f32[1,384], index: 3, kind: input, shape index: {}]
  %s4 = inlined_call_operand.vmem [shape: bf16[128,128], index: 4, kind: input, shape index: {}]
  %s5 = inlined_call_operand.vmem [shape: f32[1,128], index: 5, kind: input, shape index: {}, may-alias: {5,7,9,13,15,19,21,23}]
  %s6 = inlined_call_operand.vmem [shape: f32[1,128], index: 6, kind: input, shape index: {}, may-alias: {6,14,20}]
  %s7 = inlined_call_operand.vmem [shape: f32[1,128], index: 7, kind: input, shape index: {}, may-alias: {5,7,9,13,15,19,21,23}]
  %s8 = inlined_call_operand.vmem [shape: bf16[128,128], index: 8, kind: input, shape index: {}]
  %s9 = inlined_call_operand.vmem [shape: f32[1,128], index: 9, kind: input, shape index: {}, may-alias: {5,7,9,13,15,19,21,23}]
  %s10 = inlined_call_operand.vmem [shape: bf16[128,256], index: 10, kind: input, shape index: {}]
  %s11 = inlined_call_operand.vmem [shape: f32[1,256], index: 11, kind: input, shape index: {}]
  %s12 = inlined_call_operand.vmem [shape: bf16[128,128], index: 12, kind: input, shape index: {}]
  %s13 = inlined_call_operand.vmem [shape: f32[1,128], index: 13, kind: input, shape index: {}, may-alias: {5,7,9,13,15,19,21,23}]
  %s14 = inlined_call_operand.vmem [shape: f32[1,128], index: 14, kind: input, shape index: {}, may-alias: {6,14,20}]
  %s15 = inlined_call_operand.vmem [shape: f32[1,128], index: 15, kind: input, shape index: {}, may-alias: {5,7,9,13,15,19,21,23}]
  %s16 = inlined_call_operand.vmem [shape: bf16[128,512], index: 16, kind: input, shape index: {}]
  %s17 = inlined_call_operand.vmem [shape: f32[1,512], index: 17, kind: input, shape index: {}]
  %s18 = inlined_call_operand.vmem [shape: bf16[512,128], index: 18, kind: input, shape index: {}]
  %s19 = inlined_call_operand.vmem [shape: f32[1,128], index: 19, kind: input, shape index: {}, may-alias: {5,7,9,13,15,19,21,23}]
  %s20 = inlined_call_operand.vmem [shape: f32[1,128], index: 20, kind: input, shape index: {}, may-alias: {6,14,20}]
  %s21 = inlined_call_operand.vmem [shape: f32[1,128], index: 21, kind: input, shape index: {}, may-alias: {5,7,9,13,15,19,21,23}]
  %s22 = inlined_call_operand.vmem [shape: bf16[128,128], index: 22, kind: input, shape index: {}]
  %s23 = inlined_call_operand.vmem [shape: f32[1,128], index: 23, kind: input, shape index: {}, may-alias: {5,7,9,13,15,19,21,23}]
  %s24 = inlined_call_operand.vmem [shape: f32[4,8,128], index: 24, kind: output, shape index: {}]
  %s25 = sld [smem:[#allocation0]]
  $region129: #{_lambda_.4} parent=0
    _
  %s27 = ssub.s32 1, %s25
  %s28 = scalar_select 0, %s27, %s25
  loop: start=0, step=1, limit=6
  $region2: #{_lambda_.4} parent=0 // loop_pre_header
    _
  $region3: #{_lambda_.4} parent=0 // loop_header
    %s30 = sphi 0, %s34
    %p31 = scmp.ge.s32.totalorder %s30, 6
    %s38 = sphi 0, %s38
    %s40 = sphi 0, %s38
    %s41 = sphi 0, %s40
    %s55 = sphi 0, %s41
    %s61 = sphi 0, %s63
    %s64 = sphi 0, %s61
    %s65 = sphi 0, %s64
    %s81 = sphi 0, %s65
    %s85 = sphi 0, %s85
    %s87 = sphi 0, %s85
    %s88 = sphi 0, %s87
    %s102 = sphi 0, %s88
    %s106 = sphi 0, %s106
    %s108 = sphi 0, %s106
    %s109 = sphi 0, %s108
    %s123 = sphi 0, %s109
    %s127 = sphi 0, %s127
    %s129 = sphi 0, %s127
    %s130 = sphi 0, %s129
    %s144 = sphi 0, %s130
    %s148 = sphi 0, %s148
    %s150 = sphi 0, %s148
    %s151 = sphi 0, %s150
    %s165 = sphi 0, %s151
    %s169 = sphi 0, %s169
    %s171 = sphi 0, %s169
    %s172 = sphi 0, %s171
    %s186 = sphi 0, %s172
    %s190 = sphi 0, %s190
    %s192 = sphi 0, %s190
    %s193 = sphi 0, %s192
    %s207 = sphi 0, %s193
    %s211 = sphi 0, %s211
    %s213 = sphi 0, %s211
    %s214 = sphi 0, %s213
    %s228 = sphi 0, %s214
    %s232 = sphi 0, %s232
    %s234 = sphi 0, %s232
    %s235 = sphi 0, %s234
    %s249 = sphi 0, %s235
    %s253 = sphi 0, %s253
    %s255 = sphi 0, %s253
    %s256 = sphi 0, %s255
    %s270 = sphi 0, %s256
    %s274 = sphi 0, %s274
    %s276 = sphi 0, %s274
    %s277 = sphi 0, %s276
    %s291 = sphi 0, %s277
    %s295 = sphi 0, %s295
    %s297 = sphi 0, %s295
    %s298 = sphi 0, %s297
    %s312 = sphi 0, %s298
    %s316 = sphi 0, %s316
    %s318 = sphi 0, %s316
    %s319 = sphi 0, %s318
    %s333 = sphi 0, %s319
    %s337 = sphi 0, %s337
    %s339 = sphi 0, %s337
    %s340 = sphi 0, %s339
    %s354 = sphi 0, %s340
    %s358 = sphi 0, %s358
    %s360 = sphi 0, %s358
    %s361 = sphi 0, %s360
    %s375 = sphi 0, %s361
    %s379 = sphi 0, %s379
    %s381 = sphi 0, %s379
    %s382 = sphi 0, %s381
    %s396 = sphi 0, %s382
    %s400 = sphi 0, %s400
    %s402 = sphi 0, %s400
    %s403 = sphi 0, %s402
    %s417 = sphi 0, %s403
    %s421 = sphi 0, %s421
    %s423 = sphi 0, %s421
    %s424 = sphi 0, %s423
    %s438 = sphi 0, %s424
    %s442 = sphi 0, %s442
    %s444 = sphi 0, %s442
    %s445 = sphi 0, %s444
    %s459 = sphi 0, %s445
    %s463 = sphi 0, %s463
    %s465 = sphi 0, %s463
    %s466 = sphi 0, %s465
    %s480 = sphi 0, %s466
    %s484 = sphi 0, %s484
    %s486 = sphi 0, %s484
    %s487 = sphi 0, %s486
    %s501 = sphi 0, %s487
    %s505 = sphi 0, %s505
    %s507 = sphi 0, %s505
    %s508 = sphi 0, %s507
    %s522 = sphi 0, %s508
    %s526 = sphi 0, %s526
    %s528 = sphi 0, %s526
    %s529 = sphi 0, %s528
    %s543 = sphi 0, %s529
    %s549 = sphi 0, %s551
    %s552 = sphi 0, %s549
    %s553 = sphi 0, %s552
    %s569 = sphi 0, %s553
  $region4: #{_lambda_.4} parent=0 // loop_header_branch
    %33 = sbr.rel (%p31) target = $region8
  $region5: #{_lambda_.4} parent=0 // loop_body
    %s35 = ssub.s32 %s30, 1
    %s36 = ssub.s32 %s30, 2
    %s37 = sadd.s32 %s30, 1
    %s39 = sadd.s32 %s38, 1
    %p42 = scmp.eq.s32.totalorder %s30, 3
    %p43 = scmp.ne.s32.totalorder %s38, %s40
    %p44 = scmp.eq.s32.totalorder %s30, 0
    %p45 = por %p43, %p44
    %p46 = scmp.ne.s32.totalorder %s38, %s40
    %p47 = scmp.eq.s32.totalorder %s35, 3
    %p48 = por %p46, %p47
    %p49 = scmp.ne.s32.totalorder %s40, %s41
    %p50 = scmp.eq.s32.totalorder %s35, 0
    %p51 = por %p49, %p50
    %p52 = scmp.ne.s32.totalorder %s40, %s41
    %p53 = scmp.eq.s32.totalorder %s36, 3
    %p54 = por %p52, %p53
    %p56 = scmp.ne.s32.totalorder %s41, %s55
    %p57 = scmp.eq.s32.totalorder %s36, 0
    %p58 = por %p56, %p57
    %s59 = ssub.s32 %s30, %s37
    %p60 = scmp.eq.s32.totalorder %s59, 0
    %s62 = sadd.s32 %s61, 1
    %s63 = scalar_select %p60, %s61, %s62
    %p66 = pneg %p60
    %p67 = scmp.eq.s32.totalorder %s30, 3
    %p68 = por %p66, %p67
    %p69 = scmp.ne.s32.totalorder %s61, %s64
    %p70 = scmp.eq.s32.totalorder %s30, 0
    %p71 = por %p69, %p70
    %p72 = scmp.ne.s32.totalorder %s61, %s64
    %p73 = scmp.eq.s32.totalorder %s35, 3
    %p74 = por %p72, %p73
    %p75 = scmp.ne.s32.totalorder %s64, %s65
    %p76 = scmp.eq.s32.totalorder %s35, 0
    %p77 = por %p75, %p76
    %p78 = scmp.ne.s32.totalorder %s64, %s65
    %p79 = scmp.eq.s32.totalorder %s36, 3
    %p80 = por %p78, %p79
    %p82 = scmp.ne.s32.totalorder %s65, %s81
    %p83 = scmp.eq.s32.totalorder %s36, 0
    %p84 = por %p82, %p83
    %s86 = sadd.s32 %s85, 1
    %p89 = scmp.eq.s32.totalorder %s30, 3
    %p90 = scmp.ne.s32.totalorder %s85, %s87
    %p91 = scmp.eq.s32.totalorder %s30, 0
    %p92 = por %p90, %p91
    %p93 = scmp.ne.s32.totalorder %s85, %s87
    %p94 = scmp.eq.s32.totalorder %s35, 3
    %p95 = por %p93, %p94
    %p96 = scmp.ne.s32.totalorder %s87, %s88
    %p97 = scmp.eq.s32.totalorder %s35, 0
    %p98 = por %p96, %p97
    %p99 = scmp.ne.s32.totalorder %s87, %s88
    %p100 = scmp.eq.s32.totalorder %s36, 3
    %p101 = por %p99, %p100
    %p103 = scmp.ne.s32.totalorder %s88, %s102
    %p104 = scmp.eq.s32.totalorder %s36, 0
    %p105 = por %p103, %p104
    %s107 = sadd.s32 %s106, 1
    %p110 = scmp.eq.s32.totalorder %s30, 3
    %p111 = scmp.ne.s32.totalorder %s106, %s108
    %p112 = scmp.eq.s32.totalorder %s30, 0
    %p113 = por %p111, %p112
    %p114 = scmp.ne.s32.totalorder %s106, %s108
    %p115 = scmp.eq.s32.totalorder %s35, 3
    %p116 = por %p114, %p115
    %p117 = scmp.ne.s32.totalorder %s108, %s109
    %p118 = scmp.eq.s32.totalorder %s35, 0
    %p119 = por %p117, %p118
    %p120 = scmp.ne.s32.totalorder %s108, %s109
    %p121 = scmp.eq.s32.totalorder %s36, 3
    %p122 = por %p120, %p121
    %p124 = scmp.ne.s32.totalorder %s109, %s123
    %p125 = scmp.eq.s32.totalorder %s36, 0
    %p126 = por %p124, %p125
    %s128 = sadd.s32 %s127, 1
    %p131 = scmp.eq.s32.totalorder %s30, 3
    %p132 = scmp.ne.s32.totalorder %s127, %s129
    %p133 = scmp.eq.s32.totalorder %s30, 0
    %p134 = por %p132, %p133
    %p135 = scmp.ne.s32.totalorder %s127, %s129
    %p136 = scmp.eq.s32.totalorder %s35, 3
    %p137 = por %p135, %p136
    %p138 = scmp.ne.s32.totalorder %s129, %s130
    %p139 = scmp.eq.s32.totalorder %s35, 0
    %p140 = por %p138, %p139
    %p141 = scmp.ne.s32.totalorder %s129, %s130
    %p142 = scmp.eq.s32.totalorder %s36, 3
    %p143 = por %p141, %p142
    %p145 = scmp.ne.s32.totalorder %s130, %s144
    %p146 = scmp.eq.s32.totalorder %s36, 0
    %p147 = por %p145, %p146
    %s149 = sadd.s32 %s148, 1
    %p152 = scmp.eq.s32.totalorder %s30, 3
    %p153 = scmp.ne.s32.totalorder %s148, %s150
    %p154 = scmp.eq.s32.totalorder %s30, 0
    %p155 = por %p153, %p154
    %p156 = scmp.ne.s32.totalorder %s148, %s150
    %p157 = scmp.eq.s32.totalorder %s35, 3
    %p158 = por %p156, %p157
    %p159 = scmp.ne.s32.totalorder %s150, %s151
    %p160 = scmp.eq.s32.totalorder %s35, 0
    %p161 = por %p159, %p160
    %p162 = scmp.ne.s32.totalorder %s150, %s151
    %p163 = scmp.eq.s32.totalorder %s36, 3
    %p164 = por %p162, %p163
    %p166 = scmp.ne.s32.totalorder %s151, %s165
    %p167 = scmp.eq.s32.totalorder %s36, 0
    %p168 = por %p166, %p167
    %s170 = sadd.s32 %s169, 1
    %p173 = scmp.eq.s32.totalorder %s30, 3
    %p174 = scmp.ne.s32.totalorder %s169, %s171
    %p175 = scmp.eq.s32.totalorder %s30, 0
    %p176 = por %p174, %p175
    %p177 = scmp.ne.s32.totalorder %s169, %s171
    %p178 = scmp.eq.s32.totalorder %s35, 3
    %p179 = por %p177, %p178
    %p180 = scmp.ne.s32.totalorder %s171, %s172
    %p181 = scmp.eq.s32.totalorder %s35, 0
    %p182 = por %p180, %p181
    %p183 = scmp.ne.s32.totalorder %s171, %s172
    %p184 = scmp.eq.s32.totalorder %s36, 3
    %p185 = por %p183, %p184
    %p187 = scmp.ne.s32.totalorder %s172, %s186
    %p188 = scmp.eq.s32.totalorder %s36, 0
    %p189 = por %p187, %p188
    %s191 = sadd.s32 %s190, 1
    %p194 = scmp.eq.s32.totalorder %s30, 3
    %p195 = scmp.ne.s32.totalorder %s190, %s192
    %p196 = scmp.eq.s32.totalorder %s30, 0
    %p197 = por %p195, %p196
    %p198 = scmp.ne.s32.totalorder %s190, %s192
    %p199 = scmp.eq.s32.totalorder %s35, 3
    %p200 = por %p198, %p199
    %p201 = scmp.ne.s32.totalorder %s192, %s193
    %p202 = scmp.eq.s32.totalorder %s35, 0
    %p203 = por %p201, %p202
    %p204 = scmp.ne.s32.totalorder %s192, %s193
    %p205 = scmp.eq.s32.totalorder %s36, 3
    %p206 = por %p204, %p205
    %p208 = scmp.ne.s32.totalorder %s193, %s207
    %p209 = scmp.eq.s32.totalorder %s36, 0
    %p210 = por %p208, %p209
    %s212 = sadd.s32 %s211, 1
    %p215 = scmp.eq.s32.totalorder %s30, 3
    %p216 = scmp.ne.s32.totalorder %s211, %s213
    %p217 = scmp.eq.s32.totalorder %s30, 0
    %p218 = por %p216, %p217
    %p219 = scmp.ne.s32.totalorder %s211, %s213
    %p220 = scmp.eq.s32.totalorder %s35, 3
    %p221 = por %p219, %p220
    %p222 = scmp.ne.s32.totalorder %s213, %s214
    %p223 = scmp.eq.s32.totalorder %s35, 0
    %p224 = por %p222, %p223
    %p225 = scmp.ne.s32.totalorder %s213, %s214
    %p226 = scmp.eq.s32.totalorder %s36, 3
    %p227 = por %p225, %p226
    %p229 = scmp.ne.s32.totalorder %s214, %s228
    %p230 = scmp.eq.s32.totalorder %s36, 0
    %p231 = por %p229, %p230
    %s233 = sadd.s32 %s232, 1
    %p236 = scmp.eq.s32.totalorder %s30, 3
    %p237 = scmp.ne.s32.totalorder %s232, %s234
    %p238 = scmp.eq.s32.totalorder %s30, 0
    %p239 = por %p237, %p238
    %p240 = scmp.ne.s32.totalorder %s232, %s234
    %p241 = scmp.eq.s32.totalorder %s35, 3
    %p242 = por %p240, %p241
    %p243 = scmp.ne.s32.totalorder %s234, %s235
    %p244 = scmp.eq.s32.totalorder %s35, 0
    %p245 = por %p243, %p244
    %p246 = scmp.ne.s32.totalorder %s234, %s235
    %p247 = scmp.eq.s32.totalorder %s36, 3
    %p248 = por %p246, %p247
    %p250 = scmp.ne.s32.totalorder %s235, %s249
    %p251 = scmp.eq.s32.totalorder %s36, 0
    %p252 = por %p250, %p251
    %s254 = sadd.s32 %s253, 1
    %p257 = scmp.eq.s32.totalorder %s30, 3
    %p258 = scmp.ne.s32.totalorder %s253, %s255
    %p259 = scmp.eq.s32.totalorder %s30, 0
    %p260 = por %p258, %p259
    %p261 = scmp.ne.s32.totalorder %s253, %s255
    %p262 = scmp.eq.s32.totalorder %s35, 3
    %p263 = por %p261, %p262
    %p264 = scmp.ne.s32.totalorder %s255, %s256
    %p265 = scmp.eq.s32.totalorder %s35, 0
    %p266 = por %p264, %p265
    %p267 = scmp.ne.s32.totalorder %s255, %s256
    %p268 = scmp.eq.s32.totalorder %s36, 3
    %p269 = por %p267, %p268
    %p271 = scmp.ne.s32.totalorder %s256, %s270
    %p272 = scmp.eq.s32.totalorder %s36, 0
    %p273 = por %p271, %p272
    %s275 = sadd.s32 %s274, 1
    %p278 = scmp.eq.s32.totalorder %s30, 3
    %p279 = scmp.ne.s32.totalorder %s274, %s276
    %p280 = scmp.eq.s32.totalorder %s30, 0
    %p281 = por %p279, %p280
    %p282 = scmp.ne.s32.totalorder %s274, %s276
    %p283 = scmp.eq.s32.totalorder %s35, 3
    %p284 = por %p282, %p283
    %p285 = scmp.ne.s32.totalorder %s276, %s277
    %p286 = scmp.eq.s32.totalorder %s35, 0
    %p287 = por %p285, %p286
    %p288 = scmp.ne.s32.totalorder %s276, %s277
    %p289 = scmp.eq.s32.totalorder %s36, 3
    %p290 = por %p288, %p289
    %p292 = scmp.ne.s32.totalorder %s277, %s291
    %p293 = scmp.eq.s32.totalorder %s36, 0
    %p294 = por %p292, %p293
    %s296 = sadd.s32 %s295, 1
    %p299 = scmp.eq.s32.totalorder %s30, 3
    %p300 = scmp.ne.s32.totalorder %s295, %s297
    %p301 = scmp.eq.s32.totalorder %s30, 0
    %p302 = por %p300, %p301
    %p303 = scmp.ne.s32.totalorder %s295, %s297
    %p304 = scmp.eq.s32.totalorder %s35, 3
    %p305 = por %p303, %p304
    %p306 = scmp.ne.s32.totalorder %s297, %s298
    %p307 = scmp.eq.s32.totalorder %s35, 0
    %p308 = por %p306, %p307
    %p309 = scmp.ne.s32.totalorder %s297, %s298
    %p310 = scmp.eq.s32.totalorder %s36, 3
    %p311 = por %p309, %p310
    %p313 = scmp.ne.s32.totalorder %s298, %s312
    %p314 = scmp.eq.s32.totalorder %s36, 0
    %p315 = por %p313, %p314
    %s317 = sadd.s32 %s316, 1
    %p320 = scmp.eq.s32.totalorder %s30, 3
    %p321 = scmp.ne.s32.totalorder %s316, %s318
    %p322 = scmp.eq.s32.totalorder %s30, 0
    %p323 = por %p321, %p322
    %p324 = scmp.ne.s32.totalorder %s316, %s318
    %p325 = scmp.eq.s32.totalorder %s35, 3
    %p326 = por %p324, %p325
    %p327 = scmp.ne.s32.totalorder %s318, %s319
    %p328 = scmp.eq.s32.totalorder %s35, 0
    %p329 = por %p327, %p328
    %p330 = scmp.ne.s32.totalorder %s318, %s319
    %p331 = scmp.eq.s32.totalorder %s36, 3
    %p332 = por %p330, %p331
    %p334 = scmp.ne.s32.totalorder %s319, %s333
    %p335 = scmp.eq.s32.totalorder %s36, 0
    %p336 = por %p334, %p335
    %s338 = sadd.s32 %s337, 1
    %p341 = scmp.eq.s32.totalorder %s30, 3
    %p342 = scmp.ne.s32.totalorder %s337, %s339
    %p343 = scmp.eq.s32.totalorder %s30, 0
    %p344 = por %p342, %p343
    %p345 = scmp.ne.s32.totalorder %s337, %s339
    %p346 = scmp.eq.s32.totalorder %s35, 3
    %p347 = por %p345, %p346
    %p348 = scmp.ne.s32.totalorder %s339, %s340
    %p349 = scmp.eq.s32.totalorder %s35, 0
    %p350 = por %p348, %p349
    %p351 = scmp.ne.s32.totalorder %s339, %s340
    %p352 = scmp.eq.s32.totalorder %s36, 3
    %p353 = por %p351, %p352
    %p355 = scmp.ne.s32.totalorder %s340, %s354
    %p356 = scmp.eq.s32.totalorder %s36, 0
    %p357 = por %p355, %p356
    %s359 = sadd.s32 %s358, 1
    %p362 = scmp.eq.s32.totalorder %s30, 3
    %p363 = scmp.ne.s32.totalorder %s358, %s360
    %p364 = scmp.eq.s32.totalorder %s30, 0
    %p365 = por %p363, %p364
    %p366 = scmp.ne.s32.totalorder %s358, %s360
    %p367 = scmp.eq.s32.totalorder %s35, 3
    %p368 = por %p366, %p367
    %p369 = scmp.ne.s32.totalorder %s360, %s361
    %p370 = scmp.eq.s32.totalorder %s35, 0
    %p371 = por %p369, %p370
    %p372 = scmp.ne.s32.totalorder %s360, %s361
    %p373 = scmp.eq.s32.totalorder %s36, 3
    %p374 = por %p372, %p373
    %p376 = scmp.ne.s32.totalorder %s361, %s375
    %p377 = scmp.eq.s32.totalorder %s36, 0
    %p378 = por %p376, %p377
    %s380 = sadd.s32 %s379, 1
    %p383 = scmp.eq.s32.totalorder %s30, 3
    %p384 = scmp.ne.s32.totalorder %s379, %s381
    %p385 = scmp.eq.s32.totalorder %s30, 0
    %p386 = por %p384, %p385
    %p387 = scmp.ne.s32.totalorder %s379, %s381
    %p388 = scmp.eq.s32.totalorder %s35, 3
    %p389 = por %p387, %p388
    %p390 = scmp.ne.s32.totalorder %s381, %s382
    %p391 = scmp.eq.s32.totalorder %s35, 0
    %p392 = por %p390, %p391
    %p393 = scmp.ne.s32.totalorder %s381, %s382
    %p394 = scmp.eq.s32.totalorder %s36, 3
    %p395 = por %p393, %p394
    %p397 = scmp.ne.s32.totalorder %s382, %s396
    %p398 = scmp.eq.s32.totalorder %s36, 0
    %p399 = por %p397, %p398
    %s401 = sadd.s32 %s400, 1
    %p404 = scmp.eq.s32.totalorder %s30, 3
    %p405 = scmp.ne.s32.totalorder %s400, %s402
    %p406 = scmp.eq.s32.totalorder %s30, 0
    %p407 = por %p405, %p406
    %p408 = scmp.ne.s32.totalorder %s400, %s402
    %p409 = scmp.eq.s32.totalorder %s35, 3
    %p410 = por %p408, %p409
    %p411 = scmp.ne.s32.totalorder %s402, %s403
    %p412 = scmp.eq.s32.totalorder %s35, 0
    %p413 = por %p411, %p412
    %p414 = scmp.ne.s32.totalorder %s402, %s403
    %p415 = scmp.eq.s32.totalorder %s36, 3
    %p416 = por %p414, %p415
    %p418 = scmp.ne.s32.totalorder %s403, %s417
    %p419 = scmp.eq.s32.totalorder %s36, 0
    %p420 = por %p418, %p419
    %s422 = sadd.s32 %s421, 1
    %p425 = scmp.eq.s32.totalorder %s30, 3
    %p426 = scmp.ne.s32.totalorder %s421, %s423
    %p427 = scmp.eq.s32.totalorder %s30, 0
    %p428 = por %p426, %p427
    %p429 = scmp.ne.s32.totalorder %s421, %s423
    %p430 = scmp.eq.s32.totalorder %s35, 3
    %p431 = por %p429, %p430
    %p432 = scmp.ne.s32.totalorder %s423, %s424
    %p433 = scmp.eq.s32.totalorder %s35, 0
    %p434 = por %p432, %p433
    %p435 = scmp.ne.s32.totalorder %s423, %s424
    %p436 = scmp.eq.s32.totalorder %s36, 3
    %p437 = por %p435, %p436
    %p439 = scmp.ne.s32.totalorder %s424, %s438
    %p440 = scmp.eq.s32.totalorder %s36, 0
    %p441 = por %p439, %p440
    %s443 = sadd.s32 %s442, 1
    %p446 = scmp.eq.s32.totalorder %s30, 3
    %p447 = scmp.ne.s32.totalorder %s442, %s444
    %p448 = scmp.eq.s32.totalorder %s30, 0
    %p449 = por %p447, %p448
    %p450 = scmp.ne.s32.totalorder %s442, %s444
    %p451 = scmp.eq.s32.totalorder %s35, 3
    %p452 = por %p450, %p451
    %p453 = scmp.ne.s32.totalorder %s444, %s445
    %p454 = scmp.eq.s32.totalorder %s35, 0
    %p455 = por %p453, %p454
    %p456 = scmp.ne.s32.totalorder %s444, %s445
    %p457 = scmp.eq.s32.totalorder %s36, 3
    %p458 = por %p456, %p457
    %p460 = scmp.ne.s32.totalorder %s445, %s459
    %p461 = scmp.eq.s32.totalorder %s36, 0
    %p462 = por %p460, %p461
    %s464 = sadd.s32 %s463, 1
    %p467 = scmp.eq.s32.totalorder %s30, 3
    %p468 = scmp.ne.s32.totalorder %s463, %s465
    %p469 = scmp.eq.s32.totalorder %s30, 0
    %p470 = por %p468, %p469
    %p471 = scmp.ne.s32.totalorder %s463, %s465
    %p472 = scmp.eq.s32.totalorder %s35, 3
    %p473 = por %p471, %p472
    %p474 = scmp.ne.s32.totalorder %s465, %s466
    %p475 = scmp.eq.s32.totalorder %s35, 0
    %p476 = por %p474, %p475
    %p477 = scmp.ne.s32.totalorder %s465, %s466
    %p478 = scmp.eq.s32.totalorder %s36, 3
    %p479 = por %p477, %p478
    %p481 = scmp.ne.s32.totalorder %s466, %s480
    %p482 = scmp.eq.s32.totalorder %s36, 0
    %p483 = por %p481, %p482
    %s485 = sadd.s32 %s484, 1
    %p488 = scmp.eq.s32.totalorder %s30, 3
    %p489 = scmp.ne.s32.totalorder %s484, %s486
    %p490 = scmp.eq.s32.totalorder %s30, 0
    %p491 = por %p489, %p490
    %p492 = scmp.ne.s32.totalorder %s484, %s486
    %p493 = scmp.eq.s32.totalorder %s35, 3
    %p494 = por %p492, %p493
    %p495 = scmp.ne.s32.totalorder %s486, %s487
    %p496 = scmp.eq.s32.totalorder %s35, 0
    %p497 = por %p495, %p496
    %p498 = scmp.ne.s32.totalorder %s486, %s487
    %p499 = scmp.eq.s32.totalorder %s36, 3
    %p500 = por %p498, %p499
    %p502 = scmp.ne.s32.totalorder %s487, %s501
    %p503 = scmp.eq.s32.totalorder %s36, 0
    %p504 = por %p502, %p503
    %s506 = sadd.s32 %s505, 1
    %p509 = scmp.eq.s32.totalorder %s30, 3
    %p510 = scmp.ne.s32.totalorder %s505, %s507
    %p511 = scmp.eq.s32.totalorder %s30, 0
    %p512 = por %p510, %p511
    %p513 = scmp.ne.s32.totalorder %s505, %s507
    %p514 = scmp.eq.s32.totalorder %s35, 3
    %p515 = por %p513, %p514
    %p516 = scmp.ne.s32.totalorder %s507, %s508
    %p517 = scmp.eq.s32.totalorder %s35, 0
    %p518 = por %p516, %p517
    %p519 = scmp.ne.s32.totalorder %s507, %s508
    %p520 = scmp.eq.s32.totalorder %s36, 3
    %p521 = por %p519, %p520
    %p523 = scmp.ne.s32.totalorder %s508, %s522
    %p524 = scmp.eq.s32.totalorder %s36, 0
    %p525 = por %p523, %p524
    %s527 = sadd.s32 %s526, 1
    %p530 = scmp.eq.s32.totalorder %s30, 3
    %p531 = scmp.ne.s32.totalorder %s526, %s528
    %p532 = scmp.eq.s32.totalorder %s30, 0
    %p533 = por %p531, %p532
    %p534 = scmp.ne.s32.totalorder %s526, %s528
    %p535 = scmp.eq.s32.totalorder %s35, 3
    %p536 = por %p534, %p535
    %p537 = scmp.ne.s32.totalorder %s528, %s529
    %p538 = scmp.eq.s32.totalorder %s35, 0
    %p539 = por %p537, %p538
    %p540 = scmp.ne.s32.totalorder %s528, %s529
    %p541 = scmp.eq.s32.totalorder %s36, 3
    %p542 = por %p540, %p541
    %p544 = scmp.ne.s32.totalorder %s529, %s543
    %p545 = scmp.eq.s32.totalorder %s36, 0
    %p546 = por %p544, %p545
    %s547 = ssub.s32 %s30, %s37
    %p548 = scmp.eq.s32.totalorder %s547, 0
    %s550 = sadd.s32 %s549, 1
    %s551 = scalar_select %p548, %s549, %s550
    %p554 = pneg %p548
    %p555 = scmp.eq.s32.totalorder %s30, 3
    %p556 = por %p554, %p555
    %p557 = scmp.ne.s32.totalorder %s549, %s552
    %p558 = scmp.eq.s32.totalorder %s30, 0
    %p559 = por %p557, %p558
    %p560 = scmp.ne.s32.totalorder %s549, %s552
    %p561 = scmp.eq.s32.totalorder %s35, 3
    %p562 = por %p560, %p561
    %p563 = scmp.ne.s32.totalorder %s552, %s553
    %p564 = scmp.eq.s32.totalorder %s35, 0
    %p565 = por %p563, %p564
    %p566 = scmp.ne.s32.totalorder %s552, %s553
    %p567 = scmp.eq.s32.totalorder %s36, 3
    %p568 = por %p566, %p567
    %p570 = scmp.ne.s32.totalorder %s553, %s569
    %p571 = scmp.eq.s32.totalorder %s36, 0
    %p572 = por %p570, %p571
    %p573 = scmp.le.s32.totalorder 1, %s30
    %p574 = scmp.lt.s32.totalorder %s30, 5
    %p575 = pnand %p573, %p574
    %p576 = pneg %p575
    // Predicated region
    $region9: #{_lambda_.4} parent=5 // pred_check
      _
    $region10: #{_lambda_.4} parent=5 // pred_check_branch
      %578 = sbr.rel (%p575) target = $region12
    $region11: #{_lambda_.4} parent=5 // pred_region
      %s579 = ssub.s32 %s30, 1
      // Predicated region
      $region13: #{_lambda_.4} parent=11 // pred_check
        %p580 = pneg %p51
      $region14: #{_lambda_.4} parent=11 // pred_check_branch
        %582 = sbr.rel (%p580) target = $region16
      $region15: #{_lambda_.4} parent=11 // pred_region
        _
      $region16: #{_lambda_.4} parent=11 // pred_fallthru
        _
      // Predicated region
      $region17: #{_lambda_.4} parent=11 // pred_check
        %p583 = pneg %p98
      $region18: #{_lambda_.4} parent=11 // pred_check_branch
        %585 = sbr.rel (%p583) target = $region20
      $region19: #{_lambda_.4} parent=11 // pred_region
        _
      $region20: #{_lambda_.4} parent=11 // pred_fallthru
        _
      // Predicated region
      $region21: #{_lambda_.4} parent=11 // pred_check
        %p586 = pneg %p119
      $region22: #{_lambda_.4} parent=11 // pred_check_branch
        %588 = sbr.rel (%p586) target = $region24
      $region23: #{_lambda_.4} parent=11 // pred_region
        _
      $region24: #{_lambda_.4} parent=11 // pred_fallthru
        _
      // Predicated region
      $region25: #{_lambda_.4} parent=11 // pred_check
        %p589 = pneg %p140
      $region26: #{_lambda_.4} parent=11 // pred_check_branch
        %591 = sbr.rel (%p589) target = $region28
      $region27: #{_lambda_.4} parent=11 // pred_region
        _
      $region28: #{_lambda_.4} parent=11 // pred_fallthru
        _
      // Predicated region
      $region29: #{_lambda_.4} parent=11 // pred_check
        %p592 = pneg %p161
      $region30: #{_lambda_.4} parent=11 // pred_check_branch
        %594 = sbr.rel (%p592) target = $region32
      $region31: #{_lambda_.4} parent=11 // pred_region
        _
      $region32: #{_lambda_.4} parent=11 // pred_fallthru
        _
      // Predicated region
      $region33: #{_lambda_.4} parent=11 // pred_check
        %p595 = pneg %p182
      $region34: #{_lambda_.4} parent=11 // pred_check_branch
        %597 = sbr.rel (%p595) target = $region36
      $region35: #{_lambda_.4} parent=11 // pred_region
        _
      $region36: #{_lambda_.4} parent=11 // pred_fallthru
        _
      // Predicated region
      $region37: #{_lambda_.4} parent=11 // pred_check
        %p598 = pneg %p203
      $region38: #{_lambda_.4} parent=11 // pred_check_branch
        %600 = sbr.rel (%p598) target = $region40
      $region39: #{_lambda_.4} parent=11 // pred_region
        _
      $region40: #{_lambda_.4} parent=11 // pred_fallthru
        _
      // Predicated region
      $region41: #{_lambda_.4} parent=11 // pred_check
        %p601 = pneg %p224
      $region42: #{_lambda_.4} parent=11 // pred_check_branch
        %603 = sbr.rel (%p601) target = $region44
      $region43: #{_lambda_.4} parent=11 // pred_region
        _
      $region44: #{_lambda_.4} parent=11 // pred_fallthru
        _
      // Predicated region
      $region45: #{_lambda_.4} parent=11 // pred_check
        %p604 = pneg %p245
      $region46: #{_lambda_.4} parent=11 // pred_check_branch
        %606 = sbr.rel (%p604) target = $region48
      $region47: #{_lambda_.4} parent=11 // pred_region
        _
      $region48: #{_lambda_.4} parent=11 // pred_fallthru
        _
      // Predicated region
      $region49: #{_lambda_.4} parent=11 // pred_check
        %p607 = pneg %p266
      $region50: #{_lambda_.4} parent=11 // pred_check_branch
        %609 = sbr.rel (%p607) target = $region52
      $region51: #{_lambda_.4} parent=11 // pred_region
        _
      $region52: #{_lambda_.4} parent=11 // pred_fallthru
        _
      // Predicated region
      $region53: #{_lambda_.4} parent=11 // pred_check
        %p610 = pneg %p287
      $region54: #{_lambda_.4} parent=11 // pred_check_branch
        %612 = sbr.rel (%p610) target = $region56
      $region55: #{_lambda_.4} parent=11 // pred_region
        _
      $region56: #{_lambda_.4} parent=11 // pred_fallthru
        _
      // Predicated region
      $region57: #{_lambda_.4} parent=11 // pred_check
        %p613 = pneg %p308
      $region58: #{_lambda_.4} parent=11 // pred_check_branch
        %615 = sbr.rel (%p613) target = $region60
      $region59: #{_lambda_.4} parent=11 // pred_region
        _
      $region60: #{_lambda_.4} parent=11 // pred_fallthru
        _
      // Predicated region
      $region61: #{_lambda_.4} parent=11 // pred_check
        %p616 = pneg %p329
      $region62: #{_lambda_.4} parent=11 // pred_check_branch
        %618 = sbr.rel (%p616) target = $region64
      $region63: #{_lambda_.4} parent=11 // pred_region
        _
      $region64: #{_lambda_.4} parent=11 // pred_fallthru
        _
      // Predicated region
      $region65: #{_lambda_.4} parent=11 // pred_check
        %p619 = pneg %p350
      $region66: #{_lambda_.4} parent=11 // pred_check_branch
        %621 = sbr.rel (%p619) target = $region68
      $region67: #{_lambda_.4} parent=11 // pred_region
        _
      $region68: #{_lambda_.4} parent=11 // pred_fallthru
        _
      // Predicated region
      $region69: #{_lambda_.4} parent=11 // pred_check
        %p622 = pneg %p371
      $region70: #{_lambda_.4} parent=11 // pred_check_branch
        %624 = sbr.rel (%p622) target = $region72
      $region71: #{_lambda_.4} parent=11 // pred_region
        _
      $region72: #{_lambda_.4} parent=11 // pred_fallthru
        _
      // Predicated region
      $region73: #{_lambda_.4} parent=11 // pred_check
        %p625 = pneg %p392
      $region74: #{_lambda_.4} parent=11 // pred_check_branch
        %627 = sbr.rel (%p625) target = $region76
      $region75: #{_lambda_.4} parent=11 // pred_region
        _
      $region76: #{_lambda_.4} parent=11 // pred_fallthru
        _
      // Predicated region
      $region77: #{_lambda_.4} parent=11 // pred_check
        %p628 = pneg %p413
      $region78: #{_lambda_.4} parent=11 // pred_check_branch
        %630 = sbr.rel (%p628) target = $region80
      $region79: #{_lambda_.4} parent=11 // pred_region
        _
      $region80: #{_lambda_.4} parent=11 // pred_fallthru
        _
      // Predicated region
      $region81: #{_lambda_.4} parent=11 // pred_check
        %p631 = pneg %p434
      $region82: #{_lambda_.4} parent=11 // pred_check_branch
        %633 = sbr.rel (%p631) target = $region84
      $region83: #{_lambda_.4} parent=11 // pred_region
        _
      $region84: #{_lambda_.4} parent=11 // pred_fallthru
        _
      // Predicated region
      $region85: #{_lambda_.4} parent=11 // pred_check
        %p634 = pneg %p455
      $region86: #{_lambda_.4} parent=11 // pred_check_branch
        %636 = sbr.rel (%p634) target = $region88
      $region87: #{_lambda_.4} parent=11 // pred_region
        _
      $region88: #{_lambda_.4} parent=11 // pred_fallthru
        _
      // Predicated region
      $region89: #{_lambda_.4} parent=11 // pred_check
        %p637 = pneg %p476
      $region90: #{_lambda_.4} parent=11 // pred_check_branch
        %639 = sbr.rel (%p637) target = $region92
      $region91: #{_lambda_.4} parent=11 // pred_region
        _
      $region92: #{_lambda_.4} parent=11 // pred_fallthru
        _
      // Predicated region
      $region93: #{_lambda_.4} parent=11 // pred_check
        %p640 = pneg %p497
      $region94: #{_lambda_.4} parent=11 // pred_check_branch
        %642 = sbr.rel (%p640) target = $region96
      $region95: #{_lambda_.4} parent=11 // pred_region
        _
      $region96: #{_lambda_.4} parent=11 // pred_fallthru
        _
      // Predicated region
      $region97: #{_lambda_.4} parent=11 // pred_check
        %p643 = pneg %p518
      $region98: #{_lambda_.4} parent=11 // pred_check_branch
        %645 = sbr.rel (%p643) target = $region100
      $region99: #{_lambda_.4} parent=11 // pred_region
        _
      $region100: #{_lambda_.4} parent=11 // pred_fallthru
        _
      // Predicated region
      $region101: #{_lambda_.4} parent=11 // pred_check
        %p646 = pneg %p539
      $region102: #{_lambda_.4} parent=11 // pred_check_branch
        %648 = sbr.rel (%p646) target = $region104
      $region103: #{_lambda_.4} parent=11 // pred_region
        _
      $region104: #{_lambda_.4} parent=11 // pred_fallthru
        _
    $region12: #{_lambda_.4} parent=5 // pred_fallthru
      _
    %p649 = scmp.lt.s32.totalorder %s30, 4
    // Predicated region
    $region105: #{_lambda_.4} parent=5 // pred_check
      %p650 = pneg %p649
    $region106: #{_lambda_.4} parent=5 // pred_check_branch
      %652 = sbr.rel (%p650) target = $region108
    $region107: #{_lambda_.4} parent=5 // pred_region
      // Predicated region
      $region109: #{_lambda_.4} parent=107 // pred_check
        %p653 = pneg %p71
      $region110: #{_lambda_.4} parent=107 // pred_check_branch
        %655 = sbr.rel (%p653) target = $region112
      $region111: #{_lambda_.4} parent=107 // pred_region
        %p656 = scmp.lt.s32.totalorder %s30, 3
        %s657 = scalar_select %p656, %s30, 3
        %s658 = smul.addr %s657, 4
        %s659 = scalar_lea.vmem %s1, %s658
      $region112: #{_lambda_.4} parent=107 // pred_fallthru
        _
    $region108: #{_lambda_.4} parent=5 // pred_fallthru
      _
    %p660 = scmp.le.s32.totalorder 1, %s30
    %p661 = scmp.lt.s32.totalorder %s30, 5
    %p662 = pnand %p660, %p661
    %p663 = pneg %p662
    // Predicated region
    $region113: #{_lambda_.4} parent=5 // pred_check
      _
    $region114: #{_lambda_.4} parent=5 // pred_check_branch
      %665 = sbr.rel (%p662) target = $region116
    $region115: #{_lambda_.4} parent=5 // pred_region
      %s666 = ssub.s32 %s30, 1
      %p667 = pneg %p51
      %p668 = pneg %p48
      %p669 = scmp.lt.s32.totalorder %s35, 3
      %s670 = scalar_select %p669, %s35, 3
      %s671 = smul.addr %s670, 4
      %s672 = scalar_lea.vmem %s1, %s671
      %p673 = pneg %p77
      %p674 = pneg %p74
      %p675 = pneg %p98
      %p676 = pneg %p95
      %p677 = pneg %p119
      %p678 = pneg %p116
      %p679 = pneg %p140
      %p680 = pneg %p137
      %p681 = pneg %p161
      %p682 = pneg %p158
      %p683 = pneg %p182
      %p684 = pneg %p179
      %p685 = pneg %p203
      %p686 = pneg %p200
      %p687 = pneg %p224
      %p688 = pneg %p221
      %p689 = pneg %p245
      %p690 = pneg %p242
      %p691 = pneg %p266
      %p692 = pneg %p263
      %p693 = pneg %p287
      %p694 = pneg %p284
      %p695 = pneg %p308
      %p696 = pneg %p305
      %p697 = pneg %p329
      %p698 = pneg %p326
      %p699 = pneg %p350
      %p700 = pneg %p347
      %p701 = pneg %p371
      %p702 = pneg %p368
      %p703 = pneg %p392
      %p704 = pneg %p389
      %p705 = pneg %p413
      %p706 = pneg %p410
      %p707 = pneg %p434
      %p708 = pneg %p431
      %p709 = pneg %p455
      %p710 = pneg %p452
      %p711 = pneg %p476
      %p712 = pneg %p473
      %p713 = pneg %p497
      %p714 = pneg %p494
      %p715 = pneg %p518
      %p716 = pneg %p515
      %p717 = pneg %p539
      %p718 = pneg %p536
      %p719 = pneg %p565
      %p720 = pneg %p562
      %p721 = scmp.lt.s32.totalorder %s35, 3
      %s722 = scalar_select %p721, %s35, 3
      %s723 = smul.addr %s722, 8
      %s724 = scalar_lea.vmem %s24, %s723
      %p725 = scmp.lt.s32.totalorder %s35, 3
      %s726 = scalar_select %p725, %s35, 3
      %s727 = smul.addr %s726, 4
      %s728 = scalar_lea.vmem %s1, %s727
      %p729 = scmp.lt.s32.totalorder %s35, 3
      %s730 = scalar_select %p729, %s35, 3
      %s731 = smul.addr %s730, 8
      %s732 = scalar_lea.vmem %s24, %s731
      %v734 = vld [vmem:[%s0] sm:$0xff]
      %v735 = vld [vmem:[%s728] sm:$0xf]
      %v736 = vld [vmem:[%s3] sm:$0x7]
      %v737 = vpack.c.bf16 %v734, %v734
      %v738 = vld [vmem:[%s2] sm:$0xff]
      %v739 = vld [vmem:[%s2 + $0x8] sm:$0xf]
      %v740 = vld [vmem:[%s2 + $0xc] sm:$0xff]
      %v741 = vld [vmem:[%s2 + $0x14] sm:$0xf]
      %v742 = vld [vmem:[%s2 + $0x18] sm:$0xff]
      %v743 = vld [vmem:[%s2 + $0x20] sm:$0xf]
      %v744 = vld [vmem:[%s2 + $0x24] sm:$0xff]
      %v745 = vld [vmem:[%s2 + $0x2c] sm:$0xf]
      %v746 = vld [vmem:[%s2 + $0x30] sm:$0xff]
      %v747 = vld [vmem:[%s2 + $0x38] sm:$0xf]
      %v748 = vld [vmem:[%s2 + $0x3c] sm:$0xff]
      %v749 = vld [vmem:[%s2 + $0x44] sm:$0xf]
      %v750 = vld [vmem:[%s2 + $0x48] sm:$0xff]
      %v751 = vld [vmem:[%s2 + $0x50] sm:$0xf]
      %v752 = vld [vmem:[%s2 + $0x54] sm:$0xff]
      %v753 = vld [vmem:[%s2 + $0x5c] sm:$0xf]
      %v754 = vld [vmem:[%s2 + $0x60] sm:$0xff]
      %v755 = vld [vmem:[%s2 + $0x68] sm:$0xf]
      %v756 = vld [vmem:[%s2 + $0x6c] sm:$0xff]
      %v757 = vld [vmem:[%s2 + $0x74] sm:$0xf]
      %v758 = vld [vmem:[%s2 + $0x78] sm:$0xff]
      %v759 = vld [vmem:[%s2 + $0x80] sm:$0xf]
      %v760 = vld [vmem:[%s2 + $0x84] sm:$0xff]
      %v761 = vld [vmem:[%s2 + $0x8c] sm:$0xf]
      %v762 = vld [vmem:[%s2 + $0x90] sm:$0xff]
      %v763 = vld [vmem:[%s2 + $0x98] sm:$0xf]
      %v764 = vld [vmem:[%s2 + $0x9c] sm:$0xff]
      %v765 = vld [vmem:[%s2 + $0xa4] sm:$0xf]
      %v766 = vld [vmem:[%s2 + $0xa8] sm:$0xff]
      %v767 = vld [vmem:[%s2 + $0xb0] sm:$0xf]
      %v768 = vld [vmem:[%s2 + $0xb4] sm:$0xff]
      %v769 = vld [vmem:[%s2 + $0xbc] sm:$0xf]
      %v771 = vlaneseq
      %v772 = vshrl.u32 %v771, 7
      %v773 = vsub.s32 0, %v772
      %v774 = vrot.slane %v736, %v773
      %v775 = vlaneseq
      %v776 = vshrl.u32 %v775, 7
      %v777 = vsub.s32 1, %v776
      %v778 = vrot.slane %v736, %v777
      %v779 = vlaneseq
      %v780 = vshrl.u32 %v779, 7
      %v781 = vsub.s32 2, %v780
      %v782 = vrot.slane %v736, %v781
      %v818 = vunpack.c.l.b16 %v738
      %v819 = vunpack.c.h.b16 %v738
      %v820 = vunpack.c.l.b16 %v739
      %v821 = vunpack.c.l.b16 %v740
      %v822 = vunpack.c.h.b16 %v740
      %v823 = vunpack.c.l.b16 %v741
      %v824 = vunpack.c.l.b16 %v742
      %v825 = vunpack.c.h.b16 %v742
      %v826 = vunpack.c.l.b16 %v743
      %v827 = vunpack.c.l.b16 %v744
      %v828 = vunpack.c.h.b16 %v744
      %v829 = vunpack.c.l.b16 %v745
      %v830 = vunpack.c.l.b16 %v746
      %v831 = vunpack.c.h.b16 %v746
      %v832 = vunpack.c.l.b16 %v747
      %v833 = vunpack.c.l.b16 %v748
      %v834 = vunpack.c.h.b16 %v748
      %v835 = vunpack.c.l.b16 %v749
      %v836 = vunpack.c.l.b16 %v750
      %v837 = vunpack.c.h.b16 %v750
      %v838 = vunpack.c.l.b16 %v751
      %v839 = vunpack.c.l.b16 %v752
      %v840 = vunpack.c.h.b16 %v752
      %v841 = vunpack.c.l.b16 %v753
      %v842 = vunpack.c.l.b16 %v754
      %v843 = vunpack.c.h.b16 %v754
      %v844 = vunpack.c.l.b16 %v755
      %v845 = vunpack.c.l.b16 %v756
      %v846 = vunpack.c.h.b16 %v756
      %v847 = vunpack.c.l.b16 %v757
      %v848 = vunpack.c.l.b16 %v758
      %v849 = vunpack.c.h.b16 %v758
      %v850 = vunpack.c.l.b16 %v759
      %v851 = vunpack.c.l.b16 %v760
      %v852 = vunpack.c.h.b16 %v760
      %v853 = vunpack.c.l.b16 %v761
      %v854 = vunpack.c.l.b16 %v762
      %v855 = vunpack.c.h.b16 %v762
      %v856 = vunpack.c.l.b16 %v763
      %v857 = vunpack.c.l.b16 %v764
      %v858 = vunpack.c.h.b16 %v764
      %v859 = vunpack.c.l.b16 %v765
      %v860 = vunpack.c.l.b16 %v766
      %v861 = vunpack.c.h.b16 %v766
      %v862 = vunpack.c.l.b16 %v767
      %v863 = vunpack.c.l.b16 %v768
      %v864 = vunpack.c.h.b16 %v768
      %v865 = vunpack.c.l.b16 %v769
      %v866 = vpack.c.b16 %v821, %v818
      %v867 = vpack.c.b16 %v822, %v819
      %v868 = vpack.c.b16 %v823, %v820
      %v869 = vpack.c.b16 %v827, %v824
      %v870 = vpack.c.b16 %v828, %v825
      %v871 = vpack.c.b16 %v829, %v826
      %v872 = vpack.c.b16 %v833, %v830
      %v873 = vpack.c.b16 %v834, %v831
      %v874 = vpack.c.b16 %v835, %v832
      %v875 = vpack.c.b16 %v839, %v836
      %v876 = vpack.c.b16 %v840, %v837
      %v877 = vpack.c.b16 %v841, %v838
      %v878 = vpack.c.b16 %v845, %v842
      %v879 = vpack.c.b16 %v846, %v843
      %v880 = vpack.c.b16 %v847, %v844
      %v881 = vpack.c.b16 %v851, %v848
      %v882 = vpack.c.b16 %v852, %v849
      %v883 = vpack.c.b16 %v853, %v850
      %v884 = vpack.c.b16 %v857, %v854
      %v885 = vpack.c.b16 %v858, %v855
      %v886 = vpack.c.b16 %v859, %v856
      %v887 = vpack.c.b16 %v863, %v860
      %v888 = vpack.c.b16 %v864, %v861
      %v889 = vpack.c.b16 %v865, %v862
      %914 = vmatprep.subr.bf16.mxu0 %v888
      %915 = vmatpush1.bf16.msra.mxu0 %v887
      %916 = vmatprep.subr.bf16.mxu0 %v885
      %917 = vmatpush1.bf16.msra.mxu0 %v884
      %918 = vmatprep.subr.bf16.mxu0 %v882
      %919 = vmatpush1.bf16.msra.mxu0 %v881
      %920 = vmatprep.subr.bf16.mxu0 %v879
      %921 = vmatpush1.bf16.msra.mxu0 %v878
      %922 = vmatprep.subr.bf16.mxu0 %v876
      %923 = vmatpush1.bf16.msra.mxu0 %v875
      %924 = vmatprep.subr.bf16.mxu0 %v873
      %925 = vmatpush1.bf16.msra.mxu0 %v872
      %926 = vmatprep.subr.bf16.mxu0 %v870
      %927 = vmatpush1.bf16.msra.mxu0 %v869
      %928 = vmatprep.subr.bf16.mxu0 %v867
      %929 = vmatpush1.bf16.msra.mxu0 %v866
      %930 = vmatprep.subr.bf16.mxu0 0
      %931 = vmatpush2.bf16.msra.mxu0 0
      %932 = vmatprep.subr.bf16.mxu0 0
      %933 = vmatpush2.bf16.msra.mxu0 0
      %934 = vmatprep.subr.bf16.mxu0 0
      %935 = vmatpush2.bf16.msra.mxu0 0
      %936 = vmatprep.subr.bf16.mxu0 0
      %937 = vmatpush2.bf16.msra.mxu0 0
      %938 = vmatprep.subr.bf16.mxu0 0
      %939 = vmatpush2.bf16.msra.mxu0 0
      %940 = vmatprep.subr.bf16.mxu0 0
      %941 = vmatpush2.bf16.msra.mxu0 0
      %942 = vmatprep.subr.bf16.mxu0 0
      %943 = vmatpush2.bf16.msra.mxu0 0
      %944 = vmatprep.subr.bf16.mxu0 0
      %945 = vmatpush2.bf16.msra.mxu0 0
      %946 = vmatprep.mubr.bf16.mxu0 0
      %947 = vmatmul.mubr.bf16.gmra.mxu0 %v737
      %v948 = vpop.f32.mrf.mxu0
      %v949 = vadd.f32 %v774, %v948
      %v950 = vpop.f32.mrf.mxu0
      %v951 = vadd.f32 %v778, %v950
      %v952 = vpop.f32.mrf.mxu0
      %v953 = vpop.f32.mrf.mxu0
      %954 = vdwg.mxu0
      %955 = vmatprep.subr.bf16.mxu0 0
      %956 = vmatpush1.bf16.msra.mxu0 %v889
      %957 = vmatprep.subr.bf16.mxu0 0
      %958 = vmatpush1.bf16.msra.mxu0 %v886
      %959 = vmatprep.subr.bf16.mxu0 0
      %960 = vmatpush1.bf16.msra.mxu0 %v883
      %961 = vmatprep.subr.bf16.mxu0 0
      %962 = vmatpush1.bf16.msra.mxu0 %v880
      %963 = vmatprep.subr.bf16.mxu0 0
      %964 = vmatpush1.bf16.msra.mxu0 %v877
      %965 = vmatprep.subr.bf16.mxu0 0
      %966 = vmatpush1.bf16.msra.mxu0 %v874
      %967 = vmatprep.subr.bf16.mxu0 0
      %968 = vmatpush1.bf16.msra.mxu0 %v871
      %969 = vmatprep.subr.bf16.mxu0 0
      %970 = vmatpush1.bf16.msra.mxu0 %v868
      %971 = vmatprep.subr.bf16.mxu0 0
      %972 = vmatpush2.bf16.msra.mxu0 0
      %973 = vmatprep.subr.bf16.mxu0 0
      %974 = vmatpush2.bf16.msra.mxu0 0
      %975 = vmatprep.subr.bf16.mxu0 0
      %976 = vmatpush2.bf16.msra.mxu0 0
      %977 = vmatprep.subr.bf16.mxu0 0
      %978 = vmatpush2.bf16.msra.mxu0 0
      %979 = vmatprep.subr.bf16.mxu0 0
      %980 = vmatpush2.bf16.msra.mxu0 0
      %981 = vmatprep.subr.bf16.mxu0 0
      %982 = vmatpush2.bf16.msra.mxu0 0
      %983 = vmatprep.subr.bf16.mxu0 0
      %984 = vmatpush2.bf16.msra.mxu0 0
      %985 = vmatprep.subr.bf16.mxu0 0
      %986 = vmatpush2.bf16.msra.mxu0 0
      %987 = vmatprep.mubr.bf16.mxu0 0
      %988 = vmatmul.mubr.bf16.gmra.mxu0 %v737
      %v989 = vpop.f32.mrf.mxu0
      %v990 = vadd.f32 %v782, %v989
      %v991 = vpop.f32.mrf.mxu0
      %v992 = vpop.f32.mrf.mxu0
      %v993 = vpop.f32.mrf.mxu0
      %994 = vdwg.mxu0
      %v995 = vpack.c.bf16 %v949, %v949
      %v996 = vpack.c.bf16 %v951, %v951
      %v997 = vpack.c.bf16 %v990, %v990
      %vm998 = vcmask 523264
      %v1000 = vsel %vm998, %v995, 0
      %v1003 = vsel %vm998, %v996, 0
      %1005 = vmatprep.subr.bf16.mxu0 0
      %1006 = vmatpush1.bf16.xpose.msra.mxu0 0
      %1007 = vmatprep.subr.bf16.mxu0 0
      %1008 = vmatpush1.bf16.xpose.msra.mxu0 0
      %1009 = vmatprep.subr.bf16.mxu0 0
      %1010 = vmatpush1.bf16.xpose.msra.mxu0 0
      %1011 = vmatprep.subr.bf16.mxu0 0
      %1012 = vmatpush1.bf16.xpose.msra.mxu0 0
      %1013 = vmatprep.subr.bf16.mxu0 0
      %1014 = vmatpush1.bf16.xpose.msra.mxu0 0
      %1015 = vmatprep.subr.bf16.mxu0 0
      %1016 = vmatpush1.bf16.xpose.msra.mxu0 0
      %1017 = vmatprep.subr.bf16.mxu0 0
      %1018 = vmatpush1.bf16.xpose.msra.mxu0 0
      %1019 = vmatprep.subr.bf16.mxu0 0
      %1020 = vmatpush1.bf16.xpose.msra.mxu0 %v1003
      %1021 = vmatprep.subr.bf16.mxu0 0
      %1022 = vmatpush2.bf16.xpose.msra.mxu0 0
      %1023 = vmatprep.subr.bf16.mxu0 0
      %1024 = vmatpush2.bf16.xpose.msra.mxu0 0
      %1025 = vmatprep.subr.bf16.mxu0 0
      %1026 = vmatpush2.bf16.xpose.msra.mxu0 0
      %1027 = vmatprep.subr.bf16.mxu0 0
      %1028 = vmatpush2.bf16.xpose.msra.mxu0 0
      %1029 = vmatprep.subr.bf16.mxu0 0
      %1030 = vmatpush2.bf16.xpose.msra.mxu0 0
      %1031 = vmatprep.subr.bf16.mxu0 0
      %1032 = vmatpush2.bf16.xpose.msra.mxu0 0
      %1033 = vmatprep.subr.bf16.mxu0 0
      %1034 = vmatpush2.bf16.xpose.msra.mxu0 0
      %1035 = vmatprep.subr.bf16.mxu0 0
      %1036 = vmatpush2.bf16.xpose.msra.mxu0 0
      %1037 = vmatprep.mubr.bf16.mxu0 0
      %1038 = vmatmul.mubr.bf16.gmra.mxu0 %v1000
      %v1039 = vpop.f32.mrf.mxu0
      %v1040 = vadd.f32 0.0, %v1039
      %v1041 = vpop.f32.mrf.mxu0
      %v1042 = vpop.f32.mrf.mxu0
      %v1043 = vpop.f32.mrf.mxu0
      %1044 = vdwg.mxu0
      %vm1045 = vcmask 64512
      %v1046 = vsel %vm1045, %v1040, -inf
      %1047 = vmax.xlane.f32.xlu0 %v1046
      %v1048 = vpop.xlane.xlu0 %1047
      %v1049 = vsub.f32 %v1040, %v1048
      %v1050 = vmul.f32 %v1049, 1.442695
      %v1051 = vpow.pop %v1050
      %v1052 = vsel %vm1045, %v1051, 0.0
      %1053 = vadd.xlane.f32.xlu0 %v1052
      %v1054 = vpop.xlane.xlu0 %1053
      %v1055 = vrcp.pop %v1054
      %v1056 = vmul.f32 %v1051, %v1055
      %v1057 = vpack.c.bf16 %v1056, %v1056
      %v1059 = vsel %vm1045, %v1057, 0
      %vm1061 = vcmask 1043456
      %v1063 = vsel %vm1061, %v997, 0
      %1065 = vmatprep.subr.bf16.mxu0 0
      %1066 = vmatpush1.bf16.msra.mxu0 0
      %1067 = vmatprep.subr.bf16.mxu0 0
      %1068 = vmatpush1.bf16.msra.mxu0 0
      %1069 = vmatprep.subr.bf16.mxu0 0
      %1070 = vmatpush1.bf16.msra.mxu0 0
      %1071 = vmatprep.subr.bf16.mxu0 0
      %1072 = vmatpush1.bf16.msra.mxu0 0
      %1073 = vmatprep.subr.bf16.mxu0 0
      %1074 = vmatpush1.bf16.msra.mxu0 0
      %1075 = vmatprep.subr.bf16.mxu0 0
      %1076 = vmatpush1.bf16.msra.mxu0 0
      %1077 = vmatprep.subr.bf16.mxu0 0
      %1078 = vmatpush1.bf16.msra.mxu0 0
      %1079 = vmatprep.subr.bf16.mxu0 0
      %1080 = vmatpush1.bf16.msra.mxu0 %v1063
      %1081 = vmatprep.subr.bf16.mxu0 0
      %1082 = vmatpush2.bf16.msra.mxu0 0
      %1083 = vmatprep.subr.bf16.mxu0 0
      %1084 = vmatpush2.bf16.msra.mxu0 0
      %1085 = vmatprep.subr.bf16.mxu0 0
      %1086 = vmatpush2.bf16.msra.mxu0 0
      %1087 = vmatprep.subr.bf16.mxu0 0
      %1088 = vmatpush2.bf16.msra.mxu0 0
      %1089 = vmatprep.subr.bf16.mxu0 0
      %1090 = vmatpush2.bf16.msra.mxu0 0
      %1091 = vmatprep.subr.bf16.mxu0 0
      %1092 = vmatpush2.bf16.msra.mxu0 0
      %1093 = vmatprep.subr.bf16.mxu0 0
      %1094 = vmatpush2.bf16.msra.mxu0 0
      %1095 = vmatprep.subr.bf16.mxu0 0
      %1096 = vmatpush2.bf16.msra.mxu0 0
      %1097 = vmatprep.mubr.bf16.mxu0 0
      %1098 = vmatmul.mubr.bf16.gmra.mxu0 %v1059
      %v1099 = vpop.f32.mrf.mxu0
      %v1100 = vadd.f32 0.0, %v1099
      %v1101 = vpop.f32.mrf.mxu0
      %v1102 = vpop.f32.mrf.mxu0
      %v1103 = vpop.f32.mrf.mxu0
      %1104 = vdwg.mxu0
      %1106 = vrot.lane.b32.xlu0 %v995, 64
      %v1107 = vpop.permute.xlu0 %1106
      %1109 = vrot.lane.b32.xlu0 %v996, 64
      %v1110 = vpop.permute.xlu0 %1109
      %v1112 = vsel %vm998, %v1107, 0
      %v1115 = vsel %vm998, %v1110, 0
      %1117 = vmatprep.subr.bf16.mxu0 0
      %1118 = vmatpush1.bf16.xpose.msra.mxu0 0
      %1119 = vmatprep.subr.bf16.mxu0 0
      %1120 = vmatpush1.bf16.xpose.msra.mxu0 0
      %1121 = vmatprep.subr.bf16.mxu0 0
      %1122 = vmatpush1.bf16.xpose.msra.mxu0 0
      %1123 = vmatprep.subr.bf16.mxu0 0
      %1124 = vmatpush1.bf16.xpose.msra.mxu0 0
      %1125 = vmatprep.subr.bf16.mxu0 0
      %1126 = vmatpush1.bf16.xpose.msra.mxu0 0
      %1127 = vmatprep.subr.bf16.mxu0 0
      %1128 = vmatpush1.bf16.xpose.msra.mxu0 0
      %1129 = vmatprep.subr.bf16.mxu0 0
      %1130 = vmatpush1.bf16.xpose.msra.mxu0 0
      %1131 = vmatprep.subr.bf16.mxu0 0
      %1132 = vmatpush1.bf16.xpose.msra.mxu0 %v1115
      %1133 = vmatprep.subr.bf16.mxu0 0
      %1134 = vmatpush2.bf16.xpose.msra.mxu0 0
      %1135 = vmatprep.subr.bf16.mxu0 0
      %1136 = vmatpush2.bf16.xpose.msra.mxu0 0
      %1137 = vmatprep.subr.bf16.mxu0 0
      %1138 = vmatpush2.bf16.xpose.msra.mxu0 0
      %1139 = vmatprep.subr.bf16.mxu0 0
      %1140 = vmatpush2.bf16.xpose.msra.mxu0 0
      %1141 = vmatprep.subr.bf16.mxu0 0
      %1142 = vmatpush2.bf16.xpose.msra.mxu0 0
      %1143 = vmatprep.subr.bf16.mxu0 0
      %1144 = vmatpush2.bf16.xpose.msra.mxu0 0
      %1145 = vmatprep.subr.bf16.mxu0 0
      %1146 = vmatpush2.bf16.xpose.msra.mxu0 0
      %1147 = vmatprep.subr.bf16.mxu0 0
      %1148 = vmatpush2.bf16.xpose.msra.mxu0 0
      %1149 = vmatprep.mubr.bf16.mxu0 0
      %1150 = vmatmul.mubr.bf16.gmra.mxu0 %v1112
      %v1151 = vpop.f32.mrf.mxu0
      %v1152 = vadd.f32 0.0, %v1151
      %v1153 = vpop.f32.mrf.mxu0
      %v1154 = vpop.f32.mrf.mxu0
      %v1155 = vpop.f32.mrf.mxu0
      %1156 = vdwg.mxu0
      %v1157 = vsel %vm1045, %v1152, -inf
      %1158 = vmax.xlane.f32.xlu0 %v1157
      %v1159 = vpop.xlane.xlu0 %1158
      %v1160 = vsub.f32 %v1152, %v1159
      %v1161 = vmul.f32 %v1160, 1.442695
      %v1162 = vpow.pop %v1161
      %v1163 = vsel %vm1045, %v1162, 0.0
      %1164 = vadd.xlane.f32.xlu0 %v1163
      %v1165 = vpop.xlane.xlu0 %1164
      %v1166 = vrcp.pop %v1165
      %v1167 = vmul.f32 %v1162, %v1166
      %v1168 = vpack.c.bf16 %v1167, %v1167
      %1170 = vrot.lane.b32.xlu0 %v997, 64
      %v1171 = vpop.permute.xlu0 %1170
      %v1173 = vsel %vm1045, %v1168, 0
      %v1176 = vsel %vm1061, %v1171, 0
      %1178 = vmatprep.subr.bf16.mxu0 0
      %1179 = vmatpush1.bf16.msra.mxu0 0
      %1180 = vmatprep.subr.bf16.mxu0 0
      %1181 = vmatpush1.bf16.msra.mxu0 0
      %1182 = vmatprep.subr.bf16.mxu0 0
      %1183 = vmatpush1.bf16.msra.mxu0 0
      %1184 = vmatprep.subr.bf16.mxu0 0
      %1185 = vmatpush1.bf16.msra.mxu0 0
      %1186 = vmatprep.subr.bf16.mxu0 0
      %1187 = vmatpush1.bf16.msra.mxu0 0
      %1188 = vmatprep.subr.bf16.mxu0 0
      %1189 = vmatpush1.bf16.msra.mxu0 0
      %1190 = vmatprep.subr.bf16.mxu0 0
      %1191 = vmatpush1.bf16.msra.mxu0 0
      %1192 = vmatprep.subr.bf16.mxu0 0
      %1193 = vmatpush1.bf16.msra.mxu0 %v1176
      %1194 = vmatprep.subr.bf16.mxu0 0
      %1195 = vmatpush2.bf16.msra.mxu0 0
      %1196 = vmatprep.subr.bf16.mxu0 0
      %1197 = vmatpush2.bf16.msra.mxu0 0
      %1198 = vmatprep.subr.bf16.mxu0 0
      %1199 = vmatpush2.bf16.msra.mxu0 0
      %1200 = vmatprep.subr.bf16.mxu0 0
      %1201 = vmatpush2.bf16.msra.mxu0 0
      %1202 = vmatprep.subr.bf16.mxu0 0
      %1203 = vmatpush2.bf16.msra.mxu0 0
      %1204 = vmatprep.subr.bf16.mxu0 0
      %1205 = vmatpush2.bf16.msra.mxu0 0
      %1206 = vmatprep.subr.bf16.mxu0 0
      %1207 = vmatpush2.bf16.msra.mxu0 0
      %1208 = vmatprep.subr.bf16.mxu0 0
      %1209 = vmatpush2.bf16.msra.mxu0 0
      %1210 = vmatprep.mubr.bf16.mxu0 0
      %1211 = vmatmul.mubr.bf16.gmra.mxu0 %v1173
      %v1212 = vpop.f32.mrf.mxu0
      %v1213 = vadd.f32 0.0, %v1212
      %v1214 = vpop.f32.mrf.mxu0
      %v1215 = vpop.f32.mrf.mxu0
      %v1216 = vpop.f32.mrf.mxu0
      %1217 = vdwg.mxu0
      %1219 = vrot.lane.b32.xlu0 %v1213, 64
      %v1220 = vpop.permute.xlu0 %1219
      %v1222 = vsel %vm998, %v1100, %v1220
      %v1223 = vld [vmem:[%s5] sm:$0x1]
      %v1224 = vpack.c.bf16 %v1222, %v1222
      %v1225 = vld [vmem:[%s4] sm:$0xf]
      %v1226 = vld [vmem:[%s4 + $0x4] sm:$0xf]
      %v1227 = vld [vmem:[%s4 + $0x8] sm:$0xf]
      %v1228 = vld [vmem:[%s4 + $0xc] sm:$0xf]
      %v1229 = vld [vmem:[%s4 + $0x10] sm:$0xf]
      %v1230 = vld [vmem:[%s4 + $0x14] sm:$0xf]
      %v1231 = vld [vmem:[%s4 + $0x18] sm:$0xf]
      %v1232 = vld [vmem:[%s4 + $0x1c] sm:$0xf]
      %v1233 = vld [vmem:[%s4 + $0x20] sm:$0xf]
      %v1234 = vld [vmem:[%s4 + $0x24] sm:$0xf]
      %v1235 = vld [vmem:[%s4 + $0x28] sm:$0xf]
      %v1236 = vld [vmem:[%s4 + $0x2c] sm:$0xf]
      %v1237 = vld [vmem:[%s4 + $0x30] sm:$0xf]
      %v1238 = vld [vmem:[%s4 + $0x34] sm:$0xf]
      %v1239 = vld [vmem:[%s4 + $0x38] sm:$0xf]
      %v1240 = vld [vmem:[%s4 + $0x3c] sm:$0xf]
      %v1242 = vlaneseq
      %v1243 = vshrl.u32 %v1242, 7
      %v1244 = vsub.s32 0, %v1243
      %v1245 = vrot.slane %v1223, %v1244
      %v1263 = vunpack.c.l.b16 %v1225
      %v1264 = vunpack.c.l.b16 %v1226
      %v1265 = vunpack.c.l.b16 %v1227
      %v1266 = vunpack.c.l.b16 %v1228
      %v1267 = vunpack.c.l.b16 %v1229
      %v1268 = vunpack.c.l.b16 %v1230
      %v1269 = vunpack.c.l.b16 %v1231
      %v1270 = vunpack.c.l.b16 %v1232
      %v1271 = vunpack.c.l.b16 %v1233
      %v1272 = vunpack.c.l.b16 %v1234
      %v1273 = vunpack.c.l.b16 %v1235
      %v1274 = vunpack.c.l.b16 %v1236
      %v1275 = vunpack.c.l.b16 %v1237
      %v1276 = vunpack.c.l.b16 %v1238
      %v1277 = vunpack.c.l.b16 %v1239
      %v1278 = vunpack.c.l.b16 %v1240
      %v1279 = vpack.c.b16 %v1264, %v1263
      %v1280 = vpack.c.b16 %v1266, %v1265
      %v1281 = vpack.c.b16 %v1268, %v1267
      %v1282 = vpack.c.b16 %v1270, %v1269
      %v1283 = vpack.c.b16 %v1272, %v1271
      %v1284 = vpack.c.b16 %v1274, %v1273
      %v1285 = vpack.c.b16 %v1276, %v1275
      %v1286 = vpack.c.b16 %v1278, %v1277
      %1295 = vmatprep.subr.bf16.mxu0 0
      %1296 = vmatpush1.bf16.msra.mxu0 %v1286
      %1297 = vmatprep.subr.bf16.mxu0 0
      %1298 = vmatpush1.bf16.msra.mxu0 %v1285
      %1299 = vmatprep.subr.bf16.mxu0 0
      %1300 = vmatpush1.bf16.msra.mxu0 %v1284
      %1301 = vmatprep.subr.bf16.mxu0 0
      %1302 = vmatpush1.bf16.msra.mxu0 %v1283
      %1303 = vmatprep.subr.bf16.mxu0 0
      %1304 = vmatpush1.bf16.msra.mxu0 %v1282
      %1305 = vmatprep.subr.bf16.mxu0 0
      %1306 = vmatpush1.bf16.msra.mxu0 %v1281
      %1307 = vmatprep.subr.bf16.mxu0 0
      %1308 = vmatpush1.bf16.msra.mxu0 %v1280
      %1309 = vmatprep.subr.bf16.mxu0 0
      %1310 = vmatpush1.bf16.msra.mxu0 %v1279
      %1311 = vmatprep.subr.bf16.mxu0 0
      %1312 = vmatpush2.bf16.msra.mxu0 0
      %1313 = vmatprep.subr.bf16.mxu0 0
      %1314 = vmatpush2.bf16.msra.mxu0 0
      %1315 = vmatprep.subr.bf16.mxu0 0
      %1316 = vmatpush2.bf16.msra.mxu0 0
      %1317 = vmatprep.subr.bf16.mxu0 0
      %1318 = vmatpush2.bf16.msra.mxu0 0
      %1319 = vmatprep.subr.bf16.mxu0 0
      %1320 = vmatpush2.bf16.msra.mxu0 0
      %1321 = vmatprep.subr.bf16.mxu0 0
      %1322 = vmatpush2.bf16.msra.mxu0 0
      %1323 = vmatprep.subr.bf16.mxu0 0
      %1324 = vmatpush2.bf16.msra.mxu0 0
      %1325 = vmatprep.subr.bf16.mxu0 0
      %1326 = vmatpush2.bf16.msra.mxu0 0
      %1327 = vmatprep.mubr.bf16.mxu0 0
      %1328 = vmatmul.mubr.bf16.gmra.mxu0 %v1224
      %v1329 = vpop.f32.mrf.mxu0
      %v1330 = vadd.f32 %v1245, %v1329
      %v1331 = vpop.f32.mrf.mxu0
      %v1332 = vpop.f32.mrf.mxu0
      %v1333 = vpop.f32.mrf.mxu0
      %1334 = vdwg.mxu0
      %v1335 = vadd.f32 %v734, %v1330
      %v1336 = vld [vmem:[%s6] sm:$0x1]
      %v1337 = vld [vmem:[%s7] sm:$0x1]
      %1338 = vadd.xlane.f32.xlu0 %v1335
      %v1339 = vpop.xlane.xlu0 %1338
      %v1340 = vrcp.pop 128.0
      %v1341 = vmul.f32 %v1339, %v1340
      %v1342 = vsub.f32 %v1335, %v1341
      %v1343 = vmul.f32 %v1342, %v1342
      %1344 = vadd.xlane.f32.xlu0 %v1343
      %v1345 = vpop.xlane.xlu0 %1344
      %v1346 = vmul.f32 %v1345, %v1340
      %v1347 = vadd.f32 %v1346, 1e-12
      %v1348 = vrsqrt.pop %v1347
      %v1349 = vmul.f32 %v1342, %v1348
      %v1351 = vlaneseq
      %v1352 = vshrl.u32 %v1351, 7
      %v1353 = vsub.s32 0, %v1352
      %v1354 = vrot.slane %v1336, %v1353
      %v1356 = vmul.f32 %v1349, %v1354
      %v1358 = vlaneseq
      %v1359 = vshrl.u32 %v1358, 7
      %v1360 = vsub.s32 0, %v1359
      %v1361 = vrot.slane %v1337, %v1360
      %v1363 = vadd.f32 %v1356, %v1361
      %v1364 = vld [vmem:[%s9] sm:$0x1]
      %v1365 = vpack.c.bf16 %v1363, %v1363
      %v1366 = vld [vmem:[%s8] sm:$0xf]
      %v1367 = vld [vmem:[%s8 + $0x4] sm:$0xf]
      %v1368 = vld [vmem:[%s8 + $0x8] sm:$0xf]
      %v1369 = vld [vmem:[%s8 + $0xc] sm:$0xf]
      %v1370 = vld [vmem:[%s8 + $0x10] sm:$0xf]
      %v1371 = vld [vmem:[%s8 + $0x14] sm:$0xf]
      %v1372 = vld [vmem:[%s8 + $0x18] sm:$0xf]
      %v1373 = vld [vmem:[%s8 + $0x1c] sm:$0xf]
      %v1374 = vld [vmem:[%s8 + $0x20] sm:$0xf]
      %v1375 = vld [vmem:[%s8 + $0x24] sm:$0xf]
      %v1376 = vld [vmem:[%s8 + $0x28] sm:$0xf]
      %v1377 = vld [vmem:[%s8 + $0x2c] sm:$0xf]
      %v1378 = vld [vmem:[%s8 + $0x30] sm:$0xf]
      %v1379 = vld [vmem:[%s8 + $0x34] sm:$0xf]
      %v1380 = vld [vmem:[%s8 + $0x38] sm:$0xf]
      %v1381 = vld [vmem:[%s8 + $0x3c] sm:$0xf]
      %v1383 = vlaneseq
      %v1384 = vshrl.u32 %v1383, 7
      %v1385 = vsub.s32 0, %v1384
      %v1386 = vrot.slane %v1364, %v1385
      %v1404 = vunpack.c.l.b16 %v1366
      %v1405 = vunpack.c.l.b16 %v1367
      %v1406 = vunpack.c.l.b16 %v1368
      %v1407 = vunpack.c.l.b16 %v1369
      %v1408 = vunpack.c.l.b16 %v1370
      %v1409 = vunpack.c.l.b16 %v1371
      %v1410 = vunpack.c.l.b16 %v1372
      %v1411 = vunpack.c.l.b16 %v1373
      %v1412 = vunpack.c.l.b16 %v1374
      %v1413 = vunpack.c.l.b16 %v1375
      %v1414 = vunpack.c.l.b16 %v1376
      %v1415 = vunpack.c.l.b16 %v1377
      %v1416 = vunpack.c.l.b16 %v1378
      %v1417 = vunpack.c.l.b16 %v1379
      %v1418 = vunpack.c.l.b16 %v1380
      %v1419 = vunpack.c.l.b16 %v1381
      %v1420 = vpack.c.b16 %v1405, %v1404
      %v1421 = vpack.c.b16 %v1407, %v1406
      %v1422 = vpack.c.b16 %v1409, %v1408
      %v1423 = vpack.c.b16 %v1411, %v1410
      %v1424 = vpack.c.b16 %v1413, %v1412
      %v1425 = vpack.c.b16 %v1415, %v1414
      %v1426 = vpack.c.b16 %v1417, %v1416
      %v1427 = vpack.c.b16 %v1419, %v1418
      %1436 = vmatprep.subr.bf16.mxu0 0
      %1437 = vmatpush1.bf16.msra.mxu0 %v1427
      %1438 = vmatprep.subr.bf16.mxu0 0
      %1439 = vmatpush1.bf16.msra.mxu0 %v1426
      %1440 = vmatprep.subr.bf16.mxu0 0
      %1441 = vmatpush1.bf16.msra.mxu0 %v1425
      %1442 = vmatprep.subr.bf16.mxu0 0
      %1443 = vmatpush1.bf16.msra.mxu0 %v1424
      %1444 = vmatprep.subr.bf16.mxu0 0
      %1445 = vmatpush1.bf16.msra.mxu0 %v1423
      %1446 = vmatprep.subr.bf16.mxu0 0
      %1447 = vmatpush1.bf16.msra.mxu0 %v1422
      %1448 = vmatprep.subr.bf16.mxu0 0
      %1449 = vmatpush1.bf16.msra.mxu0 %v1421
      %1450 = vmatprep.subr.bf16.mxu0 0
      %1451 = vmatpush1.bf16.msra.mxu0 %v1420
      %1452 = vmatprep.subr.bf16.mxu0 0
      %1453 = vmatpush2.bf16.msra.mxu0 0
      %1454 = vmatprep.subr.bf16.mxu0 0
      %1455 = vmatpush2.bf16.msra.mxu0 0
      %1456 = vmatprep.subr.bf16.mxu0 0
      %1457 = vmatpush2.bf16.msra.mxu0 0
      %1458 = vmatprep.subr.bf16.mxu0 0
      %1459 = vmatpush2.bf16.msra.mxu0 0
      %1460 = vmatprep.subr.bf16.mxu0 0
      %1461 = vmatpush2.bf16.msra.mxu0 0
      %1462 = vmatprep.subr.bf16.mxu0 0
      %1463 = vmatpush2.bf16.msra.mxu0 0
      %1464 = vmatprep.subr.bf16.mxu0 0
      %1465 = vmatpush2.bf16.msra.mxu0 0
      %1466 = vmatprep.subr.bf16.mxu0 0
      %1467 = vmatpush2.bf16.msra.mxu0 0
      %1468 = vmatprep.mubr.bf16.mxu0 0
      %1469 = vmatmul.mubr.bf16.gmra.mxu0 %v1365
      %v1470 = vpop.f32.mrf.mxu0
      %v1471 = vadd.f32 %v1386, %v1470
      %v1472 = vpop.f32.mrf.mxu0
      %v1473 = vpop.f32.mrf.mxu0
      %v1474 = vpop.f32.mrf.mxu0
      %1475 = vdwg.mxu0
      %v1476 = vld [vmem:[%s11] sm:$0x3]
      %v1477 = vpack.c.bf16 %v735, %v735
      %v1478 = vld [vmem:[%s10] sm:$0xff]
      %v1479 = vld [vmem:[%s10 + $0x8] sm:$0xff]
      %v1480 = vld [vmem:[%s10 + $0x10] sm:$0xff]
      %v1481 = vld [vmem:[%s10 + $0x18] sm:$0xff]
      %v1482 = vld [vmem:[%s10 + $0x20] sm:$0xff]
      %v1483 = vld [vmem:[%s10 + $0x28] sm:$0xff]
      %v1484 = vld [vmem:[%s10 + $0x30] sm:$0xff]
      %v1485 = vld [vmem:[%s10 + $0x38] sm:$0xff]
      %v1486 = vld [vmem:[%s10 + $0x40] sm:$0xff]
      %v1487 = vld [vmem:[%s10 + $0x48] sm:$0xff]
      %v1488 = vld [vmem:[%s10 + $0x50] sm:$0xff]
      %v1489 = vld [vmem:[%s10 + $0x58] sm:$0xff]
      %v1490 = vld [vmem:[%s10 + $0x60] sm:$0xff]
      %v1491 = vld [vmem:[%s10 + $0x68] sm:$0xff]
      %v1492 = vld [vmem:[%s10 + $0x70] sm:$0xff]
      %v1493 = vld [vmem:[%s10 + $0x78] sm:$0xff]
      %v1495 = vlaneseq
      %v1496 = vshrl.u32 %v1495, 7
      %v1497 = vsub.s32 0, %v1496
      %v1498 = vrot.slane %v1476, %v1497
      %v1499 = vlaneseq
      %v1500 = vshrl.u32 %v1499, 7
      %v1501 = vsub.s32 1, %v1500
      %v1502 = vrot.slane %v1476, %v1501
      %v1521 = vunpack.c.l.b16 %v1478
      %v1522 = vunpack.c.h.b16 %v1478
      %v1523 = vunpack.c.l.b16 %v1479
      %v1524 = vunpack.c.h.b16 %v1479
      %v1525 = vunpack.c.l.b16 %v1480
      %v1526 = vunpack.c.h.b16 %v1480
      %v1527 = vunpack.c.l.b16 %v1481
      %v1528 = vunpack.c.h.b16 %v1481
      %v1529 = vunpack.c.l.b16 %v1482
      %v1530 = vunpack.c.h.b16 %v1482
      %v1531 = vunpack.c.l.b16 %v1483
      %v1532 = vunpack.c.h.b16 %v1483
      %v1533 = vunpack.c.l.b16 %v1484
      %v1534 = vunpack.c.h.b16 %v1484
      %v1535 = vunpack.c.l.b16 %v1485
      %v1536 = vunpack.c.h.b16 %v1485
      %v1537 = vunpack.c.l.b16 %v1486
      %v1538 = vunpack.c.h.b16 %v1486
      %v1539 = vunpack.c.l.b16 %v1487
      %v1540 = vunpack.c.h.b16 %v1487
      %v1541 = vunpack.c.l.b16 %v1488
      %v1542 = vunpack.c.h.b16 %v1488
      %v1543 = vunpack.c.l.b16 %v1489
      %v1544 = vunpack.c.h.b16 %v1489
      %v1545 = vunpack.c.l.b16 %v1490
      %v1546 = vunpack.c.h.b16 %v1490
      %v1547 = vunpack.c.l.b16 %v1491
      %v1548 = vunpack.c.h.b16 %v1491
      %v1549 = vunpack.c.l.b16 %v1492
      %v1550 = vunpack.c.h.b16 %v1492
      %v1551 = vunpack.c.l.b16 %v1493
      %v1552 = vunpack.c.h.b16 %v1493
      %v1553 = vpack.c.b16 %v1523, %v1521
      %v1554 = vpack.c.b16 %v1524, %v1522
      %v1555 = vpack.c.b16 %v1527, %v1525
      %v1556 = vpack.c.b16 %v1528, %v1526
      %v1557 = vpack.c.b16 %v1531, %v1529
      %v1558 = vpack.c.b16 %v1532, %v1530
      %v1559 = vpack.c.b16 %v1535, %v1533
      %v1560 = vpack.c.b16 %v1536, %v1534
      %v1561 = vpack.c.b16 %v1539, %v1537
      %v1562 = vpack.c.b16 %v1540, %v1538
      %v1563 = vpack.c.b16 %v1543, %v1541
      %v1564 = vpack.c.b16 %v1544, %v1542
      %v1565 = vpack.c.b16 %v1547, %v1545
      %v1566 = vpack.c.b16 %v1548, %v1546
      %v1567 = vpack.c.b16 %v1551, %v1549
      %v1568 = vpack.c.b16 %v1552, %v1550
      %1585 = vmatprep.subr.bf16.mxu0 %v1568
      %1586 = vmatpush1.bf16.msra.mxu0 %v1567
      %1587 = vmatprep.subr.bf16.mxu0 %v1566
      %1588 = vmatpush1.bf16.msra.mxu0 %v1565
      %1589 = vmatprep.subr.bf16.mxu0 %v1564
      %1590 = vmatpush1.bf16.msra.mxu0 %v1563
      %1591 = vmatprep.subr.bf16.mxu0 %v1562
      %1592 = vmatpush1.bf16.msra.mxu0 %v1561
      %1593 = vmatprep.subr.bf16.mxu0 %v1560
      %1594 = vmatpush1.bf16.msra.mxu0 %v1559
      %1595 = vmatprep.subr.bf16.mxu0 %v1558
      %1596 = vmatpush1.bf16.msra.mxu0 %v1557
      %1597 = vmatprep.subr.bf16.mxu0 %v1556
      %1598 = vmatpush1.bf16.msra.mxu0 %v1555
      %1599 = vmatprep.subr.bf16.mxu0 %v1554
      %1600 = vmatpush1.bf16.msra.mxu0 %v1553
      %1601 = vmatprep.subr.bf16.mxu0 0
      %1602 = vmatpush2.bf16.msra.mxu0 0
      %1603 = vmatprep.subr.bf16.mxu0 0
      %1604 = vmatpush2.bf16.msra.mxu0 0
      %1605 = vmatprep.subr.bf16.mxu0 0
      %1606 = vmatpush2.bf16.msra.mxu0 0
      %1607 = vmatprep.subr.bf16.mxu0 0
      %1608 = vmatpush2.bf16.msra.mxu0 0
      %1609 = vmatprep.subr.bf16.mxu0 0
      %1610 = vmatpush2.bf16.msra.mxu0 0
      %1611 = vmatprep.subr.bf16.mxu0 0
      %1612 = vmatpush2.bf16.msra.mxu0 0
      %1613 = vmatprep.subr.bf16.mxu0 0
      %1614 = vmatpush2.bf16.msra.mxu0 0
      %1615 = vmatprep.subr.bf16.mxu0 0
      %1616 = vmatpush2.bf16.msra.mxu0 0
      %1617 = vmatprep.mubr.bf16.mxu0 0
      %1618 = vmatmul.mubr.bf16.gmra.mxu0 %v1477
      %v1619 = vpop.f32.mrf.mxu0
      %v1620 = vadd.f32 %v1498, %v1619
      %v1621 = vpop.f32.mrf.mxu0
      %v1622 = vadd.f32 %v1502, %v1621
      %v1623 = vpop.f32.mrf.mxu0
      %v1624 = vpop.f32.mrf.mxu0
      %1625 = vdwg.mxu0
      %v1626 = vpack.c.bf16 %v1471, %v1471
      %v1627 = vpack.c.bf16 %v1620, %v1620
      %v1628 = vpack.c.bf16 %v1622, %v1622
      %v1630 = vsel %vm998, %v1626, 0
      %v1633 = vsel %vm998, %v1627, 0
      %1635 = vmatprep.subr.bf16.mxu0 0
      %1636 = vmatpush1.bf16.xpose.msra.mxu0 0
      %1637 = vmatprep.subr.bf16.mxu0 0
      %1638 = vmatpush1.bf16.xpose.msra.mxu0 0
      %1639 = vmatprep.subr.bf16.mxu0 0
      %1640 = vmatpush1.bf16.xpose.msra.mxu0 0
      %1641 = vmatprep.subr.bf16.mxu0 0
      %1642 = vmatpush1.bf16.xpose.msra.mxu0 0
      %1643 = vmatprep.subr.bf16.mxu0 0
      %1644 = vmatpush1.bf16.xpose.msra.mxu0 0
      %1645 = vmatprep.subr.bf16.mxu0 0
      %1646 = vmatpush1.bf16.xpose.msra.mxu0 0
      %1647 = vmatprep.subr.bf16.mxu0 0
      %1648 = vmatpush1.bf16.xpose.msra.mxu0 0
      %1649 = vmatprep.subr.bf16.mxu0 0
      %1650 = vmatpush1.bf16.xpose.msra.mxu0 %v1633
      %1651 = vmatprep.subr.bf16.mxu0 0
      %1652 = vmatpush2.bf16.xpose.msra.mxu0 0
      %1653 = vmatprep.subr.bf16.mxu0 0
      %1654 = vmatpush2.bf16.xpose.msra.mxu0 0
      %1655 = vmatprep.subr.bf16.mxu0 0
      %1656 = vmatpush2.bf16.xpose.msra.mxu0 0
      %1657 = vmatprep.subr.bf16.mxu0 0
      %1658 = vmatpush2.bf16.xpose.msra.mxu0 0
      %1659 = vmatprep.subr.bf16.mxu0 0
      %1660 = vmatpush2.bf16.xpose.msra.mxu0 0
      %1661 = vmatprep.subr.bf16.mxu0 0
      %1662 = vmatpush2.bf16.xpose.msra.mxu0 0
      %1663 = vmatprep.subr.bf16.mxu0 0
      %1664 = vmatpush2.bf16.xpose.msra.mxu0 0
      %1665 = vmatprep.subr.bf16.mxu0 0
      %1666 = vmatpush2.bf16.xpose.msra.mxu0 0
      %1667 = vmatprep.mubr.bf16.mxu0 0
      %1668 = vmatmul.mubr.bf16.gmra.mxu0 %v1630
      %v1669 = vpop.f32.mrf.mxu0
      %v1670 = vadd.f32 0.0, %v1669
      %v1671 = vpop.f32.mrf.mxu0
      %v1672 = vpop.f32.mrf.mxu0
      %v1673 = vpop.f32.mrf.mxu0
      %1674 = vdwg.mxu0
      %vm1675 = vcmask 31744
      %v1676 = vsel %vm1675, %v1670, -inf
      %1677 = vmax.xlane.f32.xlu0 %v1676
      %v1678 = vpop.xlane.xlu0 %1677
      %v1679 = vsub.f32 %v1670, %v1678
      %v1680 = vmul.f32 %v1679, 1.442695
      %v1681 = vpow.pop %v1680
      %v1682 = vsel %vm1675, %v1681, 0.0
      %1683 = vadd.xlane.f32.xlu0 %v1682
      %v1684 = vpop.xlane.xlu0 %1683
      %v1685 = vrcp.pop %v1684
      %v1686 = vmul.f32 %v1681, %v1685
      %v1687 = vpack.c.bf16 %v1686, %v1686
      %v1689 = vsel %vm1675, %v1687, 0
      %vm1691 = vcmask 1041408
      %v1693 = vsel %vm1691, %v1628, 0
      %1695 = vmatprep.subr.bf16.mxu0 0
      %1696 = vmatpush1.bf16.msra.mxu0 0
      %1697 = vmatprep.subr.bf16.mxu0 0
      %1698 = vmatpush1.bf16.msra.mxu0 0
      %1699 = vmatprep.subr.bf16.mxu0 0
      %1700 = vmatpush1.bf16.msra.mxu0 0
      %1701 = vmatprep.subr.bf16.mxu0 0
      %1702 = vmatpush1.bf16.msra.mxu0 0
      %1703 = vmatprep.subr.bf16.mxu0 0
      %1704 = vmatpush1.bf16.msra.mxu0 0
      %1705 = vmatprep.subr.bf16.mxu0 0
      %1706 = vmatpush1.bf16.msra.mxu0 0
      %1707 = vmatprep.subr.bf16.mxu0 0
      %1708 = vmatpush1.bf16.msra.mxu0 0
      %1709 = vmatprep.subr.bf16.mxu0 0
      %1710 = vmatpush1.bf16.msra.mxu0 %v1693
      %1711 = vmatprep.subr.bf16.mxu0 0
      %1712 = vmatpush2.bf16.msra.mxu0 0
      %1713 = vmatprep.subr.bf16.mxu0 0
      %1714 = vmatpush2.bf16.msra.mxu0 0
      %1715 = vmatprep.subr.bf16.mxu0 0
      %1716 = vmatpush2.bf16.msra.mxu0 0
      %1717 = vmatprep.subr.bf16.mxu0 0
      %1718 = vmatpush2.bf16.msra.mxu0 0
      %1719 = vmatprep.subr.bf16.mxu0 0
      %1720 = vmatpush2.bf16.msra.mxu0 0
      %1721 = vmatprep.subr.bf16.mxu0 0
      %1722 = vmatpush2.bf16.msra.mxu0 0
      %1723 = vmatprep.subr.bf16.mxu0 0
      %1724 = vmatpush2.bf16.msra.mxu0 0
      %1725 = vmatprep.subr.bf16.mxu0 0
      %1726 = vmatpush2.bf16.msra.mxu0 0
      %1727 = vmatprep.mubr.bf16.mxu0 0
      %1728 = vmatmul.mubr.bf16.gmra.mxu0 %v1689
      %v1729 = vpop.f32.mrf.mxu0
      %v1730 = vadd.f32 0.0, %v1729
      %v1731 = vpop.f32.mrf.mxu0
      %v1732 = vpop.f32.mrf.mxu0
      %v1733 = vpop.f32.mrf.mxu0
      %1734 = vdwg.mxu0
      %1736 = vrot.lane.b32.xlu0 %v1626, 64
      %v1737 = vpop.permute.xlu0 %1736
      %1739 = vrot.lane.b32.xlu0 %v1627, 64
      %v1740 = vpop.permute.xlu0 %1739
      %v1742 = vsel %vm998, %v1737, 0
      %v1745 = vsel %vm998, %v1740, 0
      %1747 = vmatprep.subr.bf16.mxu0 0
      %1748 = vmatpush1.bf16.xpose.msra.mxu0 0
      %1749 = vmatprep.subr.bf16.mxu0 0
      %1750 = vmatpush1.bf16.xpose.msra.mxu0 0
      %1751 = vmatprep.subr.bf16.mxu0 0
      %1752 = vmatpush1.bf16.xpose.msra.mxu0 0
      %1753 = vmatprep.subr.bf16.mxu0 0
      %1754 = vmatpush1.bf16.xpose.msra.mxu0 0
      %1755 = vmatprep.subr.bf16.mxu0 0
      %1756 = vmatpush1.bf16.xpose.msra.mxu0 0
      %1757 = vmatprep.subr.bf16.mxu0 0
      %1758 = vmatpush1.bf16.xpose.msra.mxu0 0
      %1759 = vmatprep.subr.bf16.mxu0 0
      %1760 = vmatpush1.bf16.xpose.msra.mxu0 0
      %1761 = vmatprep.subr.bf16.mxu0 0
      %1762 = vmatpush1.bf16.xpose.msra.mxu0 %v1745
      %1763 = vmatprep.subr.bf16.mxu0 0
      %1764 = vmatpush2.bf16.xpose.msra.mxu0 0
      %1765 = vmatprep.subr.bf16.mxu0 0
      %1766 = vmatpush2.bf16.xpose.msra.mxu0 0
      %1767 = vmatprep.subr.bf16.mxu0 0
      %1768 = vmatpush2.bf16.xpose.msra.mxu0 0
      %1769 = vmatprep.subr.bf16.mxu0 0
      %1770 = vmatpush2.bf16.xpose.msra.mxu0 0
      %1771 = vmatprep.subr.bf16.mxu0 0
      %1772 = vmatpush2.bf16.xpose.msra.mxu0 0
      %1773 = vmatprep.subr.bf16.mxu0 0
      %1774 = vmatpush2.bf16.xpose.msra.mxu0 0
      %1775 = vmatprep.subr.bf16.mxu0 0
      %1776 = vmatpush2.bf16.xpose.msra.mxu0 0
      %1777 = vmatprep.subr.bf16.mxu0 0
      %1778 = vmatpush2.bf16.xpose.msra.mxu0 0
      %1779 = vmatprep.mubr.bf16.mxu0 0
      %1780 = vmatmul.mubr.bf16.gmra.mxu0 %v1742
      %v1781 = vpop.f32.mrf.mxu0
      %v1782 = vadd.f32 0.0, %v1781
      %v1783 = vpop.f32.mrf.mxu0
      %v1784 = vpop.f32.mrf.mxu0
      %v1785 = vpop.f32.mrf.mxu0
      %1786 = vdwg.mxu0
      %v1787 = vsel %vm1675, %v1782, -inf
      %1788 = vmax.xlane.f32.xlu0 %v1787
      %v1789 = vpop.xlane.xlu0 %1788
      %v1790 = vsub.f32 %v1782, %v1789
      %v1791 = vmul.f32 %v1790, 1.442695
      %v1792 = vpow.pop %v1791
      %v1793 = vsel %vm1675, %v1792, 0.0
      %1794 = vadd.xlane.f32.xlu0 %v1793
      %v1795 = vpop.xlane.xlu0 %1794
      %v1796 = vrcp.pop %v1795
      %v1797 = vmul.f32 %v1792, %v1796
      %v1798 = vpack.c.bf16 %v1797, %v1797
      %1800 = vrot.lane.b32.xlu0 %v1628, 64
      %v1801 = vpop.permute.xlu0 %1800
      %v1803 = vsel %vm1675, %v1798, 0
      %v1806 = vsel %vm1691, %v1801, 0
      %1808 = vmatprep.subr.bf16.mxu0 0
      %1809 = vmatpush1.bf16.msra.mxu0 0
      %1810 = vmatprep.subr.bf16.mxu0 0
      %1811 = vmatpush1.bf16.msra.mxu0 0
      %1812 = vmatprep.subr.bf16.mxu0 0
      %1813 = vmatpush1.bf16.msra.mxu0 0
      %1814 = vmatprep.subr.bf16.mxu0 0
      %1815 = vmatpush1.bf16.msra.mxu0 0
      %1816 = vmatprep.subr.bf16.mxu0 0
      %1817 = vmatpush1.bf16.msra.mxu0 0
      %1818 = vmatprep.subr.bf16.mxu0 0
      %1819 = vmatpush1.bf16.msra.mxu0 0
      %1820 = vmatprep.subr.bf16.mxu0 0
      %1821 = vmatpush1.bf16.msra.mxu0 0
      %1822 = vmatprep.subr.bf16.mxu0 0
      %1823 = vmatpush1.bf16.msra.mxu0 %v1806
      %1824 = vmatprep.subr.bf16.mxu0 0
      %1825 = vmatpush2.bf16.msra.mxu0 0
      %1826 = vmatprep.subr.bf16.mxu0 0
      %1827 = vmatpush2.bf16.msra.mxu0 0
      %1828 = vmatprep.subr.bf16.mxu0 0
      %1829 = vmatpush2.bf16.msra.mxu0 0
      %1830 = vmatprep.subr.bf16.mxu0 0
      %1831 = vmatpush2.bf16.msra.mxu0 0
      %1832 = vmatprep.subr.bf16.mxu0 0
      %1833 = vmatpush2.bf16.msra.mxu0 0
      %1834 = vmatprep.subr.bf16.mxu0 0
      %1835 = vmatpush2.bf16.msra.mxu0 0
      %1836 = vmatprep.subr.bf16.mxu0 0
      %1837 = vmatpush2.bf16.msra.mxu0 0
      %1838 = vmatprep.subr.bf16.mxu0 0
      %1839 = vmatpush2.bf16.msra.mxu0 0
      %1840 = vmatprep.mubr.bf16.mxu0 0
      %1841 = vmatmul.mubr.bf16.gmra.mxu0 %v1803
      %v1842 = vpop.f32.mrf.mxu0
      %v1843 = vadd.f32 0.0, %v1842
      %v1844 = vpop.f32.mrf.mxu0
      %v1845 = vpop.f32.mrf.mxu0
      %v1846 = vpop.f32.mrf.mxu0
      %1847 = vdwg.mxu0
      %1849 = vrot.lane.b32.xlu0 %v1843, 64
      %v1850 = vpop.permute.xlu0 %1849
      %v1852 = vsel %vm998, %v1730, %v1850
      %v1853 = vld [vmem:[%s13] sm:$0x1]
      %v1854 = vpack.c.bf16 %v1852, %v1852
      %v1855 = vld [vmem:[%s12] sm:$0xf]
      %v1856 = vld [vmem:[%s12 + $0x4] sm:$0xf]
      %v1857 = vld [vmem:[%s12 + $0x8] sm:$0xf]
      %v1858 = vld [vmem:[%s12 + $0xc] sm:$0xf]
      %v1859 = vld [vmem:[%s12 + $0x10] sm:$0xf]
      %v1860 = vld [vmem:[%s12 + $0x14] sm:$0xf]
      %v1861 = vld [vmem:[%s12 + $0x18] sm:$0xf]
      %v1862 = vld [vmem:[%s12 + $0x1c] sm:$0xf]
      %v1863 = vld [vmem:[%s12 + $0x20] sm:$0xf]
      %v1864 = vld [vmem:[%s12 + $0x24] sm:$0xf]
      %v1865 = vld [vmem:[%s12 + $0x28] sm:$0xf]
      %v1866 = vld [vmem:[%s12 + $0x2c] sm:$0xf]
      %v1867 = vld [vmem:[%s12 + $0x30] sm:$0xf]
      %v1868 = vld [vmem:[%s12 + $0x34] sm:$0xf]
      %v1869 = vld [vmem:[%s12 + $0x38] sm:$0xf]
      %v1870 = vld [vmem:[%s12 + $0x3c] sm:$0xf]
      %v1872 = vlaneseq
      %v1873 = vshrl.u32 %v1872, 7
      %v1874 = vsub.s32 0, %v1873
      %v1875 = vrot.slane %v1853, %v1874
      %v1893 = vunpack.c.l.b16 %v1855
      %v1894 = vunpack.c.l.b16 %v1856
      %v1895 = vunpack.c.l.b16 %v1857
      %v1896 = vunpack.c.l.b16 %v1858
      %v1897 = vunpack.c.l.b16 %v1859
      %v1898 = vunpack.c.l.b16 %v1860
      %v1899 = vunpack.c.l.b16 %v1861
      %v1900 = vunpack.c.l.b16 %v1862
      %v1901 = vunpack.c.l.b16 %v1863
      %v1902 = vunpack.c.l.b16 %v1864
      %v1903 = vunpack.c.l.b16 %v1865
      %v1904 = vunpack.c.l.b16 %v1866
      %v1905 = vunpack.c.l.b16 %v1867
      %v1906 = vunpack.c.l.b16 %v1868
      %v1907 = vunpack.c.l.b16 %v1869
      %v1908 = vunpack.c.l.b16 %v1870
      %v1909 = vpack.c.b16 %v1894, %v1893
      %v1910 = vpack.c.b16 %v1896, %v1895
      %v1911 = vpack.c.b16 %v1898, %v1897
      %v1912 = vpack.c.b16 %v1900, %v1899
      %v1913 = vpack.c.b16 %v1902, %v1901
      %v1914 = vpack.c.b16 %v1904, %v1903
      %v1915 = vpack.c.b16 %v1906, %v1905
      %v1916 = vpack.c.b16 %v1908, %v1907
      %1925 = vmatprep.subr.bf16.mxu0 0
      %1926 = vmatpush1.bf16.msra.mxu0 %v1916
      %1927 = vmatprep.subr.bf16.mxu0 0
      %1928 = vmatpush1.bf16.msra.mxu0 %v1915
      %1929 = vmatprep.subr.bf16.mxu0 0
      %1930 = vmatpush1.bf16.msra.mxu0 %v1914
      %1931 = vmatprep.subr.bf16.mxu0 0
      %1932 = vmatpush1.bf16.msra.mxu0 %v1913
      %1933 = vmatprep.subr.bf16.mxu0 0
      %1934 = vmatpush1.bf16.msra.mxu0 %v1912
      %1935 = vmatprep.subr.bf16.mxu0 0
      %1936 = vmatpush1.bf16.msra.mxu0 %v1911
      %1937 = vmatprep.subr.bf16.mxu0 0
      %1938 = vmatpush1.bf16.msra.mxu0 %v1910
      %1939 = vmatprep.subr.bf16.mxu0 0
      %1940 = vmatpush1.bf16.msra.mxu0 %v1909
      %1941 = vmatprep.subr.bf16.mxu0 0
      %1942 = vmatpush2.bf16.msra.mxu0 0
      %1943 = vmatprep.subr.bf16.mxu0 0
      %1944 = vmatpush2.bf16.msra.mxu0 0
      %1945 = vmatprep.subr.bf16.mxu0 0
      %1946 = vmatpush2.bf16.msra.mxu0 0
      %1947 = vmatprep.subr.bf16.mxu0 0
      %1948 = vmatpush2.bf16.msra.mxu0 0
      %1949 = vmatprep.subr.bf16.mxu0 0
      %1950 = vmatpush2.bf16.msra.mxu0 0
      %1951 = vmatprep.subr.bf16.mxu0 0
      %1952 = vmatpush2.bf16.msra.mxu0 0
      %1953 = vmatprep.subr.bf16.mxu0 0
      %1954 = vmatpush2.bf16.msra.mxu0 0
      %1955 = vmatprep.subr.bf16.mxu0 0
      %1956 = vmatpush2.bf16.msra.mxu0 0
      %1957 = vmatprep.mubr.bf16.mxu0 0
      %1958 = vmatmul.mubr.bf16.gmra.mxu0 %v1854
      %v1959 = vpop.f32.mrf.mxu0
      %v1960 = vadd.f32 %v1875, %v1959
      %v1961 = vpop.f32.mrf.mxu0
      %v1962 = vpop.f32.mrf.mxu0
      %v1963 = vpop.f32.mrf.mxu0
      %1964 = vdwg.mxu0
      %v1965 = vadd.f32 %v1363, %v1960
      %v1966 = vld [vmem:[%s14] sm:$0x1]
      %v1967 = vld [vmem:[%s15] sm:$0x1]
      %1968 = vadd.xlane.f32.xlu0 %v1965
      %v1969 = vpop.xlane.xlu0 %1968
      %v1970 = vmul.f32 %v1969, %v1340
      %v1971 = vsub.f32 %v1965, %v1970
      %v1972 = vmul.f32 %v1971, %v1971
      %1973 = vadd.xlane.f32.xlu0 %v1972
      %v1974 = vpop.xlane.xlu0 %1973
      %v1975 = vmul.f32 %v1974, %v1340
      %v1976 = vadd.f32 %v1975, 1e-12
      %v1977 = vrsqrt.pop %v1976
      %v1978 = vmul.f32 %v1971, %v1977
      %v1980 = vlaneseq
      %v1981 = vshrl.u32 %v1980, 7
      %v1982 = vsub.s32 0, %v1981
      %v1983 = vrot.slane %v1966, %v1982
      %v1985 = vmul.f32 %v1978, %v1983
      %v1987 = vlaneseq
      %v1988 = vshrl.u32 %v1987, 7
      %v1989 = vsub.s32 0, %v1988
      %v1990 = vrot.slane %v1967, %v1989
      %v1992 = vadd.f32 %v1985, %v1990
      %v1993 = vld [vmem:[%s17] sm:$0xf]
      %v1994 = vpack.c.bf16 %v1992, %v1992
      %v1995 = vld [vmem:[%s16] sm:$0xff]
      %v1996 = vld [vmem:[%s16 + $0x8] sm:$0xff]
      %v1997 = vld [vmem:[%s16 + $0x10] sm:$0xff]
      %v1998 = vld [vmem:[%s16 + $0x18] sm:$0xff]
      %v1999 = vld [vmem:[%s16 + $0x20] sm:$0xff]
      %v2000 = vld [vmem:[%s16 + $0x28] sm:$0xff]
      %v2001 = vld [vmem:[%s16 + $0x30] sm:$0xff]
      %v2002 = vld [vmem:[%s16 + $0x38] sm:$0xff]
      %v2003 = vld [vmem:[%s16 + $0x40] sm:$0xff]
      %v2004 = vld [vmem:[%s16 + $0x48] sm:$0xff]
      %v2005 = vld [vmem:[%s16 + $0x50] sm:$0xff]
      %v2006 = vld [vmem:[%s16 + $0x58] sm:$0xff]
      %v2007 = vld [vmem:[%s16 + $0x60] sm:$0xff]
      %v2008 = vld [vmem:[%s16 + $0x68] sm:$0xff]
      %v2009 = vld [vmem:[%s16 + $0x70] sm:$0xff]
      %v2010 = vld [vmem:[%s16 + $0x78] sm:$0xff]
      %v2011 = vld [vmem:[%s16 + $0x80] sm:$0xff]
      %v2012 = vld [vmem:[%s16 + $0x88] sm:$0xff]
      %v2013 = vld [vmem:[%s16 + $0x90] sm:$0xff]
      %v2014 = vld [vmem:[%s16 + $0x98] sm:$0xff]
      %v2015 = vld [vmem:[%s16 + $0xa0] sm:$0xff]
      %v2016 = vld [vmem:[%s16 + $0xa8] sm:$0xff]
      %v2017 = vld [vmem:[%s16 + $0xb0] sm:$0xff]
      %v2018 = vld [vmem:[%s16 + $0xb8] sm:$0xff]
      %v2019 = vld [vmem:[%s16 + $0xc0] sm:$0xff]
      %v2020 = vld [vmem:[%s16 + $0xc8] sm:$0xff]
      %v2021 = vld [vmem:[%s16 + $0xd0] sm:$0xff]
      %v2022 = vld [vmem:[%s16 + $0xd8] sm:$0xff]
      %v2023 = vld [vmem:[%s16 + $0xe0] sm:$0xff]
      %v2024 = vld [vmem:[%s16 + $0xe8] sm:$0xff]
      %v2025 = vld [vmem:[%s16 + $0xf0] sm:$0xff]
      %v2026 = vld [vmem:[%s16 + $0xf8] sm:$0xff]
      %v2028 = vlaneseq
      %v2029 = vshrl.u32 %v2028, 7
      %v2030 = vsub.s32 0, %v2029
      %v2031 = vrot.slane %v1993, %v2030
      %v2032 = vlaneseq
      %v2033 = vshrl.u32 %v2032, 7
      %v2034 = vsub.s32 1, %v2033
      %v2035 = vrot.slane %v1993, %v2034
      %v2036 = vlaneseq
      %v2037 = vshrl.u32 %v2036, 7
      %v2038 = vsub.s32 2, %v2037
      %v2039 = vrot.slane %v1993, %v2038
      %v2040 = vlaneseq
      %v2041 = vshrl.u32 %v2040, 7
      %v2042 = vsub.s32 3, %v2041
      %v2043 = vrot.slane %v1993, %v2042
      %v2080 = vunpack.c.l.b16 %v1995
      %v2081 = vunpack.c.h.b16 %v1995
      %v2082 = vunpack.c.l.b16 %v1996
      %v2083 = vunpack.c.h.b16 %v1996
      %v2084 = vunpack.c.l.b16 %v1997
      %v2085 = vunpack.c.h.b16 %v1997
      %v2086 = vunpack.c.l.b16 %v1998
      %v2087 = vunpack.c.h.b16 %v1998
      %v2088 = vunpack.c.l.b16 %v1999
      %v2089 = vunpack.c.h.b16 %v1999
      %v2090 = vunpack.c.l.b16 %v2000
      %v2091 = vunpack.c.h.b16 %v2000
      %v2092 = vunpack.c.l.b16 %v2001
      %v2093 = vunpack.c.h.b16 %v2001
      %v2094 = vunpack.c.l.b16 %v2002
      %v2095 = vunpack.c.h.b16 %v2002
      %v2096 = vunpack.c.l.b16 %v2003
      %v2097 = vunpack.c.h.b16 %v2003
      %v2098 = vunpack.c.l.b16 %v2004
      %v2099 = vunpack.c.h.b16 %v2004
      %v2100 = vunpack.c.l.b16 %v2005
      %v2101 = vunpack.c.h.b16 %v2005
      %v2102 = vunpack.c.l.b16 %v2006
      %v2103 = vunpack.c.h.b16 %v2006
      %v2104 = vunpack.c.l.b16 %v2007
      %v2105 = vunpack.c.h.b16 %v2007
      %v2106 = vunpack.c.l.b16 %v2008
      %v2107 = vunpack.c.h.b16 %v2008
      %v2108 = vunpack.c.l.b16 %v2009
      %v2109 = vunpack.c.h.b16 %v2009
      %v2110 = vunpack.c.l.b16 %v2010
      %v2111 = vunpack.c.h.b16 %v2010
      %v2112 = vunpack.c.l.b16 %v2011
      %v2113 = vunpack.c.h.b16 %v2011
      %v2114 = vunpack.c.l.b16 %v2012
      %v2115 = vunpack.c.h.b16 %v2012
      %v2116 = vunpack.c.l.b16 %v2013
      %v2117 = vunpack.c.h.b16 %v2013
      %v2118 = vunpack.c.l.b16 %v2014
      %v2119 = vunpack.c.h.b16 %v2014
      %v2120 = vunpack.c.l.b16 %v2015
      %v2121 = vunpack.c.h.b16 %v2015
      %v2122 = vunpack.c.l.b16 %v2016
      %v2123 = vunpack.c.h.b16 %v2016
      %v2124 = vunpack.c.l.b16 %v2017
      %v2125 = vunpack.c.h.b16 %v2017
      %v2126 = vunpack.c.l.b16 %v2018
      %v2127 = vunpack.c.h.b16 %v2018
      %v2128 = vunpack.c.l.b16 %v2019
      %v2129 = vunpack.c.h.b16 %v2019
      %v2130 = vunpack.c.l.b16 %v2020
      %v2131 = vunpack.c.h.b16 %v2020
      %v2132 = vunpack.c.l.b16 %v2021
      %v2133 = vunpack.c.h.b16 %v2021
      %v2134 = vunpack.c.l.b16 %v2022
      %v2135 = vunpack.c.h.b16 %v2022
      %v2136 = vunpack.c.l.b16 %v2023
      %v2137 = vunpack.c.h.b16 %v2023
      %v2138 = vunpack.c.l.b16 %v2024
      %v2139 = vunpack.c.h.b16 %v2024
      %v2140 = vunpack.c.l.b16 %v2025
      %v2141 = vunpack.c.h.b16 %v2025
      %v2142 = vunpack.c.l.b16 %v2026
      %v2143 = vunpack.c.h.b16 %v2026
      %v2144 = vpack.c.b16 %v2084, %v2080
      %v2145 = vpack.c.b16 %v2085, %v2081
      %v2146 = vpack.c.b16 %v2086, %v2082
      %v2147 = vpack.c.b16 %v2087, %v2083
      %v2148 = vpack.c.b16 %v2092, %v2088
      %v2149 = vpack.c.b16 %v2093, %v2089
      %v2150 = vpack.c.b16 %v2094, %v2090
      %v2151 = vpack.c.b16 %v2095, %v2091
      %v2152 = vpack.c.b16 %v2100, %v2096
      %v2153 = vpack.c.b16 %v2101, %v2097
      %v2154 = vpack.c.b16 %v2102, %v2098
      %v2155 = vpack.c.b16 %v2103, %v2099
      %v2156 = vpack.c.b16 %v2108, %v2104
      %v2157 = vpack.c.b16 %v2109, %v2105
      %v2158 = vpack.c.b16 %v2110, %v2106
      %v2159 = vpack.c.b16 %v2111, %v2107
      %v2160 = vpack.c.b16 %v2116, %v2112
      %v2161 = vpack.c.b16 %v2117, %v2113
      %v2162 = vpack.c.b16 %v2118, %v2114
      %v2163 = vpack.c.b16 %v2119, %v2115
      %v2164 = vpack.c.b16 %v2124, %v2120
      %v2165 = vpack.c.b16 %v2125, %v2121
      %v2166 = vpack.c.b16 %v2126, %v2122
      %v2167 = vpack.c.b16 %v2127, %v2123
      %v2168 = vpack.c.b16 %v2132, %v2128
      %v2169 = vpack.c.b16 %v2133, %v2129
      %v2170 = vpack.c.b16 %v2134, %v2130
      %v2171 = vpack.c.b16 %v2135, %v2131
      %v2172 = vpack.c.b16 %v2140, %v2136
      %v2173 = vpack.c.b16 %v2141, %v2137
      %v2174 = vpack.c.b16 %v2142, %v2138
      %v2175 = vpack.c.b16 %v2143, %v2139
      %2208 = vmatprep.subr.bf16.mxu0 %v2173
      %2209 = vmatpush1.bf16.msra.mxu0 %v2172
      %2210 = vmatprep.subr.bf16.mxu0 %v2169
      %2211 = vmatpush1.bf16.msra.mxu0 %v2168
      %2212 = vmatprep.subr.bf16.mxu0 %v2165
      %2213 = vmatpush1.bf16.msra.mxu0 %v2164
      %2214 = vmatprep.subr.bf16.mxu0 %v2161
      %2215 = vmatpush1.bf16.msra.mxu0 %v2160
      %2216 = vmatprep.subr.bf16.mxu0 %v2157
      %2217 = vmatpush1.bf16.msra.mxu0 %v2156
      %2218 = vmatprep.subr.bf16.mxu0 %v2153
      %2219 = vmatpush1.bf16.msra.mxu0 %v2152
      %2220 = vmatprep.subr.bf16.mxu0 %v2149
      %2221 = vmatpush1.bf16.msra.mxu0 %v2148
      %2222 = vmatprep.subr.bf16.mxu0 %v2145
      %2223 = vmatpush1.bf16.msra.mxu0 %v2144
      %2224 = vmatprep.subr.bf16.mxu0 0
      %2225 = vmatpush2.bf16.msra.mxu0 0
      %2226 = vmatprep.subr.bf16.mxu0 0
      %2227 = vmatpush2.bf16.msra.mxu0 0
      %2228 = vmatprep.subr.bf16.mxu0 0
      %2229 = vmatpush2.bf16.msra.mxu0 0
      %2230 = vmatprep.subr.bf16.mxu0 0
      %2231 = vmatpush2.bf16.msra.mxu0 0
      %2232 = vmatprep.subr.bf16.mxu0 0
      %2233 = vmatpush2.bf16.msra.mxu0 0
      %2234 = vmatprep.subr.bf16.mxu0 0
      %2235 = vmatpush2.bf16.msra.mxu0 0
      %2236 = vmatprep.subr.bf16.mxu0 0
      %2237 = vmatpush2.bf16.msra.mxu0 0
      %2238 = vmatprep.subr.bf16.mxu0 0
      %2239 = vmatpush2.bf16.msra.mxu0 0
      %2240 = vmatprep.mubr.bf16.mxu0 0
      %2241 = vmatmul.mubr.bf16.gmra.mxu0 %v1994
      %v2242 = vpop.f32.mrf.mxu0
      %v2243 = vadd.f32 %v2031, %v2242
      %v2244 = vpop.f32.mrf.mxu0
      %v2245 = vadd.f32 %v2035, %v2244
      %v2246 = vpop.f32.mrf.mxu0
      %v2247 = vpop.f32.mrf.mxu0
      %2248 = vdwg.mxu0
      %2249 = vmatprep.subr.bf16.mxu0 %v2175
      %2250 = vmatpush1.bf16.msra.mxu0 %v2174
      %2251 = vmatprep.subr.bf16.mxu0 %v2171
      %2252 = vmatpush1.bf16.msra.mxu0 %v2170
      %2253 = vmatprep.subr.bf16.mxu0 %v2167
      %2254 = vmatpush1.bf16.msra.mxu0 %v2166
      %2255 = vmatprep.subr.bf16.mxu0 %v2163
      %2256 = vmatpush1.bf16.msra.mxu0 %v2162
      %2257 = vmatprep.subr.bf16.mxu0 %v2159
      %2258 = vmatpush1.bf16.msra.mxu0 %v2158
      %2259 = vmatprep.subr.bf16.mxu0 %v2155
      %2260 = vmatpush1.bf16.msra.mxu0 %v2154
      %2261 = vmatprep.subr.bf16.mxu0 %v2151
      %2262 = vmatpush1.bf16.msra.mxu0 %v2150
      %2263 = vmatprep.subr.bf16.mxu0 %v2147
      %2264 = vmatpush1.bf16.msra.mxu0 %v2146
      %2265 = vmatprep.subr.bf16.mxu0 0
      %2266 = vmatpush2.bf16.msra.mxu0 0
      %2267 = vmatprep.subr.bf16.mxu0 0
      %2268 = vmatpush2.bf16.msra.mxu0 0
      %2269 = vmatprep.subr.bf16.mxu0 0
      %2270 = vmatpush2.bf16.msra.mxu0 0
      %2271 = vmatprep.subr.bf16.mxu0 0
      %2272 = vmatpush2.bf16.msra.mxu0 0
      %2273 = vmatprep.subr.bf16.mxu0 0
      %2274 = vmatpush2.bf16.msra.mxu0 0
      %2275 = vmatprep.subr.bf16.mxu0 0
      %2276 = vmatpush2.bf16.msra.mxu0 0
      %2277 = vmatprep.subr.bf16.mxu0 0
      %2278 = vmatpush2.bf16.msra.mxu0 0
      %2279 = vmatprep.subr.bf16.mxu0 0
      %2280 = vmatpush2.bf16.msra.mxu0 0
      %2281 = vmatprep.mubr.bf16.mxu0 0
      %2282 = vmatmul.mubr.bf16.gmra.mxu0 %v1994
      %v2283 = vpop.f32.mrf.mxu0
      %v2284 = vadd.f32 %v2039, %v2283
      %v2285 = vpop.f32.mrf.mxu0
      %v2286 = vadd.f32 %v2043, %v2285
      %v2287 = vpop.f32.mrf.mxu0
      %v2288 = vpop.f32.mrf.mxu0
      %2289 = vdwg.mxu0
      %v2290 = vmul.f32 %v2243, %v2243
      %v2291 = vmul.f32 %v2245, %v2245
      %v2292 = vmul.f32 %v2284, %v2284
      %v2293 = vmul.f32 %v2286, %v2286
      %v2294 = vmul.f32 %v2243, %v2290
      %v2295 = vmul.f32 %v2245, %v2291
      %v2296 = vmul.f32 %v2284, %v2292
      %v2297 = vmul.f32 %v2286, %v2293
      %v2298 = vmul.f32 %v2294, 0.044715
      %v2299 = vmul.f32 %v2295, 0.044715
      %v2300 = vmul.f32 %v2296, 0.044715
      %v2301 = vmul.f32 %v2297, 0.044715
      %v2302 = vadd.f32 %v2243, %v2298
      %v2303 = vadd.f32 %v2245, %v2299
      %v2304 = vadd.f32 %v2284, %v2300
      %v2305 = vadd.f32 %v2286, %v2301
      %v2306 = vmul.f32 %v2302, 0.7978846
      %v2307 = vmul.f32 %v2303, 0.7978846
      %v2308 = vmul.f32 %v2304, 0.7978846
      %v2309 = vmul.f32 %v2305, 0.7978846
      %v2310 = vtanh.pop %v2306
      %v2311 = vtanh.pop %v2307
      %v2312 = vtanh.pop %v2308
      %v2313 = vtanh.pop %v2309
      %v2314 = vadd.f32 %v2310, 1.0
      %v2315 = vadd.f32 %v2311, 1.0
      %v2316 = vadd.f32 %v2312, 1.0
      %v2317 = vadd.f32 %v2313, 1.0
      %v2318 = vmul.f32 %v2314, 0.5
      %v2319 = vmul.f32 %v2315, 0.5
      %v2320 = vmul.f32 %v2316, 0.5
      %v2321 = vmul.f32 %v2317, 0.5
      %v2322 = vmul.f32 %v2243, %v2318
      %v2323 = vmul.f32 %v2245, %v2319
      %v2324 = vmul.f32 %v2284, %v2320
      %v2325 = vmul.f32 %v2286, %v2321
      %v2326 = vld [vmem:[%s19] sm:$0x1]
      %v2327 = vpack.c.bf16 %v2322, %v2322
      %v2328 = vpack.c.bf16 %v2323, %v2323
      %v2329 = vpack.c.bf16 %v2324, %v2324
      %v2330 = vpack.c.bf16 %v2325, %v2325
      %v2331 = vld [vmem:[%s18] sm:$0xf]
      %v2332 = vld [vmem:[%s18 + $0x4] sm:$0xf]
      %v2333 = vld [vmem:[%s18 + $0x8] sm:$0xf]
      %v2334 = vld [vmem:[%s18 + $0xc] sm:$0xf]
      %v2335 = vld [vmem:[%s18 + $0x10] sm:$0xf]
      %v2336 = vld [vmem:[%s18 + $0x14] sm:$0xf]
      %v2337 = vld [vmem:[%s18 + $0x18] sm:$0xf]
      %v2338 = vld [vmem:[%s18 + $0x1c] sm:$0xf]
      %v2339 = vld [vmem:[%s18 + $0x20] sm:$0xf]
      %v2340 = vld [vmem:[%s18 + $0x24] sm:$0xf]
      %v2341 = vld [vmem:[%s18 + $0x28] sm:$0xf]
      %v2342 = vld [vmem:[%s18 + $0x2c] sm:$0xf]
      %v2343 = vld [vmem:[%s18 + $0x30] sm:$0xf]
      %v2344 = vld [vmem:[%s18 + $0x34] sm:$0xf]
      %v2345 = vld [vmem:[%s18 + $0x38] sm:$0xf]
      %v2346 = vld [vmem:[%s18 + $0x3c] sm:$0xf]
      %v2347 = vld [vmem:[%s18 + $0x40] sm:$0xf]
      %v2348 = vld [vmem:[%s18 + $0x44] sm:$0xf]
      %v2349 = vld [vmem:[%s18 + $0x48] sm:$0xf]
      %v2350 = vld [vmem:[%s18 + $0x4c] sm:$0xf]
      %v2351 = vld [vmem:[%s18 + $0x50] sm:$0xf]
      %v2352 = vld [vmem:[%s18 + $0x54] sm:$0xf]
      %v2353 = vld [vmem:[%s18 + $0x58] sm:$0xf]
      %v2354 = vld [vmem:[%s18 + $0x5c] sm:$0xf]
      %v2355 = vld [vmem:[%s18 + $0x60] sm:$0xf]
      %v2356 = vld [vmem:[%s18 + $0x64] sm:$0xf]
      %v2357 = vld [vmem:[%s18 + $0x68] sm:$0xf]
      %v2358 = vld [vmem:[%s18 + $0x6c] sm:$0xf]
      %v2359 = vld [vmem:[%s18 + $0x70] sm:$0xf]
      %v2360 = vld [vmem:[%s18 + $0x74] sm:$0xf]
      %v2361 = vld [vmem:[%s18 + $0x78] sm:$0xf]
      %v2362 = vld [vmem:[%s18 + $0x7c] sm:$0xf]
      %v2363 = vld [vmem:[%s18 + $0x80] sm:$0xf]
      %v2364 = vld [vmem:[%s18 + $0x84] sm:$0xf]
      %v2365 = vld [vmem:[%s18 + $0x88] sm:$0xf]
      %v2366 = vld [vmem:[%s18 + $0x8c] sm:$0xf]
      %v2367 = vld [vmem:[%s18 + $0x90] sm:$0xf]
      %v2368 = vld [vmem:[%s18 + $0x94] sm:$0xf]
      %v2369 = vld [vmem:[%s18 + $0x98] sm:$0xf]
      %v2370 = vld [vmem:[%s18 + $0x9c] sm:$0xf]
      %v2371 = vld [vmem:[%s18 + $0xa0] sm:$0xf]
      %v2372 = vld [vmem:[%s18 + $0xa4] sm:$0xf]
      %v2373 = vld [vmem:[%s18 + $0xa8] sm:$0xf]
      %v2374 = vld [vmem:[%s18 + $0xac] sm:$0xf]
      %v2375 = vld [vmem:[%s18 + $0xb0] sm:$0xf]
      %v2376 = vld [vmem:[%s18 + $0xb4] sm:$0xf]
      %v2377 = vld [vmem:[%s18 + $0xb8] sm:$0xf]
      %v2378 = vld [vmem:[%s18 + $0xbc] sm:$0xf]
      %v2379 = vld [vmem:[%s18 + $0xc0] sm:$0xf]
      %v2380 = vld [vmem:[%s18 + $0xc4] sm:$0xf]
      %v2381 = vld [vmem:[%s18 + $0xc8] sm:$0xf]
      %v2382 = vld [vmem:[%s18 + $0xcc] sm:$0xf]
      %v2383 = vld [vmem:[%s18 + $0xd0] sm:$0xf]
      %v2384 = vld [vmem:[%s18 + $0xd4] sm:$0xf]
      %v2385 = vld [vmem:[%s18 + $0xd8] sm:$0xf]
      %v2386 = vld [vmem:[%s18 + $0xdc] sm:$0xf]
      %v2387 = vld [vmem:[%s18 + $0xe0] sm:$0xf]
      %v2388 = vld [vmem:[%s18 + $0xe4] sm:$0xf]
      %v2389 = vld [vmem:[%s18 + $0xe8] sm:$0xf]
      %v2390 = vld [vmem:[%s18 + $0xec] sm:$0xf]
      %v2391 = vld [vmem:[%s18 + $0xf0] sm:$0xf]
      %v2392 = vld [vmem:[%s18 + $0xf4] sm:$0xf]
      %v2393 = vld [vmem:[%s18 + $0xf8] sm:$0xf]
      %v2394 = vld [vmem:[%s18 + $0xfc] sm:$0xf]
      %v2396 = vlaneseq
      %v2397 = vshrl.u32 %v2396, 7
      %v2398 = vsub.s32 0, %v2397
      %v2399 = vrot.slane %v2326, %v2398
      %v2465 = vunpack.c.l.b16 %v2331
      %v2466 = vunpack.c.l.b16 %v2332
      %v2467 = vunpack.c.l.b16 %v2333
      %v2468 = vunpack.c.l.b16 %v2334
      %v2469 = vunpack.c.l.b16 %v2335
      %v2470 = vunpack.c.l.b16 %v2336
      %v2471 = vunpack.c.l.b16 %v2337
      %v2472 = vunpack.c.l.b16 %v2338
      %v2473 = vunpack.c.l.b16 %v2339
      %v2474 = vunpack.c.l.b16 %v2340
      %v2475 = vunpack.c.l.b16 %v2341
      %v2476 = vunpack.c.l.b16 %v2342
      %v2477 = vunpack.c.l.b16 %v2343
      %v2478 = vunpack.c.l.b16 %v2344
      %v2479 = vunpack.c.l.b16 %v2345
      %v2480 = vunpack.c.l.b16 %v2346
      %v2481 = vunpack.c.l.b16 %v2347
      %v2482 = vunpack.c.l.b16 %v2348
      %v2483 = vunpack.c.l.b16 %v2349
      %v2484 = vunpack.c.l.b16 %v2350
      %v2485 = vunpack.c.l.b16 %v2351
      %v2486 = vunpack.c.l.b16 %v2352
      %v2487 = vunpack.c.l.b16 %v2353
      %v2488 = vunpack.c.l.b16 %v2354
      %v2489 = vunpack.c.l.b16 %v2355
      %v2490 = vunpack.c.l.b16 %v2356
      %v2491 = vunpack.c.l.b16 %v2357
      %v2492 = vunpack.c.l.b16 %v2358
      %v2493 = vunpack.c.l.b16 %v2359
      %v2494 = vunpack.c.l.b16 %v2360
      %v2495 = vunpack.c.l.b16 %v2361
      %v2496 = vunpack.c.l.b16 %v2362
      %v2497 = vunpack.c.l.b16 %v2363
      %v2498 = vunpack.c.l.b16 %v2364
      %v2499 = vunpack.c.l.b16 %v2365
      %v2500 = vunpack.c.l.b16 %v2366
      %v2501 = vunpack.c.l.b16 %v2367
      %v2502 = vunpack.c.l.b16 %v2368
      %v2503 = vunpack.c.l.b16 %v2369
      %v2504 = vunpack.c.l.b16 %v2370
      %v2505 = vunpack.c.l.b16 %v2371
      %v2506 = vunpack.c.l.b16 %v2372
      %v2507 = vunpack.c.l.b16 %v2373
      %v2508 = vunpack.c.l.b16 %v2374
      %v2509 = vunpack.c.l.b16 %v2375
      %v2510 = vunpack.c.l.b16 %v2376
      %v2511 = vunpack.c.l.b16 %v2377
      %v2512 = vunpack.c.l.b16 %v2378
      %v2513 = vunpack.c.l.b16 %v2379
      %v2514 = vunpack.c.l.b16 %v2380
      %v2515 = vunpack.c.l.b16 %v2381
      %v2516 = vunpack.c.l.b16 %v2382
      %v2517 = vunpack.c.l.b16 %v2383
      %v2518 = vunpack.c.l.b16 %v2384
      %v2519 = vunpack.c.l.b16 %v2385
      %v2520 = vunpack.c.l.b16 %v2386
      %v2521 = vunpack.c.l.b16 %v2387
      %v2522 = vunpack.c.l.b16 %v2388
      %v2523 = vunpack.c.l.b16 %v2389
      %v2524 = vunpack.c.l.b16 %v2390
      %v2525 = vunpack.c.l.b16 %v2391
      %v2526 = vunpack.c.l.b16 %v2392
      %v2527 = vunpack.c.l.b16 %v2393
      %v2528 = vunpack.c.l.b16 %v2394
      %v2529 = vpack.c.b16 %v2466, %v2465
      %v2530 = vpack.c.b16 %v2468, %v2467
      %v2531 = vpack.c.b16 %v2470, %v2469
      %v2532 = vpack.c.b16 %v2472, %v2471
      %v2533 = vpack.c.b16 %v2474, %v2473
      %v2534 = vpack.c.b16 %v2476, %v2475
      %v2535 = vpack.c.b16 %v2478, %v2477
      %v2536 = vpack.c.b16 %v2480, %v2479
      %v2537 = vpack.c.b16 %v2482, %v2481
      %v2538 = vpack.c.b16 %v2484, %v2483
      %v2539 = vpack.c.b16 %v2486, %v2485
      %v2540 = vpack.c.b16 %v2488, %v2487
      %v2541 = vpack.c.b16 %v2490, %v2489
      %v2542 = vpack.c.b16 %v2492, %v2491
      %v2543 = vpack.c.b16 %v2494, %v2493
      %v2544 = vpack.c.b16 %v2496, %v2495
      %v2545 = vpack.c.b16 %v2498, %v2497
      %v2546 = vpack.c.b16 %v2500, %v2499
      %v2547 = vpack.c.b16 %v2502, %v2501
      %v2548 = vpack.c.b16 %v2504, %v2503
      %v2549 = vpack.c.b16 %v2506, %v2505
      %v2550 = vpack.c.b16 %v2508, %v2507
      %v2551 = vpack.c.b16 %v2510, %v2509
      %v2552 = vpack.c.b16 %v2512, %v2511
      %v2553 = vpack.c.b16 %v2514, %v2513
      %v2554 = vpack.c.b16 %v2516, %v2515
      %v2555 = vpack.c.b16 %v2518, %v2517
      %v2556 = vpack.c.b16 %v2520, %v2519
      %v2557 = vpack.c.b16 %v2522, %v2521
      %v2558 = vpack.c.b16 %v2524, %v2523
      %v2559 = vpack.c.b16 %v2526, %v2525
      %v2560 = vpack.c.b16 %v2528, %v2527
      %2593 = vmatprep.subr.bf16.mxu0 0
      %2594 = vmatpush1.bf16.msra.mxu0 %v2536
      %2595 = vmatprep.subr.bf16.mxu0 0
      %2596 = vmatpush1.bf16.msra.mxu0 %v2535
      %2597 = vmatprep.subr.bf16.mxu0 0
      %2598 = vmatpush1.bf16.msra.mxu0 %v2534
      %2599 = vmatprep.subr.bf16.mxu0 0
      %2600 = vmatpush1.bf16.msra.mxu0 %v2533
      %2601 = vmatprep.subr.bf16.mxu0 0
      %2602 = vmatpush1.bf16.msra.mxu0 %v2532
      %2603 = vmatprep.subr.bf16.mxu0 0
      %2604 = vmatpush1.bf16.msra.mxu0 %v2531
      %2605 = vmatprep.subr.bf16.mxu0 0
      %2606 = vmatpush1.bf16.msra.mxu0 %v2530
      %2607 = vmatprep.subr.bf16.mxu0 0
      %2608 = vmatpush1.bf16.msra.mxu0 %v2529
      %2609 = vmatprep.subr.bf16.mxu0 0
      %2610 = vmatpush2.bf16.msra.mxu0 %v2544
      %2611 = vmatprep.subr.bf16.mxu0 0
      %2612 = vmatpush2.bf16.msra.mxu0 %v2543
      %2613 = vmatprep.subr.bf16.mxu0 0
      %2614 = vmatpush2.bf16.msra.mxu0 %v2542
      %2615 = vmatprep.subr.bf16.mxu0 0
      %2616 = vmatpush2.bf16.msra.mxu0 %v2541
      %2617 = vmatprep.subr.bf16.mxu0 0
      %2618 = vmatpush2.bf16.msra.mxu0 %v2540
      %2619 = vmatprep.subr.bf16.mxu0 0
      %2620 = vmatpush2.bf16.msra.mxu0 %v2539
      %2621 = vmatprep.subr.bf16.mxu0 0
      %2622 = vmatpush2.bf16.msra.mxu0 %v2538
      %2623 = vmatprep.subr.bf16.mxu0 0
      %2624 = vmatpush2.bf16.msra.mxu0 %v2537
      %2625 = vmatprep.mubr.bf16.mxu0 %v2328
      %2626 = vmatmul.mubr.bf16.gmra.mxu0 %v2327
      %v2627 = vpop.f32.mrf.mxu0
      %v2628 = vadd.f32 %v2399, %v2627
      %v2629 = vpop.f32.mrf.mxu0
      %v2630 = vpop.f32.mrf.mxu0
      %v2631 = vpop.f32.mrf.mxu0
      %2632 = vdwg.mxu0
      %2633 = vmatprep.subr.bf16.mxu0 0
      %2634 = vmatpush1.bf16.msra.mxu0 %v2552
      %2635 = vmatprep.subr.bf16.mxu0 0
      %2636 = vmatpush1.bf16.msra.mxu0 %v2551
      %2637 = vmatprep.subr.bf16.mxu0 0
      %2638 = vmatpush1.bf16.msra.mxu0 %v2550
      %2639 = vmatprep.subr.bf16.mxu0 0
      %2640 = vmatpush1.bf16.msra.mxu0 %v2549
      %2641 = vmatprep.subr.bf16.mxu0 0
      %2642 = vmatpush1.bf16.msra.mxu0 %v2548
      %2643 = vmatprep.subr.bf16.mxu0 0
      %2644 = vmatpush1.bf16.msra.mxu0 %v2547
      %2645 = vmatprep.subr.bf16.mxu0 0
      %2646 = vmatpush1.bf16.msra.mxu0 %v2546
      %2647 = vmatprep.subr.bf16.mxu0 0
      %2648 = vmatpush1.bf16.msra.mxu0 %v2545
      %2649 = vmatprep.subr.bf16.mxu0 0
      %2650 = vmatpush2.bf16.msra.mxu0 %v2560
      %2651 = vmatprep.subr.bf16.mxu0 0
      %2652 = vmatpush2.bf16.msra.mxu0 %v2559
      %2653 = vmatprep.subr.bf16.mxu0 0
      %2654 = vmatpush2.bf16.msra.mxu0 %v2558
      %2655 = vmatprep.subr.bf16.mxu0 0
      %2656 = vmatpush2.bf16.msra.mxu0 %v2557
      %2657 = vmatprep.subr.bf16.mxu0 0
      %2658 = vmatpush2.bf16.msra.mxu0 %v2556
      %2659 = vmatprep.subr.bf16.mxu0 0
      %2660 = vmatpush2.bf16.msra.mxu0 %v2555
      %2661 = vmatprep.subr.bf16.mxu0 0
      %2662 = vmatpush2.bf16.msra.mxu0 %v2554
      %2663 = vmatprep.subr.bf16.mxu0 0
      %2664 = vmatpush2.bf16.msra.mxu0 %v2553
      %2665 = vmatprep.mubr.bf16.mxu0 %v2330
      %2666 = vmatmul.mubr.bf16.gmra.mxu0 %v2329
      %v2667 = vpop.f32.mrf.mxu0
      %v2668 = vadd.f32 %v2628, %v2667
      %v2669 = vpop.f32.mrf.mxu0
      %v2670 = vpop.f32.mrf.mxu0
      %v2671 = vpop.f32.mrf.mxu0
      %2672 = vdwg.mxu0
      %v2673 = vadd.f32 %v1992, %v2668
      %v2674 = vld [vmem:[%s20] sm:$0x1]
      %v2675 = vld [vmem:[%s21] sm:$0x1]
      %2676 = vadd.xlane.f32.xlu0 %v2673
      %v2677 = vpop.xlane.xlu0 %2676
      %v2678 = vmul.f32 %v2677, %v1340
      %v2679 = vsub.f32 %v2673, %v2678
      %v2680 = vmul.f32 %v2679, %v2679
      %2681 = vadd.xlane.f32.xlu0 %v2680
      %v2682 = vpop.xlane.xlu0 %2681
      %v2683 = vmul.f32 %v2682, %v1340
      %v2684 = vadd.f32 %v2683, 1e-12
      %v2685 = vrsqrt.pop %v2684
      %v2686 = vmul.f32 %v2679, %v2685
      %v2688 = vlaneseq
      %v2689 = vshrl.u32 %v2688, 7
      %v2690 = vsub.s32 0, %v2689
      %v2691 = vrot.slane %v2674, %v2690
      %v2693 = vmul.f32 %v2686, %v2691
      %v2695 = vlaneseq
      %v2696 = vshrl.u32 %v2695, 7
      %v2697 = vsub.s32 0, %v2696
      %v2698 = vrot.slane %v2675, %v2697
      %v2700 = vadd.f32 %v2693, %v2698
      %v2701 = vld [vmem:[%s23] sm:$0x1]
      %v2702 = vpack.c.bf16 %v2700, %v2700
      %v2703 = vld [vmem:[%s22] sm:$0xf]
      %v2704 = vld [vmem:[%s22 + $0x4] sm:$0xf]
      %v2705 = vld [vmem:[%s22 + $0x8] sm:$0xf]
      %v2706 = vld [vmem:[%s22 + $0xc] sm:$0xf]
      %v2707 = vld [vmem:[%s22 + $0x10] sm:$0xf]
      %v2708 = vld [vmem:[%s22 + $0x14] sm:$0xf]
      %v2709 = vld [vmem:[%s22 + $0x18] sm:$0xf]
      %v2710 = vld [vmem:[%s22 + $0x1c] sm:$0xf]
      %v2711 = vld [vmem:[%s22 + $0x20] sm:$0xf]
      %v2712 = vld [vmem:[%s22 + $0x24] sm:$0xf]
      %v2713 = vld [vmem:[%s22 + $0x28] sm:$0xf]
      %v2714 = vld [vmem:[%s22 + $0x2c] sm:$0xf]
      %v2715 = vld [vmem:[%s22 + $0x30] sm:$0xf]
      %v2716 = vld [vmem:[%s22 + $0x34] sm:$0xf]
      %v2717 = vld [vmem:[%s22 + $0x38] sm:$0xf]
      %v2718 = vld [vmem:[%s22 + $0x3c] sm:$0xf]
      %v2720 = vlaneseq
      %v2721 = vshrl.u32 %v2720, 7
      %v2722 = vsub.s32 0, %v2721
      %v2723 = vrot.slane %v2701, %v2722
      %v2741 = vunpack.c.l.b16 %v2703
      %v2742 = vunpack.c.l.b16 %v2704
      %v2743 = vunpack.c.l.b16 %v2705
      %v2744 = vunpack.c.l.b16 %v2706
      %v2745 = vunpack.c.l.b16 %v2707
      %v2746 = vunpack.c.l.b16 %v2708
      %v2747 = vunpack.c.l.b16 %v2709
      %v2748 = vunpack.c.l.b16 %v2710
      %v2749 = vunpack.c.l.b16 %v2711
      %v2750 = vunpack.c.l.b16 %v2712
      %v2751 = vunpack.c.l.b16 %v2713
      %v2752 = vunpack.c.l.b16 %v2714
      %v2753 = vunpack.c.l.b16 %v2715
      %v2754 = vunpack.c.l.b16 %v2716
      %v2755 = vunpack.c.l.b16 %v2717
      %v2756 = vunpack.c.l.b16 %v2718
      %v2757 = vpack.c.b16 %v2742, %v2741
      %v2758 = vpack.c.b16 %v2744, %v2743
      %v2759 = vpack.c.b16 %v2746, %v2745
      %v2760 = vpack.c.b16 %v2748, %v2747
      %v2761 = vpack.c.b16 %v2750, %v2749
      %v2762 = vpack.c.b16 %v2752, %v2751
      %v2763 = vpack.c.b16 %v2754, %v2753
      %v2764 = vpack.c.b16 %v2756, %v2755
      %2773 = vmatprep.subr.bf16.mxu0 0
      %2774 = vmatpush1.bf16.msra.mxu0 %v2764
      %2775 = vmatprep.subr.bf16.mxu0 0
      %2776 = vmatpush1.bf16.msra.mxu0 %v2763
      %2777 = vmatprep.subr.bf16.mxu0 0
      %2778 = vmatpush1.bf16.msra.mxu0 %v2762
      %2779 = vmatprep.subr.bf16.mxu0 0
      %2780 = vmatpush1.bf16.msra.mxu0 %v2761
      %2781 = vmatprep.subr.bf16.mxu0 0
      %2782 = vmatpush1.bf16.msra.mxu0 %v2760
      %2783 = vmatprep.subr.bf16.mxu0 0
      %2784 = vmatpush1.bf16.msra.mxu0 %v2759
      %2785 = vmatprep.subr.bf16.mxu0 0
      %2786 = vmatpush1.bf16.msra.mxu0 %v2758
      %2787 = vmatprep.subr.bf16.mxu0 0
      %2788 = vmatpush1.bf16.msra.mxu0 %v2757
      %2789 = vmatprep.subr.bf16.mxu0 0
      %2790 = vmatpush2.bf16.msra.mxu0 0
      %2791 = vmatprep.subr.bf16.mxu0 0
      %2792 = vmatpush2.bf16.msra.mxu0 0
      %2793 = vmatprep.subr.bf16.mxu0 0
      %2794 = vmatpush2.bf16.msra.mxu0 0
      %2795 = vmatprep.subr.bf16.mxu0 0
      %2796 = vmatpush2.bf16.msra.mxu0 0
      %2797 = vmatprep.subr.bf16.mxu0 0
      %2798 = vmatpush2.bf16.msra.mxu0 0
      %2799 = vmatprep.subr.bf16.mxu0 0
      %2800 = vmatpush2.bf16.msra.mxu0 0
      %2801 = vmatprep.subr.bf16.mxu0 0
      %2802 = vmatpush2.bf16.msra.mxu0 0
      %2803 = vmatprep.subr.bf16.mxu0 0
      %2804 = vmatpush2.bf16.msra.mxu0 0
      %2805 = vmatprep.mubr.bf16.mxu0 0
      %2806 = vmatmul.mubr.bf16.gmra.mxu0 %v2702
      %v2807 = vpop.f32.mrf.mxu0
      %v2808 = vadd.f32 %v2723, %v2807
      %v2809 = vpop.f32.mrf.mxu0
      %v2810 = vpop.f32.mrf.mxu0
      %v2811 = vpop.f32.mrf.mxu0
      %2812 = vdwg.mxu0
      %v2813 = vmul.f32 %v2808, %v2808
      %2814 = vadd.xlane.f32.xlu0 %v2813
      %v2815 = vpop.xlane.xlu0 %2814
      %v2816 = vrsqrt.pop %v2815
      %v2817 = vmul.f32 %v2815, %v2816
      %vm2818 = vcmp.eq.f32.partialorder %v2815, inf
      %v2819 = vsel %vm2818, %v2815, %v2817
      %vm2820 = vcmp.eq.f32.partialorder %v2815, 0.0
      %v2821 = vand.u32 %v2815, 2147483648
      %v2822 = vsel %vm2820, %v2821, %v2819
      %v2823 = vmax.f32 %v2822, 1e-12
      %v2824 = vrcp.pop %v2823
      %v2825 = vmul.f32 %v2808, %v2824
      %2826 = vst [vmem:[%s732] sm:$0xff] %v2825
      %p2827 = scmp.lt.s32.totalorder %s35, 3
      %s2828 = scalar_select %p2827, %s35, 3
      %s2829 = smul.addr %s2828, 8
      %s2830 = scalar_lea.vmem %s24, %s2829
      // Predicated region
      $region117: #{_lambda_.4} parent=115 // pred_check
        %p2831 = pneg %p562
      $region118: #{_lambda_.4} parent=115 // pred_check_branch
        %2833 = sbr.rel (%p2831) target = $region120
      $region119: #{_lambda_.4} parent=115 // pred_region
        _
      $region120: #{_lambda_.4} parent=115 // pred_fallthru
        _
    $region116: #{_lambda_.4} parent=5 // pred_fallthru
      _
    %p2834 = scmp.le.s32.totalorder 2, %s30
    // Predicated region
    $region121: #{_lambda_.4} parent=5 // pred_check
      %p2835 = pneg %p2834
    $region122: #{_lambda_.4} parent=5 // pred_check_branch
      %2837 = sbr.rel (%p2835) target = $region124
    $region123: #{_lambda_.4} parent=5 // pred_region
      %s2838 = ssub.s32 %s30, 2
      // Predicated region
      $region125: #{_lambda_.4} parent=123 // pred_check
        %p2839 = pneg %p568
      $region126: #{_lambda_.4} parent=123 // pred_check_branch
        %2841 = sbr.rel (%p2839) target = $region128
      $region127: #{_lambda_.4} parent=123 // pred_region
        %p2842 = scmp.lt.s32.totalorder %s36, 3
        %s2843 = scalar_select %p2842, %s36, 3
        %s2844 = smul.addr %s2843, 8
        %s2845 = scalar_lea.vmem %s24, %s2844
      $region128: #{_lambda_.4} parent=123 // pred_fallthru
        _
    $region124: #{_lambda_.4} parent=5 // pred_fallthru
      _
  $region6: #{_lambda_.4} parent=0 // loop_footer
    %s34 = sadd.s32 1, %s30
  $region7: #{_lambda_.4} parent=0 // loop_footer_branch
    %29 = sbr.rel target = $region3
  $region8: #{_lambda_.4} parent=0 // loop_exit
    _

</llo_original>
